<compile_context>
chip_gen: v5e
topology: v5e:2x2
jax: 0.10.0
libtpu: 0.0.40
codegen_flags: <defaults>
</compile_context>

<pallas_src>
import functools

import jax
import jax.numpy as jnp
import numpy as np
from jax.experimental import pallas as pl
from jax.experimental.pallas import tpu as pltpu

LANE = 128
SUBLANE = 8


def _round_up(x, m):
    return ((x + m - 1) // m) * m


def mfn_kernel(x_ref, wall_ref, ball_ref, wl_ref, bl_ref, wo_ref, bo_ref, o_ref,
               *, num_filters, h, dense_sin):
    """One (TN, Din_p) row tile of the MFN forward.

    x_ref   : (TN, Din_p)                 input coordinate tile (zero-padded Din)
    wall_ref: (Din_p, Fh_p), ball_ref: (1, Fh_p)   all F filters, densely packed
    wl_ref  : (F-1, H, H),   bl_ref:  (F-1, 1, H)  hidden linears (true width)
    wo_ref  : (H, Dout),     bo_ref:  (1, Dout)    output linear (true width)
    o_ref   : (TN, Dout)
    """
    x = x_ref[...]

    if dense_sin:
        # One lane-dense matmul + ONE sin over all F filters: every lane of the
        # slab is live data (padded tail lanes, if any, hold W=0/b=0 -> sin(0)=0
        # and are never read back).
        pre = (jnp.dot(x, wall_ref[...], preferred_element_type=jnp.float32)
               + ball_ref[...])
        filt_all = jnp.sin(pre)                                   # (TN, Fh_p)

        def filt(i):
            return filt_all[:, i * h:(i + 1) * h]                 # static lane slice
    else:
        # H is lane-aligned: compute filter i inside the loop so its sin (EUP/VPU)
        # can co-issue with the MXU matmul producing linear[i-1](out), and the
        # live intermediate stays (TN, H) instead of (TN, F*H).
        def filt(i):
            w_i = wall_ref[:, i * h:(i + 1) * h]                  # 128-aligned window
            b_i = ball_ref[:, i * h:(i + 1) * h]
            return jnp.sin(jnp.dot(x, w_i, preferred_element_type=jnp.float32) + b_i)

    # out = filters[0](x);  out = filters[i](x) * linear[i-1](out)
    out = filt(0)
    for i in range(1, num_filters):
        lin = (jnp.dot(out, wl_ref[i - 1], preferred_element_type=jnp.float32)
               + bl_ref[i - 1])
        out = filt(i) * lin

    # output_linear (Identity final activation), stored at true dim_out width.
    y = jnp.dot(out, wo_ref[...], preferred_element_type=jnp.float32) + bo_ref[...]
    o_ref[...] = y.astype(o_ref.dtype)


def mfn_forward(x, wf, bf, wl, bl, wo, bo, *, tile_n=512, min_grid_steps=8):
    """x: (N, Din); wf: (F, Din, H); bf: (F, 1, H); wl: (F-1, H, H);
    bl: (F-1, 1, H); wo: (H, Dout); bo: (1, Dout).  Returns (N, Dout) float32."""
    n, dim_in = x.shape
    num_filters, _, h = wf.shape
    num_layers = num_filters - 1
    dim_out = wo.shape[1]

    din_pad = _round_up(dim_in, SUBLANE)
    fh = num_filters * h
    fh_pad = _round_up(fh, LANE)
    dense_sin = (h % LANE) != 0   # small H: dense-pack all filters for the sin

    # --- fuse all filters into one lane-dense slab (Din_p, Fh_p) ----------------
    # w_all[:, i*H:(i+1)*H] == wf[i] (padded Din rows are zero); padded tail lanes
    # carry W = 0, b = 0 so sin(0) = 0 there, and they are never read back.
    wf_p = jnp.pad(wf, ((0, 0), (0, din_pad - dim_in), (0, 0)))
    w_all = jnp.transpose(wf_p, (1, 0, 2)).reshape(din_pad, fh)
    w_all = jnp.pad(w_all, ((0, 0), (0, fh_pad - fh)))
    b_all = jnp.pad(bf.reshape(1, fh), ((0, 0), (0, fh_pad - fh)))

    # --- row tiling: aim for >= min_grid_steps pipeline stages ------------------
    tn_target = _round_up(max(1, -(-n // min_grid_steps)), SUBLANE)
    tile_n = int(max(SUBLANE, min(tile_n, tn_target)))
    n_pad = _round_up(n, tile_n)
    x_p = jnp.pad(x, ((0, n_pad - n), (0, din_pad - dim_in)))

    # --- generation-aware VMEM budget --------------------------------------------
    f32 = 4
    weight_bytes = (w_all.size + b_all.size + wl.size + bl.size
                    + wo.size + bo.size) * f32
    io_tile_bytes = tile_n * (din_pad + dim_out) * f32
    temp_bytes = tile_n * (fh_pad if dense_sin else 4 * h) * f32
    needed = 2 * weight_bytes + 2 * io_tile_bytes + 2 * temp_bytes
    try:
        vmem_cap = int(pltpu.get_tpu_info().vmem_capacity_bytes)
    except Exception:
        vmem_cap = 64 * 1024 * 1024   # conservative (v7x per-TC) fallback
    vmem_limit = int(min(max(32 * 1024 * 1024, needed), int(0.75 * vmem_cap)))

    kernel = functools.partial(mfn_kernel, num_filters=num_filters, h=h,
                               dense_sin=dense_sin)
    const2 = lambda i: (0, 0)
    const3 = lambda i: (0, 0, 0)

    out_p = pl.pallas_call(
        kernel,
        out_shape=jax.ShapeDtypeStruct((n_pad, dim_out), jnp.float32),
        grid=(n_pad // tile_n,),
        in_specs=[
            pl.BlockSpec((tile_n, din_pad), lambda i: (i, 0)),   # x tile (pipelined)
            pl.BlockSpec((din_pad, fh_pad), const2),             # fused filter W (resident)
            pl.BlockSpec((1, fh_pad), const2),                   # fused filter b (resident)
            pl.BlockSpec((num_layers, h, h), const3),            # hidden W (resident)
            pl.BlockSpec((num_layers, 1, h), const3),            # hidden b (resident)
            pl.BlockSpec((h, dim_out), const2),                  # output W (resident)
            pl.BlockSpec((1, dim_out), const2),                  # output b (resident)
        ],
        out_specs=pl.BlockSpec((tile_n, dim_out), lambda i: (i, 0)),
        compiler_params=pltpu.CompilerParams(
            dimension_semantics=("parallel",),
            vmem_limit_bytes=vmem_limit,
        ),
    )(x_p, w_all, b_all, wl, bl, wo, bo)

    return out_p[:n, :]


def mfn_reference(x, wf, bf, wl, bl, wo, bo):
    """Pure-JAX reference matching the PyTorch forward (unpadded)."""
    out = jnp.sin(x @ wf[0] + bf[0])
    for i in range(1, wf.shape[0]):
        out = jnp.sin(x @ wf[i] + bf[i]) * (out @ wl[i - 1] + bl[i - 1])
    return out @ wo + bo


if __name__ == "__main__":
    # Small, MFN-consistent shapes: N coordinates -> hidden -> output.
    N = 1000            # not a multiple of the row tile -> exercises tail padding
    DIM_IN = 2          # coordinate dimension
    DIM_HIDDEN = 32
    DIM_OUT = 4
    NUM_LAYERS = 3
    WEIGHT_SCALE = 1.0
    NUM_FILTERS = NUM_LAYERS + 1

    key = jax.random.PRNGKey(0)
    keys = jax.random.split(key, 8)

    # Input coordinates.
    x = jax.random.normal(keys[0], (N, DIM_IN), dtype=jnp.float32)

    # Filters (FourierNet-style): Linear(dim_in -> dim_hidden), then sin.
    # Stored transposed: (num_filters, dim_in, dim_hidden).
    wf = jax.random.normal(keys[1], (NUM_FILTERS, DIM_IN, DIM_HIDDEN),
                           dtype=jnp.float32)
    bf = jax.random.uniform(keys[2], (NUM_FILTERS, 1, DIM_HIDDEN),
                            minval=-np.pi, maxval=np.pi, dtype=jnp.float32)

    # Hidden linears: uniform(-sqrt(ws/H), sqrt(ws/H)) as in MFNBase.__init__.
    lim = float(np.sqrt(WEIGHT_SCALE / DIM_HIDDEN))
    wl = jax.random.uniform(keys[3], (NUM_LAYERS, DIM_HIDDEN, DIM_HIDDEN),
                            minval=-lim, maxval=lim, dtype=jnp.float32)
    bl = jax.random.uniform(keys[4], (NUM_LAYERS, 1, DIM_HIDDEN),
                            minval=-lim, maxval=lim, dtype=jnp.float32)

    # Output linear (default-style init, deterministic).
    lim_o = float(1.0 / np.sqrt(DIM_HIDDEN))
    wo = jax.random.uniform(keys[5], (DIM_HIDDEN, DIM_OUT),
                            minval=-lim_o, maxval=lim_o, dtype=jnp.float32)
    bo = jax.random.uniform(keys[6], (1, DIM_OUT),
                            minval=-lim_o, maxval=lim_o, dtype=jnp.float32)

    y = mfn_forward(x, wf, bf, wl, bl, wo, bo)
    y = jax.block_until_ready(y)

    y_ref = mfn_reference(x, wf, bf, wl, bl, wo, bo)
    np.testing.assert_allclose(np.asarray(y), np.asarray(y_ref),
                               rtol=2e-5, atol=2e-5)

    print("KERNEL_OK")
</pallas_src>

<mosaic_0001>
module attributes {stable_mosaic.version = 11 : i64} {
  func.func @mfn_kernel(%arg0: i32, %arg1: memref<128x8xf32, #tpu.memory_space<vmem>>, %arg2: memref<8x128xf32, #tpu.memory_space<vmem>>, %arg3: memref<1x128xf32, #tpu.memory_space<vmem>>, %arg4: memref<3x32x32xf32, #tpu.memory_space<vmem>>, %arg5: memref<3x1x32xf32, #tpu.memory_space<vmem>>, %arg6: memref<32x4xf32, #tpu.memory_space<vmem>>, %arg7: memref<1x4xf32, #tpu.memory_space<vmem>>, %arg8: memref<128x4xf32, #tpu.memory_space<vmem>>) attributes {dimension_semantics = [#tpu.dimension_semantics<parallel>], iteration_bounds = array<i64: 8>, scalar_prefetch = 0 : i64, scratch_operands = 0 : i64, tpu.core_type = #tpu.core_type<tc>, window_params = [{transform_indices = @transform_0, window_bounds = array<i64: 128, 8>}, {pipeline_mode = #tpu.pipeline_mode<synchronous>, transform_indices = @transform_1, window_bounds = array<i64: 8, 128>}, {pipeline_mode = #tpu.pipeline_mode<synchronous>, transform_indices = @transform_2, window_bounds = array<i64: 1, 128>}, {pipeline_mode = #tpu.pipeline_mode<synchronous>, transform_indices = @transform_3, window_bounds = array<i64: 3, 32, 32>}, {pipeline_mode = #tpu.pipeline_mode<synchronous>, transform_indices = @transform_4, window_bounds = array<i64: 3, 1, 32>}, {pipeline_mode = #tpu.pipeline_mode<synchronous>, transform_indices = @transform_5, window_bounds = array<i64: 32, 4>}, {pipeline_mode = #tpu.pipeline_mode<synchronous>, transform_indices = @transform_6, window_bounds = array<i64: 1, 4>}, {transform_indices = @transform_7, window_bounds = array<i64: 128, 4>}]} {
    %c0 = arith.constant 0 : index
    %c0_0 = arith.constant 0 : index
    %0 = vector.load %arg1[%c0, %c0_0] : memref<128x8xf32, #tpu.memory_space<vmem>>, vector<128x8xf32>
    %c0_1 = arith.constant 0 : index
    %c0_2 = arith.constant 0 : index
    %1 = vector.load %arg2[%c0_1, %c0_2] : memref<8x128xf32, #tpu.memory_space<vmem>>, vector<8x128xf32>
    %cst = arith.constant dense<0.000000e+00> : vector<128x128xf32>
    %2 = tpu.matmul %0, %1, %cst {dimension_numbers = #tpu.dot_dimension_numbers<[1], [0], [0], [1], [0, 0, 1, 1], [], []>} : vector<128x8xf32>, vector<8x128xf32>, vector<128x128xf32> -> vector<128x128xf32>
    %c0_3 = arith.constant 0 : index
    %c0_4 = arith.constant 0 : index
    %3 = vector.load %arg3[%c0_3, %c0_4] : memref<1x128xf32, #tpu.memory_space<vmem>>, vector<1x128xf32>
    %4 = vector.broadcast %3 : vector<1x128xf32> to vector<128x128xf32>
    %5 = arith.addf %2, %4 : vector<128x128xf32>
    %6 = math.sin %5 : vector<128x128xf32>
    %7 = vector.extract_strided_slice %6 {offsets = [0, 0], sizes = [128, 32], strides = [1, 1]} : vector<128x128xf32> to vector<128x32xf32>
    %c0_5 = arith.constant 0 : index
    %c0_6 = arith.constant 0 : index
    %c0_7 = arith.constant 0 : index
    %8 = vector.load %arg4[%c0_5, %c0_6, %c0_7] : memref<3x32x32xf32, #tpu.memory_space<vmem>>, vector<1x32x32xf32>
    %9 = vector.shape_cast %8 : vector<1x32x32xf32> to vector<32x32xf32>
    %cst_8 = arith.constant dense<0.000000e+00> : vector<128x32xf32>
    %10 = tpu.matmul %7, %9, %cst_8 {dimension_numbers = #tpu.dot_dimension_numbers<[1], [0], [0], [1], [0, 0, 1, 1], [], []>} : vector<128x32xf32>, vector<32x32xf32>, vector<128x32xf32> -> vector<128x32xf32>
    %c0_9 = arith.constant 0 : index
    %c0_10 = arith.constant 0 : index
    %c0_11 = arith.constant 0 : index
    %11 = vector.load %arg5[%c0_9, %c0_10, %c0_11] : memref<3x1x32xf32, #tpu.memory_space<vmem>>, vector<1x1x32xf32>
    %12 = vector.shape_cast %11 : vector<1x1x32xf32> to vector<1x32xf32>
    %13 = vector.broadcast %12 : vector<1x32xf32> to vector<128x32xf32>
    %14 = arith.addf %10, %13 : vector<128x32xf32>
    %15 = vector.extract_strided_slice %6 {offsets = [0, 32], sizes = [128, 32], strides = [1, 1]} : vector<128x128xf32> to vector<128x32xf32>
    %16 = arith.mulf %15, %14 : vector<128x32xf32>
    %c1 = arith.constant 1 : index
    %c0_12 = arith.constant 0 : index
    %c0_13 = arith.constant 0 : index
    %17 = vector.load %arg4[%c1, %c0_12, %c0_13] : memref<3x32x32xf32, #tpu.memory_space<vmem>>, vector<1x32x32xf32>
    %18 = vector.shape_cast %17 : vector<1x32x32xf32> to vector<32x32xf32>
    %cst_14 = arith.constant dense<0.000000e+00> : vector<128x32xf32>
    %19 = tpu.matmul %16, %18, %cst_14 {dimension_numbers = #tpu.dot_dimension_numbers<[1], [0], [0], [1], [0, 0, 1, 1], [], []>} : vector<128x32xf32>, vector<32x32xf32>, vector<128x32xf32> -> vector<128x32xf32>
    %c1_15 = arith.constant 1 : index
    %c0_16 = arith.constant 0 : index
    %c0_17 = arith.constant 0 : index
    %20 = vector.load %arg5[%c1_15, %c0_16, %c0_17] : memref<3x1x32xf32, #tpu.memory_space<vmem>>, vector<1x1x32xf32>
    %21 = vector.shape_cast %20 : vector<1x1x32xf32> to vector<1x32xf32>
    %22 = vector.broadcast %21 : vector<1x32xf32> to vector<128x32xf32>
    %23 = arith.addf %19, %22 : vector<128x32xf32>
    %24 = vector.extract_strided_slice %6 {offsets = [0, 64], sizes = [128, 32], strides = [1, 1]} : vector<128x128xf32> to vector<128x32xf32>
    %25 = arith.mulf %24, %23 : vector<128x32xf32>
    %c2 = arith.constant 2 : index
    %c0_18 = arith.constant 0 : index
    %c0_19 = arith.constant 0 : index
    %26 = vector.load %arg4[%c2, %c0_18, %c0_19] : memref<3x32x32xf32, #tpu.memory_space<vmem>>, vector<1x32x32xf32>
    %27 = vector.shape_cast %26 : vector<1x32x32xf32> to vector<32x32xf32>
    %cst_20 = arith.constant dense<0.000000e+00> : vector<128x32xf32>
    %28 = tpu.matmul %25, %27, %cst_20 {dimension_numbers = #tpu.dot_dimension_numbers<[1], [0], [0], [1], [0, 0, 1, 1], [], []>} : vector<128x32xf32>, vector<32x32xf32>, vector<128x32xf32> -> vector<128x32xf32>
    %c2_21 = arith.constant 2 : index
    %c0_22 = arith.constant 0 : index
    %c0_23 = arith.constant 0 : index
    %29 = vector.load %arg5[%c2_21, %c0_22, %c0_23] : memref<3x1x32xf32, #tpu.memory_space<vmem>>, vector<1x1x32xf32>
    %30 = vector.shape_cast %29 : vector<1x1x32xf32> to vector<1x32xf32>
    %31 = vector.broadcast %30 : vector<1x32xf32> to vector<128x32xf32>
    %32 = arith.addf %28, %31 : vector<128x32xf32>
    %33 = vector.extract_strided_slice %6 {offsets = [0, 96], sizes = [128, 32], strides = [1, 1]} : vector<128x128xf32> to vector<128x32xf32>
    %34 = arith.mulf %33, %32 : vector<128x32xf32>
    %c0_24 = arith.constant 0 : index
    %c0_25 = arith.constant 0 : index
    %35 = vector.load %arg6[%c0_24, %c0_25] : memref<32x4xf32, #tpu.memory_space<vmem>>, vector<32x4xf32>
    %cst_26 = arith.constant dense<0.000000e+00> : vector<128x4xf32>
    %36 = tpu.matmul %34, %35, %cst_26 {dimension_numbers = #tpu.dot_dimension_numbers<[1], [0], [0], [1], [0, 0, 1, 1], [], []>} : vector<128x32xf32>, vector<32x4xf32>, vector<128x4xf32> -> vector<128x4xf32>
    %c0_27 = arith.constant 0 : index
    %c0_28 = arith.constant 0 : index
    %37 = vector.load %arg7[%c0_27, %c0_28] : memref<1x4xf32, #tpu.memory_space<vmem>>, vector<1x4xf32>
    %38 = vector.broadcast %37 : vector<1x4xf32> to vector<128x4xf32>
    %39 = arith.addf %36, %38 : vector<128x4xf32>
    %c0_29 = arith.constant 0 : index
    %c0_30 = arith.constant 0 : index
    %40 = vector.load %arg8[%c0_29, %c0_30] : memref<128x4xf32, #tpu.memory_space<vmem>>, vector<128x4xf32>
    tpu.vector_store %arg8[%c0_29, %c0_30], %39 {strides = array<i32>} : memref<128x4xf32, #tpu.memory_space<vmem>>, vector<128x4xf32>,
    return
  }
  func.func @transform_0(%arg0: i32) -> (i32, i32) {
    %c0_i32 = arith.constant 0 : i32
    %c0_i32_0 = arith.constant 0 : i32
    return %arg0, %c0_i32 : i32, i32
  }
  func.func @transform_1(%arg0: i32) -> (i32, i32) {
    %c0_i32 = arith.constant 0 : i32
    %c0_i32_0 = arith.constant 0 : i32
    %c0_i32_1 = arith.constant 0 : i32
    return %c0_i32, %c0_i32_0 : i32, i32
  }
  func.func @transform_2(%arg0: i32) -> (i32, i32) {
    %c0_i32 = arith.constant 0 : i32
    %c0_i32_0 = arith.constant 0 : i32
    %c0_i32_1 = arith.constant 0 : i32
    return %c0_i32, %c0_i32_0 : i32, i32
  }
  func.func @transform_3(%arg0: i32) -> (i32, i32, i32) {
    %c0_i32 = arith.constant 0 : i32
    %c0_i32_0 = arith.constant 0 : i32
    %c0_i32_1 = arith.constant 0 : i32
    %c0_i32_2 = arith.constant 0 : i32
    return %c0_i32, %c0_i32_0, %c0_i32_1 : i32, i32, i32
  }
  func.func @transform_4(%arg0: i32) -> (i32, i32, i32) {
    %c0_i32 = arith.constant 0 : i32
    %c0_i32_0 = arith.constant 0 : i32
    %c0_i32_1 = arith.constant 0 : i32
    %c0_i32_2 = arith.constant 0 : i32
    return %c0_i32, %c0_i32_0, %c0_i32_1 : i32, i32, i32
  }
  func.func @transform_5(%arg0: i32) -> (i32, i32) {
    %c0_i32 = arith.constant 0 : i32
    %c0_i32_0 = arith.constant 0 : i32
    %c0_i32_1 = arith.constant 0 : i32
    return %c0_i32, %c0_i32_0 : i32, i32
  }
  func.func @transform_6(%arg0: i32) -> (i32, i32) {
    %c0_i32 = arith.constant 0 : i32
    %c0_i32_0 = arith.constant 0 : i32
    %c0_i32_1 = arith.constant 0 : i32
    return %c0_i32, %c0_i32_0 : i32, i32
  }
  func.func @transform_7(%arg0: i32) -> (i32, i32) {
    %c0_i32 = arith.constant 0 : i32
    %c0_i32_0 = arith.constant 0 : i32
    return %arg0, %c0_i32 : i32, i32
  }
}

</mosaic_0001>

<llo_original>
// kernel: tpu_custom_call.1
$region0: #{tpu_custom_call.1}
  #allocation0 [shape = 'u32[]', space=smem, size = 0x4, offset = 0x4, fixed_abs, tag = 'smem constant byte address 0x4 - core index']
  #allocation1 [shape = 'u32[72,128]{1,0:T(1,128)}', space=vmem, size = 0x9000, scoped, tag = 'internal scratch']
  %s0 = inlined_call_operand.vmem [shape: f32[1024,8], index: 0, kind: input, shape index: {}]
  %s1 = inlined_call_operand.vmem [shape: f32[8,128], index: 1, kind: input, shape index: {}]
  %s2 = inlined_call_operand.vmem [shape: f32[1,128], index: 2, kind: input, shape index: {}]
  %s3 = inlined_call_operand.vmem [shape: f32[3,32,32], index: 3, kind: input, shape index: {}]
  %s4 = inlined_call_operand.vmem [shape: f32[3,1,32], index: 4, kind: input, shape index: {}]
  %s5 = inlined_call_operand.vmem [shape: f32[32,4], index: 5, kind: input, shape index: {}]
  %s6 = inlined_call_operand.vmem [shape: f32[1,4], index: 6, kind: input, shape index: {}]
  %s7 = inlined_call_operand.vmem [shape: f32[1024,4], index: 7, kind: output, shape index: {}]
  %s8 = sld [smem:[#allocation0]]
  $region61: #{tpu_custom_call.1} parent=0
    _
  %s10 = ssub.s32 1, %s8
  %s11 = scalar_select 0, %s10, %s8
  loop: start=0, step=1, limit=10
  $region2: #{tpu_custom_call.1} parent=0 // loop_pre_header
    _
  $region3: #{tpu_custom_call.1} parent=0 // loop_header
    %s13 = sphi 0, %s17
    %p14 = scmp.ge.s32.totalorder %s13, 10
    %s23 = sphi 0, %s25
    %s26 = sphi 0, %s23
    %s27 = sphi 0, %s26
    %s43 = sphi 0, %s27
    %s47 = sphi 0, %s47
    %s49 = sphi 0, %s47
    %s50 = sphi 0, %s49
    %s64 = sphi 0, %s50
    %s68 = sphi 0, %s68
    %s70 = sphi 0, %s68
    %s71 = sphi 0, %s70
    %s85 = sphi 0, %s71
    %s89 = sphi 0, %s89
    %s91 = sphi 0, %s89
    %s92 = sphi 0, %s91
    %s106 = sphi 0, %s92
    %s110 = sphi 0, %s110
    %s112 = sphi 0, %s110
    %s113 = sphi 0, %s112
    %s127 = sphi 0, %s113
    %s131 = sphi 0, %s131
    %s133 = sphi 0, %s131
    %s134 = sphi 0, %s133
    %s148 = sphi 0, %s134
    %s152 = sphi 0, %s152
    %s154 = sphi 0, %s152
    %s155 = sphi 0, %s154
    %s169 = sphi 0, %s155
    %s175 = sphi 0, %s177
    %s178 = sphi 0, %s175
    %s179 = sphi 0, %s178
    %s195 = sphi 0, %s179
  $region4: #{tpu_custom_call.1} parent=0 // loop_header_branch
    %16 = sbr.rel (%p14) target = $region8
  $region5: #{tpu_custom_call.1} parent=0 // loop_body
    %s18 = ssub.s32 %s13, 1
    %s19 = ssub.s32 %s13, 2
    %s20 = sadd.s32 %s13, 1
    %s21 = ssub.s32 %s13, %s20
    %p22 = scmp.eq.s32.totalorder %s21, 0
    %s24 = sadd.s32 %s23, 1
    %s25 = scalar_select %p22, %s23, %s24
    %p28 = pneg %p22
    %p29 = scmp.eq.s32.totalorder %s13, 7
    %p30 = por %p28, %p29
    %p31 = scmp.ne.s32.totalorder %s23, %s26
    %p32 = scmp.eq.s32.totalorder %s13, 0
    %p33 = por %p31, %p32
    %p34 = scmp.ne.s32.totalorder %s23, %s26
    %p35 = scmp.eq.s32.totalorder %s18, 7
    %p36 = por %p34, %p35
    %p37 = scmp.ne.s32.totalorder %s26, %s27
    %p38 = scmp.eq.s32.totalorder %s18, 0
    %p39 = por %p37, %p38
    %p40 = scmp.ne.s32.totalorder %s26, %s27
    %p41 = scmp.eq.s32.totalorder %s19, 7
    %p42 = por %p40, %p41
    %p44 = scmp.ne.s32.totalorder %s27, %s43
    %p45 = scmp.eq.s32.totalorder %s19, 0
    %p46 = por %p44, %p45
    %s48 = sadd.s32 %s47, 1
    %p51 = scmp.eq.s32.totalorder %s13, 7
    %p52 = scmp.ne.s32.totalorder %s47, %s49
    %p53 = scmp.eq.s32.totalorder %s13, 0
    %p54 = por %p52, %p53
    %p55 = scmp.ne.s32.totalorder %s47, %s49
    %p56 = scmp.eq.s32.totalorder %s18, 7
    %p57 = por %p55, %p56
    %p58 = scmp.ne.s32.totalorder %s49, %s50
    %p59 = scmp.eq.s32.totalorder %s18, 0
    %p60 = por %p58, %p59
    %p61 = scmp.ne.s32.totalorder %s49, %s50
    %p62 = scmp.eq.s32.totalorder %s19, 7
    %p63 = por %p61, %p62
    %p65 = scmp.ne.s32.totalorder %s50, %s64
    %p66 = scmp.eq.s32.totalorder %s19, 0
    %p67 = por %p65, %p66
    %s69 = sadd.s32 %s68, 1
    %p72 = scmp.eq.s32.totalorder %s13, 7
    %p73 = scmp.ne.s32.totalorder %s68, %s70
    %p74 = scmp.eq.s32.totalorder %s13, 0
    %p75 = por %p73, %p74
    %p76 = scmp.ne.s32.totalorder %s68, %s70
    %p77 = scmp.eq.s32.totalorder %s18, 7
    %p78 = por %p76, %p77
    %p79 = scmp.ne.s32.totalorder %s70, %s71
    %p80 = scmp.eq.s32.totalorder %s18, 0
    %p81 = por %p79, %p80
    %p82 = scmp.ne.s32.totalorder %s70, %s71
    %p83 = scmp.eq.s32.totalorder %s19, 7
    %p84 = por %p82, %p83
    %p86 = scmp.ne.s32.totalorder %s71, %s85
    %p87 = scmp.eq.s32.totalorder %s19, 0
    %p88 = por %p86, %p87
    %s90 = sadd.s32 %s89, 1
    %p93 = scmp.eq.s32.totalorder %s13, 7
    %p94 = scmp.ne.s32.totalorder %s89, %s91
    %p95 = scmp.eq.s32.totalorder %s13, 0
    %p96 = por %p94, %p95
    %p97 = scmp.ne.s32.totalorder %s89, %s91
    %p98 = scmp.eq.s32.totalorder %s18, 7
    %p99 = por %p97, %p98
    %p100 = scmp.ne.s32.totalorder %s91, %s92
    %p101 = scmp.eq.s32.totalorder %s18, 0
    %p102 = por %p100, %p101
    %p103 = scmp.ne.s32.totalorder %s91, %s92
    %p104 = scmp.eq.s32.totalorder %s19, 7
    %p105 = por %p103, %p104
    %p107 = scmp.ne.s32.totalorder %s92, %s106
    %p108 = scmp.eq.s32.totalorder %s19, 0
    %p109 = por %p107, %p108
    %s111 = sadd.s32 %s110, 1
    %p114 = scmp.eq.s32.totalorder %s13, 7
    %p115 = scmp.ne.s32.totalorder %s110, %s112
    %p116 = scmp.eq.s32.totalorder %s13, 0
    %p117 = por %p115, %p116
    %p118 = scmp.ne.s32.totalorder %s110, %s112
    %p119 = scmp.eq.s32.totalorder %s18, 7
    %p120 = por %p118, %p119
    %p121 = scmp.ne.s32.totalorder %s112, %s113
    %p122 = scmp.eq.s32.totalorder %s18, 0
    %p123 = por %p121, %p122
    %p124 = scmp.ne.s32.totalorder %s112, %s113
    %p125 = scmp.eq.s32.totalorder %s19, 7
    %p126 = por %p124, %p125
    %p128 = scmp.ne.s32.totalorder %s113, %s127
    %p129 = scmp.eq.s32.totalorder %s19, 0
    %p130 = por %p128, %p129
    %s132 = sadd.s32 %s131, 1
    %p135 = scmp.eq.s32.totalorder %s13, 7
    %p136 = scmp.ne.s32.totalorder %s131, %s133
    %p137 = scmp.eq.s32.totalorder %s13, 0
    %p138 = por %p136, %p137
    %p139 = scmp.ne.s32.totalorder %s131, %s133
    %p140 = scmp.eq.s32.totalorder %s18, 7
    %p141 = por %p139, %p140
    %p142 = scmp.ne.s32.totalorder %s133, %s134
    %p143 = scmp.eq.s32.totalorder %s18, 0
    %p144 = por %p142, %p143
    %p145 = scmp.ne.s32.totalorder %s133, %s134
    %p146 = scmp.eq.s32.totalorder %s19, 7
    %p147 = por %p145, %p146
    %p149 = scmp.ne.s32.totalorder %s134, %s148
    %p150 = scmp.eq.s32.totalorder %s19, 0
    %p151 = por %p149, %p150
    %s153 = sadd.s32 %s152, 1
    %p156 = scmp.eq.s32.totalorder %s13, 7
    %p157 = scmp.ne.s32.totalorder %s152, %s154
    %p158 = scmp.eq.s32.totalorder %s13, 0
    %p159 = por %p157, %p158
    %p160 = scmp.ne.s32.totalorder %s152, %s154
    %p161 = scmp.eq.s32.totalorder %s18, 7
    %p162 = por %p160, %p161
    %p163 = scmp.ne.s32.totalorder %s154, %s155
    %p164 = scmp.eq.s32.totalorder %s18, 0
    %p165 = por %p163, %p164
    %p166 = scmp.ne.s32.totalorder %s154, %s155
    %p167 = scmp.eq.s32.totalorder %s19, 7
    %p168 = por %p166, %p167
    %p170 = scmp.ne.s32.totalorder %s155, %s169
    %p171 = scmp.eq.s32.totalorder %s19, 0
    %p172 = por %p170, %p171
    %s173 = ssub.s32 %s13, %s20
    %p174 = scmp.eq.s32.totalorder %s173, 0
    %s176 = sadd.s32 %s175, 1
    %s177 = scalar_select %p174, %s175, %s176
    %p180 = pneg %p174
    %p181 = scmp.eq.s32.totalorder %s13, 7
    %p182 = por %p180, %p181
    %p183 = scmp.ne.s32.totalorder %s175, %s178
    %p184 = scmp.eq.s32.totalorder %s13, 0
    %p185 = por %p183, %p184
    %p186 = scmp.ne.s32.totalorder %s175, %s178
    %p187 = scmp.eq.s32.totalorder %s18, 7
    %p188 = por %p186, %p187
    %p189 = scmp.ne.s32.totalorder %s178, %s179
    %p190 = scmp.eq.s32.totalorder %s18, 0
    %p191 = por %p189, %p190
    %p192 = scmp.ne.s32.totalorder %s178, %s179
    %p193 = scmp.eq.s32.totalorder %s19, 7
    %p194 = por %p192, %p193
    %p196 = scmp.ne.s32.totalorder %s179, %s195
    %p197 = scmp.eq.s32.totalorder %s19, 0
    %p198 = por %p196, %p197
    %p199 = scmp.le.s32.totalorder 1, %s13
    %p200 = scmp.lt.s32.totalorder %s13, 9
    %p201 = pnand %p199, %p200
    %p202 = pneg %p201
    // Predicated region
    $region9: #{tpu_custom_call.1} parent=5 // pred_check
      _
    $region10: #{tpu_custom_call.1} parent=5 // pred_check_branch
      %204 = sbr.rel (%p201) target = $region12
    $region11: #{tpu_custom_call.1} parent=5 // pred_region
      %s205 = ssub.s32 %s13, 1
      // Predicated region
      $region13: #{tpu_custom_call.1} parent=11 // pred_check
        %p206 = pneg %p60
      $region14: #{tpu_custom_call.1} parent=11 // pred_check_branch
        %208 = sbr.rel (%p206) target = $region16
      $region15: #{tpu_custom_call.1} parent=11 // pred_region
        _
      $region16: #{tpu_custom_call.1} parent=11 // pred_fallthru
        _
      // Predicated region
      $region17: #{tpu_custom_call.1} parent=11 // pred_check
        %p209 = pneg %p81
      $region18: #{tpu_custom_call.1} parent=11 // pred_check_branch
        %211 = sbr.rel (%p209) target = $region20
      $region19: #{tpu_custom_call.1} parent=11 // pred_region
        _
      $region20: #{tpu_custom_call.1} parent=11 // pred_fallthru
        _
      // Predicated region
      $region21: #{tpu_custom_call.1} parent=11 // pred_check
        %p212 = pneg %p102
      $region22: #{tpu_custom_call.1} parent=11 // pred_check_branch
        %214 = sbr.rel (%p212) target = $region24
      $region23: #{tpu_custom_call.1} parent=11 // pred_region
        _
      $region24: #{tpu_custom_call.1} parent=11 // pred_fallthru
        _
      // Predicated region
      $region25: #{tpu_custom_call.1} parent=11 // pred_check
        %p215 = pneg %p123
      $region26: #{tpu_custom_call.1} parent=11 // pred_check_branch
        %217 = sbr.rel (%p215) target = $region28
      $region27: #{tpu_custom_call.1} parent=11 // pred_region
        _
      $region28: #{tpu_custom_call.1} parent=11 // pred_fallthru
        _
      // Predicated region
      $region29: #{tpu_custom_call.1} parent=11 // pred_check
        %p218 = pneg %p144
      $region30: #{tpu_custom_call.1} parent=11 // pred_check_branch
        %220 = sbr.rel (%p218) target = $region32
      $region31: #{tpu_custom_call.1} parent=11 // pred_region
        _
      $region32: #{tpu_custom_call.1} parent=11 // pred_fallthru
        _
      // Predicated region
      $region33: #{tpu_custom_call.1} parent=11 // pred_check
        %p221 = pneg %p165
      $region34: #{tpu_custom_call.1} parent=11 // pred_check_branch
        %223 = sbr.rel (%p221) target = $region36
      $region35: #{tpu_custom_call.1} parent=11 // pred_region
        _
      $region36: #{tpu_custom_call.1} parent=11 // pred_fallthru
        _
    $region12: #{tpu_custom_call.1} parent=5 // pred_fallthru
      _
    %p224 = scmp.lt.s32.totalorder %s13, 8
    // Predicated region
    $region37: #{tpu_custom_call.1} parent=5 // pred_check
      %p225 = pneg %p224
    $region38: #{tpu_custom_call.1} parent=5 // pred_check_branch
      %227 = sbr.rel (%p225) target = $region40
    $region39: #{tpu_custom_call.1} parent=5 // pred_region
      // Predicated region
      $region41: #{tpu_custom_call.1} parent=39 // pred_check
        %p228 = pneg %p33
      $region42: #{tpu_custom_call.1} parent=39 // pred_check_branch
        %230 = sbr.rel (%p228) target = $region44
      $region43: #{tpu_custom_call.1} parent=39 // pred_region
        %s231 = smul.u32 16, %s13
        %p232 = scmp.lt.s32.totalorder %s231, 127
        %s233 = scalar_select %p232, %s231, 127
        %s234 = smul.addr %s233, 8
        %s235 = scalar_lea.vmem %s0, %s234
        %s236 = smul.u32 16, %s13
      $region44: #{tpu_custom_call.1} parent=39 // pred_fallthru
        _
    $region40: #{tpu_custom_call.1} parent=5 // pred_fallthru
      _
    %p237 = scmp.le.s32.totalorder 1, %s13
    %p238 = scmp.lt.s32.totalorder %s13, 9
    %p239 = pnand %p237, %p238
    %p240 = pneg %p239
    // Predicated region
    $region45: #{tpu_custom_call.1} parent=5 // pred_check
      _
    $region46: #{tpu_custom_call.1} parent=5 // pred_check_branch
      %242 = sbr.rel (%p239) target = $region48
    $region47: #{tpu_custom_call.1} parent=5 // pred_region
      %s243 = ssub.s32 %s13, 1
      %s244 = smul.u32 16, %s18
      %p245 = scmp.lt.s32.totalorder %s244, 127
      %s246 = scalar_select %p245, %s244, 127
      %s247 = smul.addr %s246, 8
      %s248 = scalar_lea.vmem %s0, %s247
      %p249 = pneg %p39
      %p250 = pneg %p36
      %p251 = pneg %p60
      %p252 = pneg %p57
      %p253 = pneg %p81
      %p254 = pneg %p78
      %p255 = pneg %p102
      %p256 = pneg %p99
      %p257 = pneg %p123
      %p258 = pneg %p120
      %p259 = pneg %p144
      %p260 = pneg %p141
      %p261 = pneg %p165
      %p262 = pneg %p162
      %p263 = pneg %p191
      %p264 = pneg %p188
      %s265 = smul.u32 16, %s18
      %p266 = scmp.lt.s32.totalorder %s265, 127
      %s267 = scalar_select %p266, %s265, 127
      %s268 = smul.addr %s267, 8
      %s269 = scalar_lea.vmem %s7, %s268
      %s270 = smul.u32 16, %s18
      %p271 = scmp.lt.s32.totalorder %s270, 127
      %s272 = scalar_select %p271, %s270, 127
      %s273 = smul.addr %s272, 8
      %s274 = scalar_lea.vmem %s0, %s273
      %s275 = smul.u32 16, %s18
      %s276 = smul.u32 16, %s18
      %p277 = scmp.lt.s32.totalorder %s276, 127
      %s278 = scalar_select %p277, %s276, 127
      %s279 = smul.addr %s278, 8
      %s280 = scalar_lea.vmem %s7, %s279
      %s281 = smul.u32 16, %s18
      %v282 = vld [vmem:[%s274] sm:$0xff]
      %v283 = vld [vmem:[%s274 + $0x8] sm:$0xff]
      %v284 = vld [vmem:[%s274 + $0x10] sm:$0xff]
      %v285 = vld [vmem:[%s274 + $0x18] sm:$0xff]
      %v286 = vld [vmem:[%s274 + $0x20] sm:$0xff]
      %v287 = vld [vmem:[%s274 + $0x28] sm:$0xff]
      %v288 = vld [vmem:[%s274 + $0x30] sm:$0xff]
      %v289 = vld [vmem:[%s274 + $0x38] sm:$0xff]
      %v290 = vld [vmem:[%s274 + $0x40] sm:$0xff]
      %v291 = vld [vmem:[%s274 + $0x48] sm:$0xff]
      %v292 = vld [vmem:[%s274 + $0x50] sm:$0xff]
      %v293 = vld [vmem:[%s274 + $0x58] sm:$0xff]
      %v294 = vld [vmem:[%s274 + $0x60] sm:$0xff]
      %v295 = vld [vmem:[%s274 + $0x68] sm:$0xff]
      %v296 = vld [vmem:[%s274 + $0x70] sm:$0xff]
      %v297 = vld [vmem:[%s274 + $0x78] sm:$0xff]
      %v298 = vld [vmem:[%s1] sm:$0xff]
      %v299 = vld [vmem:[%s2] sm:$0x1]
      %v301 = vperm.slane %v299, 0
      %vm303 = vcmask 64512
      %v305 = vsel %vm303, %v282, 0
      %v308 = vsel %vm303, %v283, 0
      %v311 = vsel %vm303, %v284, 0
      %v314 = vsel %vm303, %v285, 0
      %v317 = vsel %vm303, %v286, 0
      %v320 = vsel %vm303, %v287, 0
      %v323 = vsel %vm303, %v288, 0
      %v326 = vsel %vm303, %v289, 0
      %v329 = vsel %vm303, %v290, 0
      %v332 = vsel %vm303, %v291, 0
      %v335 = vsel %vm303, %v292, 0
      %v338 = vsel %vm303, %v293, 0
      %v341 = vsel %vm303, %v294, 0
      %v344 = vsel %vm303, %v295, 0
      %v347 = vsel %vm303, %v296, 0
      %v350 = vsel %vm303, %v297, 0
      %352 = vmatpush.msra.mxu0 0.0
      %353 = vmatpush.msra.mxu0 0.0
      %354 = vmatpush.msra.mxu0 0.0
      %355 = vmatpush.msra.mxu0 0.0
      %356 = vmatpush.msra.mxu0 0.0
      %357 = vmatpush.msra.mxu0 0.0
      %358 = vmatpush.msra.mxu0 0.0
      %359 = vmatpush.msra.mxu0 0.0
      %360 = vmatpush.msra.mxu0 0.0
      %361 = vmatpush.msra.mxu0 0.0
      %362 = vmatpush.msra.mxu0 0.0
      %363 = vmatpush.msra.mxu0 0.0
      %364 = vmatpush.msra.mxu0 0.0
      %365 = vmatpush.msra.mxu0 0.0
      %366 = vmatpush.msra.mxu0 0.0
      %367 = vmatpush.msra.mxu0 %v298
      %368 = vmatmul.f32.gmra.mxu0 %v305
      %v369 = vpop.f32.mrf.mxu0
      %v370 = vadd.f32 %v301, %v369
      %371 = vmatmul.f32.gmra.mxu0 %v308
      %v372 = vpop.f32.mrf.mxu0
      %v373 = vadd.f32 %v301, %v372
      %374 = vmatmul.f32.gmra.mxu0 %v311
      %v375 = vpop.f32.mrf.mxu0
      %v376 = vadd.f32 %v301, %v375
      %377 = vmatmul.f32.gmra.mxu0 %v314
      %v378 = vpop.f32.mrf.mxu0
      %v379 = vadd.f32 %v301, %v378
      %380 = vmatmul.f32.gmra.mxu0 %v317
      %v381 = vpop.f32.mrf.mxu0
      %v382 = vadd.f32 %v301, %v381
      %383 = vmatmul.f32.gmra.mxu0 %v320
      %v384 = vpop.f32.mrf.mxu0
      %v385 = vadd.f32 %v301, %v384
      %386 = vmatmul.f32.gmra.mxu0 %v323
      %v387 = vpop.f32.mrf.mxu0
      %v388 = vadd.f32 %v301, %v387
      %389 = vmatmul.f32.gmra.mxu0 %v326
      %v390 = vpop.f32.mrf.mxu0
      %v391 = vadd.f32 %v301, %v390
      %392 = vmatmul.f32.gmra.mxu0 %v329
      %v393 = vpop.f32.mrf.mxu0
      %v394 = vadd.f32 %v301, %v393
      %395 = vmatmul.f32.gmra.mxu0 %v332
      %v396 = vpop.f32.mrf.mxu0
      %v397 = vadd.f32 %v301, %v396
      %398 = vmatmul.f32.gmra.mxu0 %v335
      %v399 = vpop.f32.mrf.mxu0
      %v400 = vadd.f32 %v301, %v399
      %401 = vmatmul.f32.gmra.mxu0 %v338
      %v402 = vpop.f32.mrf.mxu0
      %v403 = vadd.f32 %v301, %v402
      %404 = vmatmul.f32.gmra.mxu0 %v341
      %v405 = vpop.f32.mrf.mxu0
      %v406 = vadd.f32 %v301, %v405
      %407 = vmatmul.f32.gmra.mxu0 %v344
      %v408 = vpop.f32.mrf.mxu0
      %v409 = vadd.f32 %v301, %v408
      %410 = vmatmul.f32.gmra.mxu0 %v347
      %v411 = vpop.f32.mrf.mxu0
      %v412 = vadd.f32 %v301, %v411
      %413 = vmatmul.f32.gmra.mxu0 %v350
      %v414 = vpop.f32.mrf.mxu0
      %v415 = vadd.f32 %v301, %v414
      %416 = vdwg.mxu0
      %v417 = vand.u32 2147483647, %v370
      %vm418 = vcmp.le.f32.partialorder %v417, 0.7853982
      %vm419 = vcmp.lt.s32.totalorder %v370, 0
      %v420 = vand.u32 %v370, 2139095040
      %v421 = vshrl.u32 %v420, 23
      %v422 = vsub.s32 %v421, 127
      %v423 = vand.u32 2147483647, %v370
      %v424 = vand.u32 %v423, 8388607
      %v425 = vor.u32 %v424, 8388608
      %v426 = vsub.s32 0, %v425
      %v427 = vadd.s32 %v422, 1
      %vm428 = vcmp.gt.s32.totalorder %v427, 0
      %v429 = vsel %vm428, %v427, 0
      %v430 = vshrl.u32 %v429, 5
      %v431 = vand.u32 %v429, 31
      %v432 = vsub.s32 32, %v431
      %v433 = vshrl.u32 683565275, %v432
      %v434 = vshll.u32 683565275, %v431
      %v435 = vshrl.u32 2475754826, %v432
      %v436 = vor.u32 %v434, %v435
      %v437 = vshll.u32 2475754826, %v431
      %v438 = vshrl.u32 2131351028, %v432
      %v439 = vor.u32 %v437, %v438
      %v440 = vshll.u32 2131351028, %v431
      %v441 = vshrl.u32 2102212464, %v432
      %v442 = vor.u32 %v440, %v441
      %v443 = vshll.u32 2102212464, %v431
      %v444 = vshrl.u32 920167782, %v432
      %v445 = vor.u32 %v443, %v444
      %v446 = vshll.u32 920167782, %v431
      %v447 = vshrl.u32 1326507024, %v432
      %v448 = vor.u32 %v446, %v447
      %vm449 = vcmp.lt.s32.totalorder %v430, 1
      %vm450 = vcmp.lt.s32.totalorder %v430, 2
      %vm451 = vcmp.lt.s32.totalorder %v430, 3
      %vm452 = vcmp.lt.s32.totalorder %v430, 4
      %v453 = vsel %vm449, %v433, %v436
      %v454 = vsel %vm452, %v442, 2102212464
      %v455 = vsel %vm451, %v439, %v454
      %v456 = vsel %vm450, %v453, %v455
      %v457 = vsel %vm449, %v436, %v439
      %v458 = vsel %vm452, %v445, 920167782
      %v459 = vsel %vm451, %v442, %v458
      %v460 = vsel %vm450, %v457, %v459
      %v461 = vsel %vm449, %v439, %v442
      %v462 = vsel %vm452, %v448, 1326507024
      %v463 = vsel %vm451, %v445, %v462
      %v464 = vsel %vm450, %v461, %v463
      %v465 = vshll.u32 %v425, 8
      %v466 = vand.u32 %v465, 65535
      %v467 = vshrl.u32 %v465, 16
      %v468 = vand.u32 %v464, 65535
      %v469 = vshrl.u32 %v464, 16
      %v470 = vmul.u32 %v466, %v468
      %v471 = vmul.u32 %v466, %v469
      %v472 = vmul.u32 %v467, %v468
      %v473 = vmul.u32 %v467, %v469
      %v474 = vshll.u32 %v471, 16
      %v475 = vshrl.u32 %v471, 16
      %v476 = vshll.u32 %v472, 16
      %v477 = vshrl.u32 %v472, 16
      %vm478 = vc.u32 %v470, %v474
      %v479 = vsel %vm478, 1, 0
      %v480 = vadd.s32 %v470, %v474
      %v481 = vadd.s32 %v473, %v479
      %vm482 = vc.u32 %v480, %v476
      %v483 = vsel %vm482, 1, 0
      %v484 = vadd.s32 %v480, %v476
      %v485 = vadd.s32 %v481, %v483
      %v486 = vadd.s32 %v485, %v475
      %v487 = vadd.s32 %v486, %v477
      %v488 = vand.u32 %v465, 65535
      %v489 = vshrl.u32 %v465, 16
      %v490 = vand.u32 %v460, 65535
      %v491 = vshrl.u32 %v460, 16
      %v492 = vmul.u32 %v488, %v490
      %v493 = vmul.u32 %v488, %v491
      %v494 = vmul.u32 %v489, %v490
      %v495 = vmul.u32 %v489, %v491
      %v496 = vshll.u32 %v493, 16
      %v497 = vshrl.u32 %v493, 16
      %v498 = vshll.u32 %v494, 16
      %v499 = vshrl.u32 %v494, 16
      %vm500 = vc.u32 %v492, %v496
      %v501 = vsel %vm500, 1, 0
      %v502 = vadd.s32 %v492, %v496
      %v503 = vadd.s32 %v495, %v501
      %vm504 = vc.u32 %v502, %v498
      %v505 = vsel %vm504, 1, 0
      %v506 = vadd.s32 %v502, %v498
      %v507 = vadd.s32 %v503, %v505
      %v508 = vadd.s32 %v507, %v497
      %v509 = vadd.s32 %v508, %v499
      %v510 = vmul.u32 %v465, %v456
      %v511 = vadd.s32 %v487, %v506
      %vm512 = vc.u32 %v487, %v506
      %v513 = vadd.s32 %v509, 1
      %v514 = vsel %vm512, %v513, %v509
      %v515 = vadd.s32 %v510, %v514
      %v516 = vadd.s32 %v515, 536870912
      %v517 = vshrl.u32 %v516, 30
      %v518 = vshll.u32 %v517, 30
      %v519 = vsub.s32 %v515, %v518
      %vm520 = vcmp.lt.s32.totalorder %v519, 0
      %v521 = vsub.s32 0, %v519
      %v522 = vsel %vm520, %v521, %v519
      %v523 = vclz %v522
      %v524 = vsub.s32 %v523, 2
      %vm525 = vcmp.gt.s32.totalorder 0, %v524
      %v526 = vsel %vm525, 0, %v524
      %v527 = vsub.s32 32, %v526
      %v528 = vshll.u32 %v519, %v526
      %v529 = vshrl.u32 %v511, %v527
      %v530 = vor.u32 %v528, %v529
      %v531 = vsub.s32 4294967266, %v526
      %v532 = vadd.s32 %v531, 127
      %v533 = vshll.u32 %v532, 23
      %v534 = vor.u32 4788187, %v533
      %v535 = vand.u32 2147483647, %v534
      %v537 = vcvt.s32.f32 %v530
      %v538 = vmul.f32 %v537, %v535
      %v539 = vxor.u32 %v538, 2147483648
      %v540 = vsel %vm419, %v539, %v538
      %v541 = vsub.s32 4, %v517
      %v542 = vsel %vm419, %v541, %v517
      %v543 = vsel %vm418, %v370, %v540
      %v544 = vsel %vm418, 0, %v542
      %v545 = vmul.f32 %v543, %v543
      %v546 = vmul.f32 %v545, -0.001358992
      %v547 = vadd.f32 %v546, 0.041655596
      %v548 = vmul.f32 %v545, %v547
      %v549 = vadd.f32 %v548, -0.4999988
      %v550 = vmul.f32 %v545, %v549
      %v551 = vadd.f32 1.0, %v550
      %v552 = vmul.f32 %v543, %v543
      %v553 = vmul.f32 %v552, -0.00019511016
      %v554 = vadd.f32 %v553, 0.008332121
      %v555 = vmul.f32 %v552, %v554
      %v556 = vadd.f32 %v555, -0.16666654
      %v557 = vmul.f32 %v552, %v556
      %v558 = vadd.f32 %v557, 1.0
      %v559 = vmul.f32 %v558, %v543
      %vm560 = vweird.f32 %v370
      %v561 = vadd.s32 %v544, 3
      %v562 = vand.u32 %v561, 3
      %vm563 = vcmp.lt.s32.totalorder %v562, 2
      %vm564 = vcmp.eq.s32.totalorder %v562, 0
      %v565 = vxor.u32 %v559, 2147483648
      %v566 = vsel %vm564, %v551, %v565
      %vm567 = vcmp.eq.s32.totalorder %v562, 2
      %v568 = vxor.u32 %v551, 2147483648
      %v569 = vsel %vm567, %v568, %v559
      %v570 = vsel %vm563, %v566, %v569
      %v571 = vsel %vm560, nan, %v570
      %v572 = vand.u32 2147483647, %v373
      %vm573 = vcmp.le.f32.partialorder %v572, 0.7853982
      %vm574 = vcmp.lt.s32.totalorder %v373, 0
      %v575 = vand.u32 %v373, 2139095040
      %v576 = vshrl.u32 %v575, 23
      %v577 = vsub.s32 %v576, 127
      %v578 = vand.u32 2147483647, %v373
      %v579 = vand.u32 %v578, 8388607
      %v580 = vor.u32 %v579, 8388608
      %v581 = vsub.s32 0, %v580
      %v582 = vadd.s32 %v577, 1
      %vm583 = vcmp.gt.s32.totalorder %v582, 0
      %v584 = vsel %vm583, %v582, 0
      %v585 = vshrl.u32 %v584, 5
      %v586 = vand.u32 %v584, 31
      %v587 = vsub.s32 32, %v586
      %v588 = vshrl.u32 683565275, %v587
      %v589 = vshll.u32 683565275, %v586
      %v590 = vshrl.u32 2475754826, %v587
      %v591 = vor.u32 %v589, %v590
      %v592 = vshll.u32 2475754826, %v586
      %v593 = vshrl.u32 2131351028, %v587
      %v594 = vor.u32 %v592, %v593
      %v595 = vshll.u32 2131351028, %v586
      %v596 = vshrl.u32 2102212464, %v587
      %v597 = vor.u32 %v595, %v596
      %v598 = vshll.u32 2102212464, %v586
      %v599 = vshrl.u32 920167782, %v587
      %v600 = vor.u32 %v598, %v599
      %v601 = vshll.u32 920167782, %v586
      %v602 = vshrl.u32 1326507024, %v587
      %v603 = vor.u32 %v601, %v602
      %vm604 = vcmp.lt.s32.totalorder %v585, 1
      %vm605 = vcmp.lt.s32.totalorder %v585, 2
      %vm606 = vcmp.lt.s32.totalorder %v585, 3
      %vm607 = vcmp.lt.s32.totalorder %v585, 4
      %v608 = vsel %vm604, %v588, %v591
      %v609 = vsel %vm607, %v597, 2102212464
      %v610 = vsel %vm606, %v594, %v609
      %v611 = vsel %vm605, %v608, %v610
      %v612 = vsel %vm604, %v591, %v594
      %v613 = vsel %vm607, %v600, 920167782
      %v614 = vsel %vm606, %v597, %v613
      %v615 = vsel %vm605, %v612, %v614
      %v616 = vsel %vm604, %v594, %v597
      %v617 = vsel %vm607, %v603, 1326507024
      %v618 = vsel %vm606, %v600, %v617
      %v619 = vsel %vm605, %v616, %v618
      %v620 = vshll.u32 %v580, 8
      %v621 = vand.u32 %v620, 65535
      %v622 = vshrl.u32 %v620, 16
      %v623 = vand.u32 %v619, 65535
      %v624 = vshrl.u32 %v619, 16
      %v625 = vmul.u32 %v621, %v623
      %v626 = vmul.u32 %v621, %v624
      %v627 = vmul.u32 %v622, %v623
      %v628 = vmul.u32 %v622, %v624
      %v629 = vshll.u32 %v626, 16
      %v630 = vshrl.u32 %v626, 16
      %v631 = vshll.u32 %v627, 16
      %v632 = vshrl.u32 %v627, 16
      %vm633 = vc.u32 %v625, %v629
      %v634 = vsel %vm633, 1, 0
      %v635 = vadd.s32 %v625, %v629
      %v636 = vadd.s32 %v628, %v634
      %vm637 = vc.u32 %v635, %v631
      %v638 = vsel %vm637, 1, 0
      %v639 = vadd.s32 %v635, %v631
      %v640 = vadd.s32 %v636, %v638
      %v641 = vadd.s32 %v640, %v630
      %v642 = vadd.s32 %v641, %v632
      %v643 = vand.u32 %v620, 65535
      %v644 = vshrl.u32 %v620, 16
      %v645 = vand.u32 %v615, 65535
      %v646 = vshrl.u32 %v615, 16
      %v647 = vmul.u32 %v643, %v645
      %v648 = vmul.u32 %v643, %v646
      %v649 = vmul.u32 %v644, %v645
      %v650 = vmul.u32 %v644, %v646
      %v651 = vshll.u32 %v648, 16
      %v652 = vshrl.u32 %v648, 16
      %v653 = vshll.u32 %v649, 16
      %v654 = vshrl.u32 %v649, 16
      %vm655 = vc.u32 %v647, %v651
      %v656 = vsel %vm655, 1, 0
      %v657 = vadd.s32 %v647, %v651
      %v658 = vadd.s32 %v650, %v656
      %vm659 = vc.u32 %v657, %v653
      %v660 = vsel %vm659, 1, 0
      %v661 = vadd.s32 %v657, %v653
      %v662 = vadd.s32 %v658, %v660
      %v663 = vadd.s32 %v662, %v652
      %v664 = vadd.s32 %v663, %v654
      %v665 = vmul.u32 %v620, %v611
      %v666 = vadd.s32 %v642, %v661
      %vm667 = vc.u32 %v642, %v661
      %v668 = vadd.s32 %v664, 1
      %v669 = vsel %vm667, %v668, %v664
      %v670 = vadd.s32 %v665, %v669
      %v671 = vadd.s32 %v670, 536870912
      %v672 = vshrl.u32 %v671, 30
      %v673 = vshll.u32 %v672, 30
      %v674 = vsub.s32 %v670, %v673
      %vm675 = vcmp.lt.s32.totalorder %v674, 0
      %v676 = vsub.s32 0, %v674
      %v677 = vsel %vm675, %v676, %v674
      %v678 = vclz %v677
      %v679 = vsub.s32 %v678, 2
      %vm680 = vcmp.gt.s32.totalorder 0, %v679
      %v681 = vsel %vm680, 0, %v679
      %v682 = vsub.s32 32, %v681
      %v683 = vshll.u32 %v674, %v681
      %v684 = vshrl.u32 %v666, %v682
      %v685 = vor.u32 %v683, %v684
      %v686 = vsub.s32 4294967266, %v681
      %v687 = vadd.s32 %v686, 127
      %v688 = vshll.u32 %v687, 23
      %v689 = vor.u32 4788187, %v688
      %v690 = vand.u32 2147483647, %v689
      %v692 = vcvt.s32.f32 %v685
      %v693 = vmul.f32 %v692, %v690
      %v694 = vxor.u32 %v693, 2147483648
      %v695 = vsel %vm574, %v694, %v693
      %v696 = vsub.s32 4, %v672
      %v697 = vsel %vm574, %v696, %v672
      %v698 = vsel %vm573, %v373, %v695
      %v699 = vsel %vm573, 0, %v697
      %v700 = vmul.f32 %v698, %v698
      %v701 = vmul.f32 %v700, -0.001358992
      %v702 = vadd.f32 %v701, 0.041655596
      %v703 = vmul.f32 %v700, %v702
      %v704 = vadd.f32 %v703, -0.4999988
      %v705 = vmul.f32 %v700, %v704
      %v706 = vadd.f32 1.0, %v705
      %v707 = vmul.f32 %v698, %v698
      %v708 = vmul.f32 %v707, -0.00019511016
      %v709 = vadd.f32 %v708, 0.008332121
      %v710 = vmul.f32 %v707, %v709
      %v711 = vadd.f32 %v710, -0.16666654
      %v712 = vmul.f32 %v707, %v711
      %v713 = vadd.f32 %v712, 1.0
      %v714 = vmul.f32 %v713, %v698
      %vm715 = vweird.f32 %v373
      %v716 = vadd.s32 %v699, 3
      %v717 = vand.u32 %v716, 3
      %vm718 = vcmp.lt.s32.totalorder %v717, 2
      %vm719 = vcmp.eq.s32.totalorder %v717, 0
      %v720 = vxor.u32 %v714, 2147483648
      %v721 = vsel %vm719, %v706, %v720
      %vm722 = vcmp.eq.s32.totalorder %v717, 2
      %v723 = vxor.u32 %v706, 2147483648
      %v724 = vsel %vm722, %v723, %v714
      %v725 = vsel %vm718, %v721, %v724
      %v726 = vsel %vm715, nan, %v725
      %v727 = vand.u32 2147483647, %v376
      %vm728 = vcmp.le.f32.partialorder %v727, 0.7853982
      %vm729 = vcmp.lt.s32.totalorder %v376, 0
      %v730 = vand.u32 %v376, 2139095040
      %v731 = vshrl.u32 %v730, 23
      %v732 = vsub.s32 %v731, 127
      %v733 = vand.u32 2147483647, %v376
      %v734 = vand.u32 %v733, 8388607
      %v735 = vor.u32 %v734, 8388608
      %v736 = vsub.s32 0, %v735
      %v737 = vadd.s32 %v732, 1
      %vm738 = vcmp.gt.s32.totalorder %v737, 0
      %v739 = vsel %vm738, %v737, 0
      %v740 = vshrl.u32 %v739, 5
      %v741 = vand.u32 %v739, 31
      %v742 = vsub.s32 32, %v741
      %v743 = vshrl.u32 683565275, %v742
      %v744 = vshll.u32 683565275, %v741
      %v745 = vshrl.u32 2475754826, %v742
      %v746 = vor.u32 %v744, %v745
      %v747 = vshll.u32 2475754826, %v741
      %v748 = vshrl.u32 2131351028, %v742
      %v749 = vor.u32 %v747, %v748
      %v750 = vshll.u32 2131351028, %v741
      %v751 = vshrl.u32 2102212464, %v742
      %v752 = vor.u32 %v750, %v751
      %v753 = vshll.u32 2102212464, %v741
      %v754 = vshrl.u32 920167782, %v742
      %v755 = vor.u32 %v753, %v754
      %v756 = vshll.u32 920167782, %v741
      %v757 = vshrl.u32 1326507024, %v742
      %v758 = vor.u32 %v756, %v757
      %vm759 = vcmp.lt.s32.totalorder %v740, 1
      %vm760 = vcmp.lt.s32.totalorder %v740, 2
      %vm761 = vcmp.lt.s32.totalorder %v740, 3
      %vm762 = vcmp.lt.s32.totalorder %v740, 4
      %v763 = vsel %vm759, %v743, %v746
      %v764 = vsel %vm762, %v752, 2102212464
      %v765 = vsel %vm761, %v749, %v764
      %v766 = vsel %vm760, %v763, %v765
      %v767 = vsel %vm759, %v746, %v749
      %v768 = vsel %vm762, %v755, 920167782
      %v769 = vsel %vm761, %v752, %v768
      %v770 = vsel %vm760, %v767, %v769
      %v771 = vsel %vm759, %v749, %v752
      %v772 = vsel %vm762, %v758, 1326507024
      %v773 = vsel %vm761, %v755, %v772
      %v774 = vsel %vm760, %v771, %v773
      %v775 = vshll.u32 %v735, 8
      %v776 = vand.u32 %v775, 65535
      %v777 = vshrl.u32 %v775, 16
      %v778 = vand.u32 %v774, 65535
      %v779 = vshrl.u32 %v774, 16
      %v780 = vmul.u32 %v776, %v778
      %v781 = vmul.u32 %v776, %v779
      %v782 = vmul.u32 %v777, %v778
      %v783 = vmul.u32 %v777, %v779
      %v784 = vshll.u32 %v781, 16
      %v785 = vshrl.u32 %v781, 16
      %v786 = vshll.u32 %v782, 16
      %v787 = vshrl.u32 %v782, 16
      %vm788 = vc.u32 %v780, %v784
      %v789 = vsel %vm788, 1, 0
      %v790 = vadd.s32 %v780, %v784
      %v791 = vadd.s32 %v783, %v789
      %vm792 = vc.u32 %v790, %v786
      %v793 = vsel %vm792, 1, 0
      %v794 = vadd.s32 %v790, %v786
      %v795 = vadd.s32 %v791, %v793
      %v796 = vadd.s32 %v795, %v785
      %v797 = vadd.s32 %v796, %v787
      %v798 = vand.u32 %v775, 65535
      %v799 = vshrl.u32 %v775, 16
      %v800 = vand.u32 %v770, 65535
      %v801 = vshrl.u32 %v770, 16
      %v802 = vmul.u32 %v798, %v800
      %v803 = vmul.u32 %v798, %v801
      %v804 = vmul.u32 %v799, %v800
      %v805 = vmul.u32 %v799, %v801
      %v806 = vshll.u32 %v803, 16
      %v807 = vshrl.u32 %v803, 16
      %v808 = vshll.u32 %v804, 16
      %v809 = vshrl.u32 %v804, 16
      %vm810 = vc.u32 %v802, %v806
      %v811 = vsel %vm810, 1, 0
      %v812 = vadd.s32 %v802, %v806
      %v813 = vadd.s32 %v805, %v811
      %vm814 = vc.u32 %v812, %v808
      %v815 = vsel %vm814, 1, 0
      %v816 = vadd.s32 %v812, %v808
      %v817 = vadd.s32 %v813, %v815
      %v818 = vadd.s32 %v817, %v807
      %v819 = vadd.s32 %v818, %v809
      %v820 = vmul.u32 %v775, %v766
      %v821 = vadd.s32 %v797, %v816
      %vm822 = vc.u32 %v797, %v816
      %v823 = vadd.s32 %v819, 1
      %v824 = vsel %vm822, %v823, %v819
      %v825 = vadd.s32 %v820, %v824
      %v826 = vadd.s32 %v825, 536870912
      %v827 = vshrl.u32 %v826, 30
      %v828 = vshll.u32 %v827, 30
      %v829 = vsub.s32 %v825, %v828
      %vm830 = vcmp.lt.s32.totalorder %v829, 0
      %v831 = vsub.s32 0, %v829
      %v832 = vsel %vm830, %v831, %v829
      %v833 = vclz %v832
      %v834 = vsub.s32 %v833, 2
      %vm835 = vcmp.gt.s32.totalorder 0, %v834
      %v836 = vsel %vm835, 0, %v834
      %v837 = vsub.s32 32, %v836
      %v838 = vshll.u32 %v829, %v836
      %v839 = vshrl.u32 %v821, %v837
      %v840 = vor.u32 %v838, %v839
      %v841 = vsub.s32 4294967266, %v836
      %v842 = vadd.s32 %v841, 127
      %v843 = vshll.u32 %v842, 23
      %v844 = vor.u32 4788187, %v843
      %v845 = vand.u32 2147483647, %v844
      %v847 = vcvt.s32.f32 %v840
      %v848 = vmul.f32 %v847, %v845
      %v849 = vxor.u32 %v848, 2147483648
      %v850 = vsel %vm729, %v849, %v848
      %v851 = vsub.s32 4, %v827
      %v852 = vsel %vm729, %v851, %v827
      %v853 = vsel %vm728, %v376, %v850
      %v854 = vsel %vm728, 0, %v852
      %v855 = vmul.f32 %v853, %v853
      %v856 = vmul.f32 %v855, -0.001358992
      %v857 = vadd.f32 %v856, 0.041655596
      %v858 = vmul.f32 %v855, %v857
      %v859 = vadd.f32 %v858, -0.4999988
      %v860 = vmul.f32 %v855, %v859
      %v861 = vadd.f32 1.0, %v860
      %v862 = vmul.f32 %v853, %v853
      %v863 = vmul.f32 %v862, -0.00019511016
      %v864 = vadd.f32 %v863, 0.008332121
      %v865 = vmul.f32 %v862, %v864
      %v866 = vadd.f32 %v865, -0.16666654
      %v867 = vmul.f32 %v862, %v866
      %v868 = vadd.f32 %v867, 1.0
      %v869 = vmul.f32 %v868, %v853
      %vm870 = vweird.f32 %v376
      %v871 = vadd.s32 %v854, 3
      %v872 = vand.u32 %v871, 3
      %vm873 = vcmp.lt.s32.totalorder %v872, 2
      %vm874 = vcmp.eq.s32.totalorder %v872, 0
      %v875 = vxor.u32 %v869, 2147483648
      %v876 = vsel %vm874, %v861, %v875
      %vm877 = vcmp.eq.s32.totalorder %v872, 2
      %v878 = vxor.u32 %v861, 2147483648
      %v879 = vsel %vm877, %v878, %v869
      %v880 = vsel %vm873, %v876, %v879
      %v881 = vsel %vm870, nan, %v880
      %v882 = vand.u32 2147483647, %v379
      %vm883 = vcmp.le.f32.partialorder %v882, 0.7853982
      %vm884 = vcmp.lt.s32.totalorder %v379, 0
      %v885 = vand.u32 %v379, 2139095040
      %v886 = vshrl.u32 %v885, 23
      %v887 = vsub.s32 %v886, 127
      %v888 = vand.u32 2147483647, %v379
      %v889 = vand.u32 %v888, 8388607
      %v890 = vor.u32 %v889, 8388608
      %v891 = vsub.s32 0, %v890
      %v892 = vadd.s32 %v887, 1
      %vm893 = vcmp.gt.s32.totalorder %v892, 0
      %v894 = vsel %vm893, %v892, 0
      %v895 = vshrl.u32 %v894, 5
      %v896 = vand.u32 %v894, 31
      %v897 = vsub.s32 32, %v896
      %v898 = vshrl.u32 683565275, %v897
      %v899 = vshll.u32 683565275, %v896
      %v900 = vshrl.u32 2475754826, %v897
      %v901 = vor.u32 %v899, %v900
      %v902 = vshll.u32 2475754826, %v896
      %v903 = vshrl.u32 2131351028, %v897
      %v904 = vor.u32 %v902, %v903
      %v905 = vshll.u32 2131351028, %v896
      %v906 = vshrl.u32 2102212464, %v897
      %v907 = vor.u32 %v905, %v906
      %v908 = vshll.u32 2102212464, %v896
      %v909 = vshrl.u32 920167782, %v897
      %v910 = vor.u32 %v908, %v909
      %v911 = vshll.u32 920167782, %v896
      %v912 = vshrl.u32 1326507024, %v897
      %v913 = vor.u32 %v911, %v912
      %vm914 = vcmp.lt.s32.totalorder %v895, 1
      %vm915 = vcmp.lt.s32.totalorder %v895, 2
      %vm916 = vcmp.lt.s32.totalorder %v895, 3
      %vm917 = vcmp.lt.s32.totalorder %v895, 4
      %v918 = vsel %vm914, %v898, %v901
      %v919 = vsel %vm917, %v907, 2102212464
      %v920 = vsel %vm916, %v904, %v919
      %v921 = vsel %vm915, %v918, %v920
      %v922 = vsel %vm914, %v901, %v904
      %v923 = vsel %vm917, %v910, 920167782
      %v924 = vsel %vm916, %v907, %v923
      %v925 = vsel %vm915, %v922, %v924
      %v926 = vsel %vm914, %v904, %v907
      %v927 = vsel %vm917, %v913, 1326507024
      %v928 = vsel %vm916, %v910, %v927
      %v929 = vsel %vm915, %v926, %v928
      %v930 = vshll.u32 %v890, 8
      %v931 = vand.u32 %v930, 65535
      %v932 = vshrl.u32 %v930, 16
      %v933 = vand.u32 %v929, 65535
      %v934 = vshrl.u32 %v929, 16
      %v935 = vmul.u32 %v931, %v933
      %v936 = vmul.u32 %v931, %v934
      %v937 = vmul.u32 %v932, %v933
      %v938 = vmul.u32 %v932, %v934
      %v939 = vshll.u32 %v936, 16
      %v940 = vshrl.u32 %v936, 16
      %v941 = vshll.u32 %v937, 16
      %v942 = vshrl.u32 %v937, 16
      %vm943 = vc.u32 %v935, %v939
      %v944 = vsel %vm943, 1, 0
      %v945 = vadd.s32 %v935, %v939
      %v946 = vadd.s32 %v938, %v944
      %vm947 = vc.u32 %v945, %v941
      %v948 = vsel %vm947, 1, 0
      %v949 = vadd.s32 %v945, %v941
      %v950 = vadd.s32 %v946, %v948
      %v951 = vadd.s32 %v950, %v940
      %v952 = vadd.s32 %v951, %v942
      %v953 = vand.u32 %v930, 65535
      %v954 = vshrl.u32 %v930, 16
      %v955 = vand.u32 %v925, 65535
      %v956 = vshrl.u32 %v925, 16
      %v957 = vmul.u32 %v953, %v955
      %v958 = vmul.u32 %v953, %v956
      %v959 = vmul.u32 %v954, %v955
      %v960 = vmul.u32 %v954, %v956
      %v961 = vshll.u32 %v958, 16
      %v962 = vshrl.u32 %v958, 16
      %v963 = vshll.u32 %v959, 16
      %v964 = vshrl.u32 %v959, 16
      %vm965 = vc.u32 %v957, %v961
      %v966 = vsel %vm965, 1, 0
      %v967 = vadd.s32 %v957, %v961
      %v968 = vadd.s32 %v960, %v966
      %vm969 = vc.u32 %v967, %v963
      %v970 = vsel %vm969, 1, 0
      %v971 = vadd.s32 %v967, %v963
      %v972 = vadd.s32 %v968, %v970
      %v973 = vadd.s32 %v972, %v962
      %v974 = vadd.s32 %v973, %v964
      %v975 = vmul.u32 %v930, %v921
      %v976 = vadd.s32 %v952, %v971
      %vm977 = vc.u32 %v952, %v971
      %v978 = vadd.s32 %v974, 1
      %v979 = vsel %vm977, %v978, %v974
      %v980 = vadd.s32 %v975, %v979
      %v981 = vadd.s32 %v980, 536870912
      %v982 = vshrl.u32 %v981, 30
      %v983 = vshll.u32 %v982, 30
      %v984 = vsub.s32 %v980, %v983
      %vm985 = vcmp.lt.s32.totalorder %v984, 0
      %v986 = vsub.s32 0, %v984
      %v987 = vsel %vm985, %v986, %v984
      %v988 = vclz %v987
      %v989 = vsub.s32 %v988, 2
      %vm990 = vcmp.gt.s32.totalorder 0, %v989
      %v991 = vsel %vm990, 0, %v989
      %v992 = vsub.s32 32, %v991
      %v993 = vshll.u32 %v984, %v991
      %v994 = vshrl.u32 %v976, %v992
      %v995 = vor.u32 %v993, %v994
      %v996 = vsub.s32 4294967266, %v991
      %v997 = vadd.s32 %v996, 127
      %v998 = vshll.u32 %v997, 23
      %v999 = vor.u32 4788187, %v998
      %v1000 = vand.u32 2147483647, %v999
      %v1002 = vcvt.s32.f32 %v995
      %v1003 = vmul.f32 %v1002, %v1000
      %v1004 = vxor.u32 %v1003, 2147483648
      %v1005 = vsel %vm884, %v1004, %v1003
      %v1006 = vsub.s32 4, %v982
      %v1007 = vsel %vm884, %v1006, %v982
      %v1008 = vsel %vm883, %v379, %v1005
      %v1009 = vsel %vm883, 0, %v1007
      %v1010 = vmul.f32 %v1008, %v1008
      %v1011 = vmul.f32 %v1010, -0.001358992
      %v1012 = vadd.f32 %v1011, 0.041655596
      %v1013 = vmul.f32 %v1010, %v1012
      %v1014 = vadd.f32 %v1013, -0.4999988
      %v1015 = vmul.f32 %v1010, %v1014
      %v1016 = vadd.f32 1.0, %v1015
      %v1017 = vmul.f32 %v1008, %v1008
      %v1018 = vmul.f32 %v1017, -0.00019511016
      %v1019 = vadd.f32 %v1018, 0.008332121
      %v1020 = vmul.f32 %v1017, %v1019
      %v1021 = vadd.f32 %v1020, -0.16666654
      %v1022 = vmul.f32 %v1017, %v1021
      %v1023 = vadd.f32 %v1022, 1.0
      %v1024 = vmul.f32 %v1023, %v1008
      %vm1025 = vweird.f32 %v379
      %v1026 = vadd.s32 %v1009, 3
      %v1027 = vand.u32 %v1026, 3
      %vm1028 = vcmp.lt.s32.totalorder %v1027, 2
      %vm1029 = vcmp.eq.s32.totalorder %v1027, 0
      %v1030 = vxor.u32 %v1024, 2147483648
      %v1031 = vsel %vm1029, %v1016, %v1030
      %vm1032 = vcmp.eq.s32.totalorder %v1027, 2
      %v1033 = vxor.u32 %v1016, 2147483648
      %v1034 = vsel %vm1032, %v1033, %v1024
      %v1035 = vsel %vm1028, %v1031, %v1034
      %v1036 = vsel %vm1025, nan, %v1035
      %v1037 = vand.u32 2147483647, %v382
      %vm1038 = vcmp.le.f32.partialorder %v1037, 0.7853982
      %vm1039 = vcmp.lt.s32.totalorder %v382, 0
      %v1040 = vand.u32 %v382, 2139095040
      %v1041 = vshrl.u32 %v1040, 23
      %v1042 = vsub.s32 %v1041, 127
      %v1043 = vand.u32 2147483647, %v382
      %v1044 = vand.u32 %v1043, 8388607
      %v1045 = vor.u32 %v1044, 8388608
      %v1046 = vsub.s32 0, %v1045
      %v1047 = vadd.s32 %v1042, 1
      %vm1048 = vcmp.gt.s32.totalorder %v1047, 0
      %v1049 = vsel %vm1048, %v1047, 0
      %v1050 = vshrl.u32 %v1049, 5
      %v1051 = vand.u32 %v1049, 31
      %v1052 = vsub.s32 32, %v1051
      %v1053 = vshrl.u32 683565275, %v1052
      %v1054 = vshll.u32 683565275, %v1051
      %v1055 = vshrl.u32 2475754826, %v1052
      %v1056 = vor.u32 %v1054, %v1055
      %v1057 = vshll.u32 2475754826, %v1051
      %v1058 = vshrl.u32 2131351028, %v1052
      %v1059 = vor.u32 %v1057, %v1058
      %v1060 = vshll.u32 2131351028, %v1051
      %v1061 = vshrl.u32 2102212464, %v1052
      %v1062 = vor.u32 %v1060, %v1061
      %v1063 = vshll.u32 2102212464, %v1051
      %v1064 = vshrl.u32 920167782, %v1052
      %v1065 = vor.u32 %v1063, %v1064
      %v1066 = vshll.u32 920167782, %v1051
      %v1067 = vshrl.u32 1326507024, %v1052
      %v1068 = vor.u32 %v1066, %v1067
      %vm1069 = vcmp.lt.s32.totalorder %v1050, 1
      %vm1070 = vcmp.lt.s32.totalorder %v1050, 2
      %vm1071 = vcmp.lt.s32.totalorder %v1050, 3
      %vm1072 = vcmp.lt.s32.totalorder %v1050, 4
      %v1073 = vsel %vm1069, %v1053, %v1056
      %v1074 = vsel %vm1072, %v1062, 2102212464
      %v1075 = vsel %vm1071, %v1059, %v1074
      %v1076 = vsel %vm1070, %v1073, %v1075
      %v1077 = vsel %vm1069, %v1056, %v1059
      %v1078 = vsel %vm1072, %v1065, 920167782
      %v1079 = vsel %vm1071, %v1062, %v1078
      %v1080 = vsel %vm1070, %v1077, %v1079
      %v1081 = vsel %vm1069, %v1059, %v1062
      %v1082 = vsel %vm1072, %v1068, 1326507024
      %v1083 = vsel %vm1071, %v1065, %v1082
      %v1084 = vsel %vm1070, %v1081, %v1083
      %v1085 = vshll.u32 %v1045, 8
      %v1086 = vand.u32 %v1085, 65535
      %v1087 = vshrl.u32 %v1085, 16
      %v1088 = vand.u32 %v1084, 65535
      %v1089 = vshrl.u32 %v1084, 16
      %v1090 = vmul.u32 %v1086, %v1088
      %v1091 = vmul.u32 %v1086, %v1089
      %v1092 = vmul.u32 %v1087, %v1088
      %v1093 = vmul.u32 %v1087, %v1089
      %v1094 = vshll.u32 %v1091, 16
      %v1095 = vshrl.u32 %v1091, 16
      %v1096 = vshll.u32 %v1092, 16
      %v1097 = vshrl.u32 %v1092, 16
      %vm1098 = vc.u32 %v1090, %v1094
      %v1099 = vsel %vm1098, 1, 0
      %v1100 = vadd.s32 %v1090, %v1094
      %v1101 = vadd.s32 %v1093, %v1099
      %vm1102 = vc.u32 %v1100, %v1096
      %v1103 = vsel %vm1102, 1, 0
      %v1104 = vadd.s32 %v1100, %v1096
      %v1105 = vadd.s32 %v1101, %v1103
      %v1106 = vadd.s32 %v1105, %v1095
      %v1107 = vadd.s32 %v1106, %v1097
      %v1108 = vand.u32 %v1085, 65535
      %v1109 = vshrl.u32 %v1085, 16
      %v1110 = vand.u32 %v1080, 65535
      %v1111 = vshrl.u32 %v1080, 16
      %v1112 = vmul.u32 %v1108, %v1110
      %v1113 = vmul.u32 %v1108, %v1111
      %v1114 = vmul.u32 %v1109, %v1110
      %v1115 = vmul.u32 %v1109, %v1111
      %v1116 = vshll.u32 %v1113, 16
      %v1117 = vshrl.u32 %v1113, 16
      %v1118 = vshll.u32 %v1114, 16
      %v1119 = vshrl.u32 %v1114, 16
      %vm1120 = vc.u32 %v1112, %v1116
      %v1121 = vsel %vm1120, 1, 0
      %v1122 = vadd.s32 %v1112, %v1116
      %v1123 = vadd.s32 %v1115, %v1121
      %vm1124 = vc.u32 %v1122, %v1118
      %v1125 = vsel %vm1124, 1, 0
      %v1126 = vadd.s32 %v1122, %v1118
      %v1127 = vadd.s32 %v1123, %v1125
      %v1128 = vadd.s32 %v1127, %v1117
      %v1129 = vadd.s32 %v1128, %v1119
      %v1130 = vmul.u32 %v1085, %v1076
      %v1131 = vadd.s32 %v1107, %v1126
      %vm1132 = vc.u32 %v1107, %v1126
      %v1133 = vadd.s32 %v1129, 1
      %v1134 = vsel %vm1132, %v1133, %v1129
      %v1135 = vadd.s32 %v1130, %v1134
      %v1136 = vadd.s32 %v1135, 536870912
      %v1137 = vshrl.u32 %v1136, 30
      %v1138 = vshll.u32 %v1137, 30
      %v1139 = vsub.s32 %v1135, %v1138
      %vm1140 = vcmp.lt.s32.totalorder %v1139, 0
      %v1141 = vsub.s32 0, %v1139
      %v1142 = vsel %vm1140, %v1141, %v1139
      %v1143 = vclz %v1142
      %v1144 = vsub.s32 %v1143, 2
      %vm1145 = vcmp.gt.s32.totalorder 0, %v1144
      %v1146 = vsel %vm1145, 0, %v1144
      %v1147 = vsub.s32 32, %v1146
      %v1148 = vshll.u32 %v1139, %v1146
      %v1149 = vshrl.u32 %v1131, %v1147
      %v1150 = vor.u32 %v1148, %v1149
      %v1151 = vsub.s32 4294967266, %v1146
      %v1152 = vadd.s32 %v1151, 127
      %v1153 = vshll.u32 %v1152, 23
      %v1154 = vor.u32 4788187, %v1153
      %v1155 = vand.u32 2147483647, %v1154
      %v1157 = vcvt.s32.f32 %v1150
      %v1158 = vmul.f32 %v1157, %v1155
      %v1159 = vxor.u32 %v1158, 2147483648
      %v1160 = vsel %vm1039, %v1159, %v1158
      %v1161 = vsub.s32 4, %v1137
      %v1162 = vsel %vm1039, %v1161, %v1137
      %v1163 = vsel %vm1038, %v382, %v1160
      %v1164 = vsel %vm1038, 0, %v1162
      %v1165 = vmul.f32 %v1163, %v1163
      %v1166 = vmul.f32 %v1165, -0.001358992
      %v1167 = vadd.f32 %v1166, 0.041655596
      %v1168 = vmul.f32 %v1165, %v1167
      %v1169 = vadd.f32 %v1168, -0.4999988
      %v1170 = vmul.f32 %v1165, %v1169
      %v1171 = vadd.f32 1.0, %v1170
      %v1172 = vmul.f32 %v1163, %v1163
      %v1173 = vmul.f32 %v1172, -0.00019511016
      %v1174 = vadd.f32 %v1173, 0.008332121
      %v1175 = vmul.f32 %v1172, %v1174
      %v1176 = vadd.f32 %v1175, -0.16666654
      %v1177 = vmul.f32 %v1172, %v1176
      %v1178 = vadd.f32 %v1177, 1.0
      %v1179 = vmul.f32 %v1178, %v1163
      %vm1180 = vweird.f32 %v382
      %v1181 = vadd.s32 %v1164, 3
      %v1182 = vand.u32 %v1181, 3
      %vm1183 = vcmp.lt.s32.totalorder %v1182, 2
      %vm1184 = vcmp.eq.s32.totalorder %v1182, 0
      %v1185 = vxor.u32 %v1179, 2147483648
      %v1186 = vsel %vm1184, %v1171, %v1185
      %vm1187 = vcmp.eq.s32.totalorder %v1182, 2
      %v1188 = vxor.u32 %v1171, 2147483648
      %v1189 = vsel %vm1187, %v1188, %v1179
      %v1190 = vsel %vm1183, %v1186, %v1189
      %v1191 = vsel %vm1180, nan, %v1190
      %v1192 = vand.u32 2147483647, %v385
      %vm1193 = vcmp.le.f32.partialorder %v1192, 0.7853982
      %vm1194 = vcmp.lt.s32.totalorder %v385, 0
      %v1195 = vand.u32 %v385, 2139095040
      %v1196 = vshrl.u32 %v1195, 23
      %v1197 = vsub.s32 %v1196, 127
      %v1198 = vand.u32 2147483647, %v385
      %v1199 = vand.u32 %v1198, 8388607
      %v1200 = vor.u32 %v1199, 8388608
      %v1201 = vsub.s32 0, %v1200
      %v1202 = vadd.s32 %v1197, 1
      %vm1203 = vcmp.gt.s32.totalorder %v1202, 0
      %v1204 = vsel %vm1203, %v1202, 0
      %v1205 = vshrl.u32 %v1204, 5
      %v1206 = vand.u32 %v1204, 31
      %v1207 = vsub.s32 32, %v1206
      %v1208 = vshrl.u32 683565275, %v1207
      %v1209 = vshll.u32 683565275, %v1206
      %v1210 = vshrl.u32 2475754826, %v1207
      %v1211 = vor.u32 %v1209, %v1210
      %v1212 = vshll.u32 2475754826, %v1206
      %v1213 = vshrl.u32 2131351028, %v1207
      %v1214 = vor.u32 %v1212, %v1213
      %v1215 = vshll.u32 2131351028, %v1206
      %v1216 = vshrl.u32 2102212464, %v1207
      %v1217 = vor.u32 %v1215, %v1216
      %v1218 = vshll.u32 2102212464, %v1206
      %v1219 = vshrl.u32 920167782, %v1207
      %v1220 = vor.u32 %v1218, %v1219
      %v1221 = vshll.u32 920167782, %v1206
      %v1222 = vshrl.u32 1326507024, %v1207
      %v1223 = vor.u32 %v1221, %v1222
      %vm1224 = vcmp.lt.s32.totalorder %v1205, 1
      %vm1225 = vcmp.lt.s32.totalorder %v1205, 2
      %vm1226 = vcmp.lt.s32.totalorder %v1205, 3
      %vm1227 = vcmp.lt.s32.totalorder %v1205, 4
      %v1228 = vsel %vm1224, %v1208, %v1211
      %v1229 = vsel %vm1227, %v1217, 2102212464
      %v1230 = vsel %vm1226, %v1214, %v1229
      %v1231 = vsel %vm1225, %v1228, %v1230
      %v1232 = vsel %vm1224, %v1211, %v1214
      %v1233 = vsel %vm1227, %v1220, 920167782
      %v1234 = vsel %vm1226, %v1217, %v1233
      %v1235 = vsel %vm1225, %v1232, %v1234
      %v1236 = vsel %vm1224, %v1214, %v1217
      %v1237 = vsel %vm1227, %v1223, 1326507024
      %v1238 = vsel %vm1226, %v1220, %v1237
      %v1239 = vsel %vm1225, %v1236, %v1238
      %v1240 = vshll.u32 %v1200, 8
      %v1241 = vand.u32 %v1240, 65535
      %v1242 = vshrl.u32 %v1240, 16
      %v1243 = vand.u32 %v1239, 65535
      %v1244 = vshrl.u32 %v1239, 16
      %v1245 = vmul.u32 %v1241, %v1243
      %v1246 = vmul.u32 %v1241, %v1244
      %v1247 = vmul.u32 %v1242, %v1243
      %v1248 = vmul.u32 %v1242, %v1244
      %v1249 = vshll.u32 %v1246, 16
      %v1250 = vshrl.u32 %v1246, 16
      %v1251 = vshll.u32 %v1247, 16
      %v1252 = vshrl.u32 %v1247, 16
      %vm1253 = vc.u32 %v1245, %v1249
      %v1254 = vsel %vm1253, 1, 0
      %v1255 = vadd.s32 %v1245, %v1249
      %v1256 = vadd.s32 %v1248, %v1254
      %vm1257 = vc.u32 %v1255, %v1251
      %v1258 = vsel %vm1257, 1, 0
      %v1259 = vadd.s32 %v1255, %v1251
      %v1260 = vadd.s32 %v1256, %v1258
      %v1261 = vadd.s32 %v1260, %v1250
      %v1262 = vadd.s32 %v1261, %v1252
      %v1263 = vand.u32 %v1240, 65535
      %v1264 = vshrl.u32 %v1240, 16
      %v1265 = vand.u32 %v1235, 65535
      %v1266 = vshrl.u32 %v1235, 16
      %v1267 = vmul.u32 %v1263, %v1265
      %v1268 = vmul.u32 %v1263, %v1266
      %v1269 = vmul.u32 %v1264, %v1265
      %v1270 = vmul.u32 %v1264, %v1266
      %v1271 = vshll.u32 %v1268, 16
      %v1272 = vshrl.u32 %v1268, 16
      %v1273 = vshll.u32 %v1269, 16
      %v1274 = vshrl.u32 %v1269, 16
      %vm1275 = vc.u32 %v1267, %v1271
      %v1276 = vsel %vm1275, 1, 0
      %v1277 = vadd.s32 %v1267, %v1271
      %v1278 = vadd.s32 %v1270, %v1276
      %vm1279 = vc.u32 %v1277, %v1273
      %v1280 = vsel %vm1279, 1, 0
      %v1281 = vadd.s32 %v1277, %v1273
      %v1282 = vadd.s32 %v1278, %v1280
      %v1283 = vadd.s32 %v1282, %v1272
      %v1284 = vadd.s32 %v1283, %v1274
      %v1285 = vmul.u32 %v1240, %v1231
      %v1286 = vadd.s32 %v1262, %v1281
      %vm1287 = vc.u32 %v1262, %v1281
      %v1288 = vadd.s32 %v1284, 1
      %v1289 = vsel %vm1287, %v1288, %v1284
      %v1290 = vadd.s32 %v1285, %v1289
      %v1291 = vadd.s32 %v1290, 536870912
      %v1292 = vshrl.u32 %v1291, 30
      %v1293 = vshll.u32 %v1292, 30
      %v1294 = vsub.s32 %v1290, %v1293
      %vm1295 = vcmp.lt.s32.totalorder %v1294, 0
      %v1296 = vsub.s32 0, %v1294
      %v1297 = vsel %vm1295, %v1296, %v1294
      %v1298 = vclz %v1297
      %v1299 = vsub.s32 %v1298, 2
      %vm1300 = vcmp.gt.s32.totalorder 0, %v1299
      %v1301 = vsel %vm1300, 0, %v1299
      %v1302 = vsub.s32 32, %v1301
      %v1303 = vshll.u32 %v1294, %v1301
      %v1304 = vshrl.u32 %v1286, %v1302
      %v1305 = vor.u32 %v1303, %v1304
      %v1306 = vsub.s32 4294967266, %v1301
      %v1307 = vadd.s32 %v1306, 127
      %v1308 = vshll.u32 %v1307, 23
      %v1309 = vor.u32 4788187, %v1308
      %v1310 = vand.u32 2147483647, %v1309
      %v1312 = vcvt.s32.f32 %v1305
      %v1313 = vmul.f32 %v1312, %v1310
      %v1314 = vxor.u32 %v1313, 2147483648
      %v1315 = vsel %vm1194, %v1314, %v1313
      %v1316 = vsub.s32 4, %v1292
      %v1317 = vsel %vm1194, %v1316, %v1292
      %v1318 = vsel %vm1193, %v385, %v1315
      %v1319 = vsel %vm1193, 0, %v1317
      %v1320 = vmul.f32 %v1318, %v1318
      %v1321 = vmul.f32 %v1320, -0.001358992
      %v1322 = vadd.f32 %v1321, 0.041655596
      %v1323 = vmul.f32 %v1320, %v1322
      %v1324 = vadd.f32 %v1323, -0.4999988
      %v1325 = vmul.f32 %v1320, %v1324
      %v1326 = vadd.f32 1.0, %v1325
      %v1327 = vmul.f32 %v1318, %v1318
      %v1328 = vmul.f32 %v1327, -0.00019511016
      %v1329 = vadd.f32 %v1328, 0.008332121
      %v1330 = vmul.f32 %v1327, %v1329
      %v1331 = vadd.f32 %v1330, -0.16666654
      %v1332 = vmul.f32 %v1327, %v1331
      %v1333 = vadd.f32 %v1332, 1.0
      %v1334 = vmul.f32 %v1333, %v1318
      %vm1335 = vweird.f32 %v385
      %v1336 = vadd.s32 %v1319, 3
      %v1337 = vand.u32 %v1336, 3
      %vm1338 = vcmp.lt.s32.totalorder %v1337, 2
      %vm1339 = vcmp.eq.s32.totalorder %v1337, 0
      %v1340 = vxor.u32 %v1334, 2147483648
      %v1341 = vsel %vm1339, %v1326, %v1340
      %vm1342 = vcmp.eq.s32.totalorder %v1337, 2
      %v1343 = vxor.u32 %v1326, 2147483648
      %v1344 = vsel %vm1342, %v1343, %v1334
      %v1345 = vsel %vm1338, %v1341, %v1344
      %v1346 = vsel %vm1335, nan, %v1345
      %v1347 = vand.u32 2147483647, %v388
      %vm1348 = vcmp.le.f32.partialorder %v1347, 0.7853982
      %vm1349 = vcmp.lt.s32.totalorder %v388, 0
      %v1350 = vand.u32 %v388, 2139095040
      %v1351 = vshrl.u32 %v1350, 23
      %v1352 = vsub.s32 %v1351, 127
      %v1353 = vand.u32 2147483647, %v388
      %v1354 = vand.u32 %v1353, 8388607
      %v1355 = vor.u32 %v1354, 8388608
      %v1356 = vsub.s32 0, %v1355
      %v1357 = vadd.s32 %v1352, 1
      %vm1358 = vcmp.gt.s32.totalorder %v1357, 0
      %v1359 = vsel %vm1358, %v1357, 0
      %v1360 = vshrl.u32 %v1359, 5
      %v1361 = vand.u32 %v1359, 31
      %v1362 = vsub.s32 32, %v1361
      %v1363 = vshrl.u32 683565275, %v1362
      %v1364 = vshll.u32 683565275, %v1361
      %v1365 = vshrl.u32 2475754826, %v1362
      %v1366 = vor.u32 %v1364, %v1365
      %v1367 = vshll.u32 2475754826, %v1361
      %v1368 = vshrl.u32 2131351028, %v1362
      %v1369 = vor.u32 %v1367, %v1368
      %v1370 = vshll.u32 2131351028, %v1361
      %v1371 = vshrl.u32 2102212464, %v1362
      %v1372 = vor.u32 %v1370, %v1371
      %v1373 = vshll.u32 2102212464, %v1361
      %v1374 = vshrl.u32 920167782, %v1362
      %v1375 = vor.u32 %v1373, %v1374
      %v1376 = vshll.u32 920167782, %v1361
      %v1377 = vshrl.u32 1326507024, %v1362
      %v1378 = vor.u32 %v1376, %v1377
      %vm1379 = vcmp.lt.s32.totalorder %v1360, 1
      %vm1380 = vcmp.lt.s32.totalorder %v1360, 2
      %vm1381 = vcmp.lt.s32.totalorder %v1360, 3
      %vm1382 = vcmp.lt.s32.totalorder %v1360, 4
      %v1383 = vsel %vm1379, %v1363, %v1366
      %v1384 = vsel %vm1382, %v1372, 2102212464
      %v1385 = vsel %vm1381, %v1369, %v1384
      %v1386 = vsel %vm1380, %v1383, %v1385
      %v1387 = vsel %vm1379, %v1366, %v1369
      %v1388 = vsel %vm1382, %v1375, 920167782
      %v1389 = vsel %vm1381, %v1372, %v1388
      %v1390 = vsel %vm1380, %v1387, %v1389
      %v1391 = vsel %vm1379, %v1369, %v1372
      %v1392 = vsel %vm1382, %v1378, 1326507024
      %v1393 = vsel %vm1381, %v1375, %v1392
      %v1394 = vsel %vm1380, %v1391, %v1393
      %v1395 = vshll.u32 %v1355, 8
      %v1396 = vand.u32 %v1395, 65535
      %v1397 = vshrl.u32 %v1395, 16
      %v1398 = vand.u32 %v1394, 65535
      %v1399 = vshrl.u32 %v1394, 16
      %v1400 = vmul.u32 %v1396, %v1398
      %v1401 = vmul.u32 %v1396, %v1399
      %v1402 = vmul.u32 %v1397, %v1398
      %v1403 = vmul.u32 %v1397, %v1399
      %v1404 = vshll.u32 %v1401, 16
      %v1405 = vshrl.u32 %v1401, 16
      %v1406 = vshll.u32 %v1402, 16
      %v1407 = vshrl.u32 %v1402, 16
      %vm1408 = vc.u32 %v1400, %v1404
      %v1409 = vsel %vm1408, 1, 0
      %v1410 = vadd.s32 %v1400, %v1404
      %v1411 = vadd.s32 %v1403, %v1409
      %vm1412 = vc.u32 %v1410, %v1406
      %v1413 = vsel %vm1412, 1, 0
      %v1414 = vadd.s32 %v1410, %v1406
      %v1415 = vadd.s32 %v1411, %v1413
      %v1416 = vadd.s32 %v1415, %v1405
      %v1417 = vadd.s32 %v1416, %v1407
      %v1418 = vand.u32 %v1395, 65535
      %v1419 = vshrl.u32 %v1395, 16
      %v1420 = vand.u32 %v1390, 65535
      %v1421 = vshrl.u32 %v1390, 16
      %v1422 = vmul.u32 %v1418, %v1420
      %v1423 = vmul.u32 %v1418, %v1421
      %v1424 = vmul.u32 %v1419, %v1420
      %v1425 = vmul.u32 %v1419, %v1421
      %v1426 = vshll.u32 %v1423, 16
      %v1427 = vshrl.u32 %v1423, 16
      %v1428 = vshll.u32 %v1424, 16
      %v1429 = vshrl.u32 %v1424, 16
      %vm1430 = vc.u32 %v1422, %v1426
      %v1431 = vsel %vm1430, 1, 0
      %v1432 = vadd.s32 %v1422, %v1426
      %v1433 = vadd.s32 %v1425, %v1431
      %vm1434 = vc.u32 %v1432, %v1428
      %v1435 = vsel %vm1434, 1, 0
      %v1436 = vadd.s32 %v1432, %v1428
      %v1437 = vadd.s32 %v1433, %v1435
      %v1438 = vadd.s32 %v1437, %v1427
      %v1439 = vadd.s32 %v1438, %v1429
      %v1440 = vmul.u32 %v1395, %v1386
      %v1441 = vadd.s32 %v1417, %v1436
      %vm1442 = vc.u32 %v1417, %v1436
      %v1443 = vadd.s32 %v1439, 1
      %v1444 = vsel %vm1442, %v1443, %v1439
      %v1445 = vadd.s32 %v1440, %v1444
      %v1446 = vadd.s32 %v1445, 536870912
      %v1447 = vshrl.u32 %v1446, 30
      %v1448 = vshll.u32 %v1447, 30
      %v1449 = vsub.s32 %v1445, %v1448
      %vm1450 = vcmp.lt.s32.totalorder %v1449, 0
      %v1451 = vsub.s32 0, %v1449
      %v1452 = vsel %vm1450, %v1451, %v1449
      %v1453 = vclz %v1452
      %v1454 = vsub.s32 %v1453, 2
      %vm1455 = vcmp.gt.s32.totalorder 0, %v1454
      %v1456 = vsel %vm1455, 0, %v1454
      %v1457 = vsub.s32 32, %v1456
      %v1458 = vshll.u32 %v1449, %v1456
      %v1459 = vshrl.u32 %v1441, %v1457
      %v1460 = vor.u32 %v1458, %v1459
      %v1461 = vsub.s32 4294967266, %v1456
      %v1462 = vadd.s32 %v1461, 127
      %v1463 = vshll.u32 %v1462, 23
      %v1464 = vor.u32 4788187, %v1463
      %v1465 = vand.u32 2147483647, %v1464
      %v1467 = vcvt.s32.f32 %v1460
      %v1468 = vmul.f32 %v1467, %v1465
      %v1469 = vxor.u32 %v1468, 2147483648
      %v1470 = vsel %vm1349, %v1469, %v1468
      %v1471 = vsub.s32 4, %v1447
      %v1472 = vsel %vm1349, %v1471, %v1447
      %v1473 = vsel %vm1348, %v388, %v1470
      %v1474 = vsel %vm1348, 0, %v1472
      %v1475 = vmul.f32 %v1473, %v1473
      %v1476 = vmul.f32 %v1475, -0.001358992
      %v1477 = vadd.f32 %v1476, 0.041655596
      %v1478 = vmul.f32 %v1475, %v1477
      %v1479 = vadd.f32 %v1478, -0.4999988
      %v1480 = vmul.f32 %v1475, %v1479
      %v1481 = vadd.f32 1.0, %v1480
      %v1482 = vmul.f32 %v1473, %v1473
      %v1483 = vmul.f32 %v1482, -0.00019511016
      %v1484 = vadd.f32 %v1483, 0.008332121
      %v1485 = vmul.f32 %v1482, %v1484
      %v1486 = vadd.f32 %v1485, -0.16666654
      %v1487 = vmul.f32 %v1482, %v1486
      %v1488 = vadd.f32 %v1487, 1.0
      %v1489 = vmul.f32 %v1488, %v1473
      %vm1490 = vweird.f32 %v388
      %v1491 = vadd.s32 %v1474, 3
      %v1492 = vand.u32 %v1491, 3
      %vm1493 = vcmp.lt.s32.totalorder %v1492, 2
      %vm1494 = vcmp.eq.s32.totalorder %v1492, 0
      %v1495 = vxor.u32 %v1489, 2147483648
      %v1496 = vsel %vm1494, %v1481, %v1495
      %vm1497 = vcmp.eq.s32.totalorder %v1492, 2
      %v1498 = vxor.u32 %v1481, 2147483648
      %v1499 = vsel %vm1497, %v1498, %v1489
      %v1500 = vsel %vm1493, %v1496, %v1499
      %v1501 = vsel %vm1490, nan, %v1500
      %v1502 = vand.u32 2147483647, %v391
      %vm1503 = vcmp.le.f32.partialorder %v1502, 0.7853982
      %vm1504 = vcmp.lt.s32.totalorder %v391, 0
      %v1505 = vand.u32 %v391, 2139095040
      %v1506 = vshrl.u32 %v1505, 23
      %v1507 = vsub.s32 %v1506, 127
      %v1508 = vand.u32 2147483647, %v391
      %v1509 = vand.u32 %v1508, 8388607
      %v1510 = vor.u32 %v1509, 8388608
      %v1511 = vsub.s32 0, %v1510
      %v1512 = vadd.s32 %v1507, 1
      %vm1513 = vcmp.gt.s32.totalorder %v1512, 0
      %v1514 = vsel %vm1513, %v1512, 0
      %v1515 = vshrl.u32 %v1514, 5
      %v1516 = vand.u32 %v1514, 31
      %v1517 = vsub.s32 32, %v1516
      %v1518 = vshrl.u32 683565275, %v1517
      %v1519 = vshll.u32 683565275, %v1516
      %v1520 = vshrl.u32 2475754826, %v1517
      %v1521 = vor.u32 %v1519, %v1520
      %v1522 = vshll.u32 2475754826, %v1516
      %v1523 = vshrl.u32 2131351028, %v1517
      %v1524 = vor.u32 %v1522, %v1523
      %v1525 = vshll.u32 2131351028, %v1516
      %v1526 = vshrl.u32 2102212464, %v1517
      %v1527 = vor.u32 %v1525, %v1526
      %v1528 = vshll.u32 2102212464, %v1516
      %v1529 = vshrl.u32 920167782, %v1517
      %v1530 = vor.u32 %v1528, %v1529
      %v1531 = vshll.u32 920167782, %v1516
      %v1532 = vshrl.u32 1326507024, %v1517
      %v1533 = vor.u32 %v1531, %v1532
      %vm1534 = vcmp.lt.s32.totalorder %v1515, 1
      %vm1535 = vcmp.lt.s32.totalorder %v1515, 2
      %vm1536 = vcmp.lt.s32.totalorder %v1515, 3
      %vm1537 = vcmp.lt.s32.totalorder %v1515, 4
      %v1538 = vsel %vm1534, %v1518, %v1521
      %v1539 = vsel %vm1537, %v1527, 2102212464
      %v1540 = vsel %vm1536, %v1524, %v1539
      %v1541 = vsel %vm1535, %v1538, %v1540
      %v1542 = vsel %vm1534, %v1521, %v1524
      %v1543 = vsel %vm1537, %v1530, 920167782
      %v1544 = vsel %vm1536, %v1527, %v1543
      %v1545 = vsel %vm1535, %v1542, %v1544
      %v1546 = vsel %vm1534, %v1524, %v1527
      %v1547 = vsel %vm1537, %v1533, 1326507024
      %v1548 = vsel %vm1536, %v1530, %v1547
      %v1549 = vsel %vm1535, %v1546, %v1548
      %v1550 = vshll.u32 %v1510, 8
      %v1551 = vand.u32 %v1550, 65535
      %v1552 = vshrl.u32 %v1550, 16
      %v1553 = vand.u32 %v1549, 65535
      %v1554 = vshrl.u32 %v1549, 16
      %v1555 = vmul.u32 %v1551, %v1553
      %v1556 = vmul.u32 %v1551, %v1554
      %v1557 = vmul.u32 %v1552, %v1553
      %v1558 = vmul.u32 %v1552, %v1554
      %v1559 = vshll.u32 %v1556, 16
      %v1560 = vshrl.u32 %v1556, 16
      %v1561 = vshll.u32 %v1557, 16
      %v1562 = vshrl.u32 %v1557, 16
      %vm1563 = vc.u32 %v1555, %v1559
      %v1564 = vsel %vm1563, 1, 0
      %v1565 = vadd.s32 %v1555, %v1559
      %v1566 = vadd.s32 %v1558, %v1564
      %vm1567 = vc.u32 %v1565, %v1561
      %v1568 = vsel %vm1567, 1, 0
      %v1569 = vadd.s32 %v1565, %v1561
      %v1570 = vadd.s32 %v1566, %v1568
      %v1571 = vadd.s32 %v1570, %v1560
      %v1572 = vadd.s32 %v1571, %v1562
      %v1573 = vand.u32 %v1550, 65535
      %v1574 = vshrl.u32 %v1550, 16
      %v1575 = vand.u32 %v1545, 65535
      %v1576 = vshrl.u32 %v1545, 16
      %v1577 = vmul.u32 %v1573, %v1575
      %v1578 = vmul.u32 %v1573, %v1576
      %v1579 = vmul.u32 %v1574, %v1575
      %v1580 = vmul.u32 %v1574, %v1576
      %v1581 = vshll.u32 %v1578, 16
      %v1582 = vshrl.u32 %v1578, 16
      %v1583 = vshll.u32 %v1579, 16
      %v1584 = vshrl.u32 %v1579, 16
      %vm1585 = vc.u32 %v1577, %v1581
      %v1586 = vsel %vm1585, 1, 0
      %v1587 = vadd.s32 %v1577, %v1581
      %v1588 = vadd.s32 %v1580, %v1586
      %vm1589 = vc.u32 %v1587, %v1583
      %v1590 = vsel %vm1589, 1, 0
      %v1591 = vadd.s32 %v1587, %v1583
      %v1592 = vadd.s32 %v1588, %v1590
      %v1593 = vadd.s32 %v1592, %v1582
      %v1594 = vadd.s32 %v1593, %v1584
      %v1595 = vmul.u32 %v1550, %v1541
      %v1596 = vadd.s32 %v1572, %v1591
      %vm1597 = vc.u32 %v1572, %v1591
      %v1598 = vadd.s32 %v1594, 1
      %v1599 = vsel %vm1597, %v1598, %v1594
      %v1600 = vadd.s32 %v1595, %v1599
      %v1601 = vadd.s32 %v1600, 536870912
      %v1602 = vshrl.u32 %v1601, 30
      %v1603 = vshll.u32 %v1602, 30
      %v1604 = vsub.s32 %v1600, %v1603
      %vm1605 = vcmp.lt.s32.totalorder %v1604, 0
      %v1606 = vsub.s32 0, %v1604
      %v1607 = vsel %vm1605, %v1606, %v1604
      %v1608 = vclz %v1607
      %v1609 = vsub.s32 %v1608, 2
      %vm1610 = vcmp.gt.s32.totalorder 0, %v1609
      %v1611 = vsel %vm1610, 0, %v1609
      %v1612 = vsub.s32 32, %v1611
      %v1613 = vshll.u32 %v1604, %v1611
      %v1614 = vshrl.u32 %v1596, %v1612
      %v1615 = vor.u32 %v1613, %v1614
      %v1616 = vsub.s32 4294967266, %v1611
      %v1617 = vadd.s32 %v1616, 127
      %v1618 = vshll.u32 %v1617, 23
      %v1619 = vor.u32 4788187, %v1618
      %v1620 = vand.u32 2147483647, %v1619
      %v1622 = vcvt.s32.f32 %v1615
      %v1623 = vmul.f32 %v1622, %v1620
      %v1624 = vxor.u32 %v1623, 2147483648
      %v1625 = vsel %vm1504, %v1624, %v1623
      %v1626 = vsub.s32 4, %v1602
      %v1627 = vsel %vm1504, %v1626, %v1602
      %v1628 = vsel %vm1503, %v391, %v1625
      %v1629 = vsel %vm1503, 0, %v1627
      %v1630 = vmul.f32 %v1628, %v1628
      %v1631 = vmul.f32 %v1630, -0.001358992
      %v1632 = vadd.f32 %v1631, 0.041655596
      %v1633 = vmul.f32 %v1630, %v1632
      %v1634 = vadd.f32 %v1633, -0.4999988
      %v1635 = vmul.f32 %v1630, %v1634
      %v1636 = vadd.f32 1.0, %v1635
      %v1637 = vmul.f32 %v1628, %v1628
      %v1638 = vmul.f32 %v1637, -0.00019511016
      %v1639 = vadd.f32 %v1638, 0.008332121
      %v1640 = vmul.f32 %v1637, %v1639
      %v1641 = vadd.f32 %v1640, -0.16666654
      %v1642 = vmul.f32 %v1637, %v1641
      %v1643 = vadd.f32 %v1642, 1.0
      %v1644 = vmul.f32 %v1643, %v1628
      %vm1645 = vweird.f32 %v391
      %v1646 = vadd.s32 %v1629, 3
      %v1647 = vand.u32 %v1646, 3
      %vm1648 = vcmp.lt.s32.totalorder %v1647, 2
      %vm1649 = vcmp.eq.s32.totalorder %v1647, 0
      %v1650 = vxor.u32 %v1644, 2147483648
      %v1651 = vsel %vm1649, %v1636, %v1650
      %vm1652 = vcmp.eq.s32.totalorder %v1647, 2
      %v1653 = vxor.u32 %v1636, 2147483648
      %v1654 = vsel %vm1652, %v1653, %v1644
      %v1655 = vsel %vm1648, %v1651, %v1654
      %v1656 = vsel %vm1645, nan, %v1655
      %v1657 = vand.u32 2147483647, %v394
      %vm1658 = vcmp.le.f32.partialorder %v1657, 0.7853982
      %vm1659 = vcmp.lt.s32.totalorder %v394, 0
      %v1660 = vand.u32 %v394, 2139095040
      %v1661 = vshrl.u32 %v1660, 23
      %v1662 = vsub.s32 %v1661, 127
      %v1663 = vand.u32 2147483647, %v394
      %v1664 = vand.u32 %v1663, 8388607
      %v1665 = vor.u32 %v1664, 8388608
      %v1666 = vsub.s32 0, %v1665
      %v1667 = vadd.s32 %v1662, 1
      %vm1668 = vcmp.gt.s32.totalorder %v1667, 0
      %v1669 = vsel %vm1668, %v1667, 0
      %v1670 = vshrl.u32 %v1669, 5
      %v1671 = vand.u32 %v1669, 31
      %v1672 = vsub.s32 32, %v1671
      %v1673 = vshrl.u32 683565275, %v1672
      %v1674 = vshll.u32 683565275, %v1671
      %v1675 = vshrl.u32 2475754826, %v1672
      %v1676 = vor.u32 %v1674, %v1675
      %v1677 = vshll.u32 2475754826, %v1671
      %v1678 = vshrl.u32 2131351028, %v1672
      %v1679 = vor.u32 %v1677, %v1678
      %v1680 = vshll.u32 2131351028, %v1671
      %v1681 = vshrl.u32 2102212464, %v1672
      %v1682 = vor.u32 %v1680, %v1681
      %v1683 = vshll.u32 2102212464, %v1671
      %v1684 = vshrl.u32 920167782, %v1672
      %v1685 = vor.u32 %v1683, %v1684
      %v1686 = vshll.u32 920167782, %v1671
      %v1687 = vshrl.u32 1326507024, %v1672
      %v1688 = vor.u32 %v1686, %v1687
      %vm1689 = vcmp.lt.s32.totalorder %v1670, 1
      %vm1690 = vcmp.lt.s32.totalorder %v1670, 2
      %vm1691 = vcmp.lt.s32.totalorder %v1670, 3
      %vm1692 = vcmp.lt.s32.totalorder %v1670, 4
      %v1693 = vsel %vm1689, %v1673, %v1676
      %v1694 = vsel %vm1692, %v1682, 2102212464
      %v1695 = vsel %vm1691, %v1679, %v1694
      %v1696 = vsel %vm1690, %v1693, %v1695
      %v1697 = vsel %vm1689, %v1676, %v1679
      %v1698 = vsel %vm1692, %v1685, 920167782
      %v1699 = vsel %vm1691, %v1682, %v1698
      %v1700 = vsel %vm1690, %v1697, %v1699
      %v1701 = vsel %vm1689, %v1679, %v1682
      %v1702 = vsel %vm1692, %v1688, 1326507024
      %v1703 = vsel %vm1691, %v1685, %v1702
      %v1704 = vsel %vm1690, %v1701, %v1703
      %v1705 = vshll.u32 %v1665, 8
      %v1706 = vand.u32 %v1705, 65535
      %v1707 = vshrl.u32 %v1705, 16
      %v1708 = vand.u32 %v1704, 65535
      %v1709 = vshrl.u32 %v1704, 16
      %v1710 = vmul.u32 %v1706, %v1708
      %v1711 = vmul.u32 %v1706, %v1709
      %v1712 = vmul.u32 %v1707, %v1708
      %v1713 = vmul.u32 %v1707, %v1709
      %v1714 = vshll.u32 %v1711, 16
      %v1715 = vshrl.u32 %v1711, 16
      %v1716 = vshll.u32 %v1712, 16
      %v1717 = vshrl.u32 %v1712, 16
      %vm1718 = vc.u32 %v1710, %v1714
      %v1719 = vsel %vm1718, 1, 0
      %v1720 = vadd.s32 %v1710, %v1714
      %v1721 = vadd.s32 %v1713, %v1719
      %vm1722 = vc.u32 %v1720, %v1716
      %v1723 = vsel %vm1722, 1, 0
      %v1724 = vadd.s32 %v1720, %v1716
      %v1725 = vadd.s32 %v1721, %v1723
      %v1726 = vadd.s32 %v1725, %v1715
      %v1727 = vadd.s32 %v1726, %v1717
      %v1728 = vand.u32 %v1705, 65535
      %v1729 = vshrl.u32 %v1705, 16
      %v1730 = vand.u32 %v1700, 65535
      %v1731 = vshrl.u32 %v1700, 16
      %v1732 = vmul.u32 %v1728, %v1730
      %v1733 = vmul.u32 %v1728, %v1731
      %v1734 = vmul.u32 %v1729, %v1730
      %v1735 = vmul.u32 %v1729, %v1731
      %v1736 = vshll.u32 %v1733, 16
      %v1737 = vshrl.u32 %v1733, 16
      %v1738 = vshll.u32 %v1734, 16
      %v1739 = vshrl.u32 %v1734, 16
      %vm1740 = vc.u32 %v1732, %v1736
      %v1741 = vsel %vm1740, 1, 0
      %v1742 = vadd.s32 %v1732, %v1736
      %v1743 = vadd.s32 %v1735, %v1741
      %vm1744 = vc.u32 %v1742, %v1738
      %v1745 = vsel %vm1744, 1, 0
      %v1746 = vadd.s32 %v1742, %v1738
      %v1747 = vadd.s32 %v1743, %v1745
      %v1748 = vadd.s32 %v1747, %v1737
      %v1749 = vadd.s32 %v1748, %v1739
      %v1750 = vmul.u32 %v1705, %v1696
      %v1751 = vadd.s32 %v1727, %v1746
      %vm1752 = vc.u32 %v1727, %v1746
      %v1753 = vadd.s32 %v1749, 1
      %v1754 = vsel %vm1752, %v1753, %v1749
      %v1755 = vadd.s32 %v1750, %v1754
      %v1756 = vadd.s32 %v1755, 536870912
      %v1757 = vshrl.u32 %v1756, 30
      %v1758 = vshll.u32 %v1757, 30
      %v1759 = vsub.s32 %v1755, %v1758
      %vm1760 = vcmp.lt.s32.totalorder %v1759, 0
      %v1761 = vsub.s32 0, %v1759
      %v1762 = vsel %vm1760, %v1761, %v1759
      %v1763 = vclz %v1762
      %v1764 = vsub.s32 %v1763, 2
      %vm1765 = vcmp.gt.s32.totalorder 0, %v1764
      %v1766 = vsel %vm1765, 0, %v1764
      %v1767 = vsub.s32 32, %v1766
      %v1768 = vshll.u32 %v1759, %v1766
      %v1769 = vshrl.u32 %v1751, %v1767
      %v1770 = vor.u32 %v1768, %v1769
      %v1771 = vsub.s32 4294967266, %v1766
      %v1772 = vadd.s32 %v1771, 127
      %v1773 = vshll.u32 %v1772, 23
      %v1774 = vor.u32 4788187, %v1773
      %v1775 = vand.u32 2147483647, %v1774
      %v1777 = vcvt.s32.f32 %v1770
      %v1778 = vmul.f32 %v1777, %v1775
      %v1779 = vxor.u32 %v1778, 2147483648
      %v1780 = vsel %vm1659, %v1779, %v1778
      %v1781 = vsub.s32 4, %v1757
      %v1782 = vsel %vm1659, %v1781, %v1757
      %v1783 = vsel %vm1658, %v394, %v1780
      %v1784 = vsel %vm1658, 0, %v1782
      %v1785 = vmul.f32 %v1783, %v1783
      %v1786 = vmul.f32 %v1785, -0.001358992
      %v1787 = vadd.f32 %v1786, 0.041655596
      %v1788 = vmul.f32 %v1785, %v1787
      %v1789 = vadd.f32 %v1788, -0.4999988
      %v1790 = vmul.f32 %v1785, %v1789
      %v1791 = vadd.f32 1.0, %v1790
      %v1792 = vmul.f32 %v1783, %v1783
      %v1793 = vmul.f32 %v1792, -0.00019511016
      %v1794 = vadd.f32 %v1793, 0.008332121
      %v1795 = vmul.f32 %v1792, %v1794
      %v1796 = vadd.f32 %v1795, -0.16666654
      %v1797 = vmul.f32 %v1792, %v1796
      %v1798 = vadd.f32 %v1797, 1.0
      %v1799 = vmul.f32 %v1798, %v1783
      %vm1800 = vweird.f32 %v394
      %v1801 = vadd.s32 %v1784, 3
      %v1802 = vand.u32 %v1801, 3
      %vm1803 = vcmp.lt.s32.totalorder %v1802, 2
      %vm1804 = vcmp.eq.s32.totalorder %v1802, 0
      %v1805 = vxor.u32 %v1799, 2147483648
      %v1806 = vsel %vm1804, %v1791, %v1805
      %vm1807 = vcmp.eq.s32.totalorder %v1802, 2
      %v1808 = vxor.u32 %v1791, 2147483648
      %v1809 = vsel %vm1807, %v1808, %v1799
      %v1810 = vsel %vm1803, %v1806, %v1809
      %v1811 = vsel %vm1800, nan, %v1810
      %v1812 = vand.u32 2147483647, %v397
      %vm1813 = vcmp.le.f32.partialorder %v1812, 0.7853982
      %vm1814 = vcmp.lt.s32.totalorder %v397, 0
      %v1815 = vand.u32 %v397, 2139095040
      %v1816 = vshrl.u32 %v1815, 23
      %v1817 = vsub.s32 %v1816, 127
      %v1818 = vand.u32 2147483647, %v397
      %v1819 = vand.u32 %v1818, 8388607
      %v1820 = vor.u32 %v1819, 8388608
      %v1821 = vsub.s32 0, %v1820
      %v1822 = vadd.s32 %v1817, 1
      %vm1823 = vcmp.gt.s32.totalorder %v1822, 0
      %v1824 = vsel %vm1823, %v1822, 0
      %v1825 = vshrl.u32 %v1824, 5
      %v1826 = vand.u32 %v1824, 31
      %v1827 = vsub.s32 32, %v1826
      %v1828 = vshrl.u32 683565275, %v1827
      %v1829 = vshll.u32 683565275, %v1826
      %v1830 = vshrl.u32 2475754826, %v1827
      %v1831 = vor.u32 %v1829, %v1830
      %v1832 = vshll.u32 2475754826, %v1826
      %v1833 = vshrl.u32 2131351028, %v1827
      %v1834 = vor.u32 %v1832, %v1833
      %v1835 = vshll.u32 2131351028, %v1826
      %v1836 = vshrl.u32 2102212464, %v1827
      %v1837 = vor.u32 %v1835, %v1836
      %v1838 = vshll.u32 2102212464, %v1826
      %v1839 = vshrl.u32 920167782, %v1827
      %v1840 = vor.u32 %v1838, %v1839
      %v1841 = vshll.u32 920167782, %v1826
      %v1842 = vshrl.u32 1326507024, %v1827
      %v1843 = vor.u32 %v1841, %v1842
      %vm1844 = vcmp.lt.s32.totalorder %v1825, 1
      %vm1845 = vcmp.lt.s32.totalorder %v1825, 2
      %vm1846 = vcmp.lt.s32.totalorder %v1825, 3
      %vm1847 = vcmp.lt.s32.totalorder %v1825, 4
      %v1848 = vsel %vm1844, %v1828, %v1831
      %v1849 = vsel %vm1847, %v1837, 2102212464
      %v1850 = vsel %vm1846, %v1834, %v1849
      %v1851 = vsel %vm1845, %v1848, %v1850
      %v1852 = vsel %vm1844, %v1831, %v1834
      %v1853 = vsel %vm1847, %v1840, 920167782
      %v1854 = vsel %vm1846, %v1837, %v1853
      %v1855 = vsel %vm1845, %v1852, %v1854
      %v1856 = vsel %vm1844, %v1834, %v1837
      %v1857 = vsel %vm1847, %v1843, 1326507024
      %v1858 = vsel %vm1846, %v1840, %v1857
      %v1859 = vsel %vm1845, %v1856, %v1858
      %v1860 = vshll.u32 %v1820, 8
      %v1861 = vand.u32 %v1860, 65535
      %v1862 = vshrl.u32 %v1860, 16
      %v1863 = vand.u32 %v1859, 65535
      %v1864 = vshrl.u32 %v1859, 16
      %v1865 = vmul.u32 %v1861, %v1863
      %v1866 = vmul.u32 %v1861, %v1864
      %v1867 = vmul.u32 %v1862, %v1863
      %v1868 = vmul.u32 %v1862, %v1864
      %v1869 = vshll.u32 %v1866, 16
      %v1870 = vshrl.u32 %v1866, 16
      %v1871 = vshll.u32 %v1867, 16
      %v1872 = vshrl.u32 %v1867, 16
      %vm1873 = vc.u32 %v1865, %v1869
      %v1874 = vsel %vm1873, 1, 0
      %v1875 = vadd.s32 %v1865, %v1869
      %v1876 = vadd.s32 %v1868, %v1874
      %vm1877 = vc.u32 %v1875, %v1871
      %v1878 = vsel %vm1877, 1, 0
      %v1879 = vadd.s32 %v1875, %v1871
      %v1880 = vadd.s32 %v1876, %v1878
      %v1881 = vadd.s32 %v1880, %v1870
      %v1882 = vadd.s32 %v1881, %v1872
      %v1883 = vand.u32 %v1860, 65535
      %v1884 = vshrl.u32 %v1860, 16
      %v1885 = vand.u32 %v1855, 65535
      %v1886 = vshrl.u32 %v1855, 16
      %v1887 = vmul.u32 %v1883, %v1885
      %v1888 = vmul.u32 %v1883, %v1886
      %v1889 = vmul.u32 %v1884, %v1885
      %v1890 = vmul.u32 %v1884, %v1886
      %v1891 = vshll.u32 %v1888, 16
      %v1892 = vshrl.u32 %v1888, 16
      %v1893 = vshll.u32 %v1889, 16
      %v1894 = vshrl.u32 %v1889, 16
      %vm1895 = vc.u32 %v1887, %v1891
      %v1896 = vsel %vm1895, 1, 0
      %v1897 = vadd.s32 %v1887, %v1891
      %v1898 = vadd.s32 %v1890, %v1896
      %vm1899 = vc.u32 %v1897, %v1893
      %v1900 = vsel %vm1899, 1, 0
      %v1901 = vadd.s32 %v1897, %v1893
      %v1902 = vadd.s32 %v1898, %v1900
      %v1903 = vadd.s32 %v1902, %v1892
      %v1904 = vadd.s32 %v1903, %v1894
      %v1905 = vmul.u32 %v1860, %v1851
      %v1906 = vadd.s32 %v1882, %v1901
      %vm1907 = vc.u32 %v1882, %v1901
      %v1908 = vadd.s32 %v1904, 1
      %v1909 = vsel %vm1907, %v1908, %v1904
      %v1910 = vadd.s32 %v1905, %v1909
      %v1911 = vadd.s32 %v1910, 536870912
      %v1912 = vshrl.u32 %v1911, 30
      %v1913 = vshll.u32 %v1912, 30
      %v1914 = vsub.s32 %v1910, %v1913
      %vm1915 = vcmp.lt.s32.totalorder %v1914, 0
      %v1916 = vsub.s32 0, %v1914
      %v1917 = vsel %vm1915, %v1916, %v1914
      %v1918 = vclz %v1917
      %v1919 = vsub.s32 %v1918, 2
      %vm1920 = vcmp.gt.s32.totalorder 0, %v1919
      %v1921 = vsel %vm1920, 0, %v1919
      %v1922 = vsub.s32 32, %v1921
      %v1923 = vshll.u32 %v1914, %v1921
      %v1924 = vshrl.u32 %v1906, %v1922
      %v1925 = vor.u32 %v1923, %v1924
      %v1926 = vsub.s32 4294967266, %v1921
      %v1927 = vadd.s32 %v1926, 127
      %v1928 = vshll.u32 %v1927, 23
      %v1929 = vor.u32 4788187, %v1928
      %v1930 = vand.u32 2147483647, %v1929
      %v1932 = vcvt.s32.f32 %v1925
      %v1933 = vmul.f32 %v1932, %v1930
      %v1934 = vxor.u32 %v1933, 2147483648
      %v1935 = vsel %vm1814, %v1934, %v1933
      %v1936 = vsub.s32 4, %v1912
      %v1937 = vsel %vm1814, %v1936, %v1912
      %v1938 = vsel %vm1813, %v397, %v1935
      %v1939 = vsel %vm1813, 0, %v1937
      %v1940 = vmul.f32 %v1938, %v1938
      %v1941 = vmul.f32 %v1940, -0.001358992
      %v1942 = vadd.f32 %v1941, 0.041655596
      %v1943 = vmul.f32 %v1940, %v1942
      %v1944 = vadd.f32 %v1943, -0.4999988
      %v1945 = vmul.f32 %v1940, %v1944
      %v1946 = vadd.f32 1.0, %v1945
      %v1947 = vmul.f32 %v1938, %v1938
      %v1948 = vmul.f32 %v1947, -0.00019511016
      %v1949 = vadd.f32 %v1948, 0.008332121
      %v1950 = vmul.f32 %v1947, %v1949
      %v1951 = vadd.f32 %v1950, -0.16666654
      %v1952 = vmul.f32 %v1947, %v1951
      %v1953 = vadd.f32 %v1952, 1.0
      %v1954 = vmul.f32 %v1953, %v1938
      %vm1955 = vweird.f32 %v397
      %v1956 = vadd.s32 %v1939, 3
      %v1957 = vand.u32 %v1956, 3
      %vm1958 = vcmp.lt.s32.totalorder %v1957, 2
      %vm1959 = vcmp.eq.s32.totalorder %v1957, 0
      %v1960 = vxor.u32 %v1954, 2147483648
      %v1961 = vsel %vm1959, %v1946, %v1960
      %vm1962 = vcmp.eq.s32.totalorder %v1957, 2
      %v1963 = vxor.u32 %v1946, 2147483648
      %v1964 = vsel %vm1962, %v1963, %v1954
      %v1965 = vsel %vm1958, %v1961, %v1964
      %v1966 = vsel %vm1955, nan, %v1965
      %v1967 = vand.u32 2147483647, %v400
      %vm1968 = vcmp.le.f32.partialorder %v1967, 0.7853982
      %vm1969 = vcmp.lt.s32.totalorder %v400, 0
      %v1970 = vand.u32 %v400, 2139095040
      %v1971 = vshrl.u32 %v1970, 23
      %v1972 = vsub.s32 %v1971, 127
      %v1973 = vand.u32 2147483647, %v400
      %v1974 = vand.u32 %v1973, 8388607
      %v1975 = vor.u32 %v1974, 8388608
      %v1976 = vsub.s32 0, %v1975
      %v1977 = vadd.s32 %v1972, 1
      %vm1978 = vcmp.gt.s32.totalorder %v1977, 0
      %v1979 = vsel %vm1978, %v1977, 0
      %v1980 = vshrl.u32 %v1979, 5
      %v1981 = vand.u32 %v1979, 31
      %v1982 = vsub.s32 32, %v1981
      %v1983 = vshrl.u32 683565275, %v1982
      %v1984 = vshll.u32 683565275, %v1981
      %v1985 = vshrl.u32 2475754826, %v1982
      %v1986 = vor.u32 %v1984, %v1985
      %v1987 = vshll.u32 2475754826, %v1981
      %v1988 = vshrl.u32 2131351028, %v1982
      %v1989 = vor.u32 %v1987, %v1988
      %v1990 = vshll.u32 2131351028, %v1981
      %v1991 = vshrl.u32 2102212464, %v1982
      %v1992 = vor.u32 %v1990, %v1991
      %v1993 = vshll.u32 2102212464, %v1981
      %v1994 = vshrl.u32 920167782, %v1982
      %v1995 = vor.u32 %v1993, %v1994
      %v1996 = vshll.u32 920167782, %v1981
      %v1997 = vshrl.u32 1326507024, %v1982
      %v1998 = vor.u32 %v1996, %v1997
      %vm1999 = vcmp.lt.s32.totalorder %v1980, 1
      %vm2000 = vcmp.lt.s32.totalorder %v1980, 2
      %vm2001 = vcmp.lt.s32.totalorder %v1980, 3
      %vm2002 = vcmp.lt.s32.totalorder %v1980, 4
      %v2003 = vsel %vm1999, %v1983, %v1986
      %v2004 = vsel %vm2002, %v1992, 2102212464
      %v2005 = vsel %vm2001, %v1989, %v2004
      %v2006 = vsel %vm2000, %v2003, %v2005
      %v2007 = vsel %vm1999, %v1986, %v1989
      %v2008 = vsel %vm2002, %v1995, 920167782
      %v2009 = vsel %vm2001, %v1992, %v2008
      %v2010 = vsel %vm2000, %v2007, %v2009
      %v2011 = vsel %vm1999, %v1989, %v1992
      %v2012 = vsel %vm2002, %v1998, 1326507024
      %v2013 = vsel %vm2001, %v1995, %v2012
      %v2014 = vsel %vm2000, %v2011, %v2013
      %v2015 = vshll.u32 %v1975, 8
      %v2016 = vand.u32 %v2015, 65535
      %v2017 = vshrl.u32 %v2015, 16
      %v2018 = vand.u32 %v2014, 65535
      %v2019 = vshrl.u32 %v2014, 16
      %v2020 = vmul.u32 %v2016, %v2018
      %v2021 = vmul.u32 %v2016, %v2019
      %v2022 = vmul.u32 %v2017, %v2018
      %v2023 = vmul.u32 %v2017, %v2019
      %v2024 = vshll.u32 %v2021, 16
      %v2025 = vshrl.u32 %v2021, 16
      %v2026 = vshll.u32 %v2022, 16
      %v2027 = vshrl.u32 %v2022, 16
      %vm2028 = vc.u32 %v2020, %v2024
      %v2029 = vsel %vm2028, 1, 0
      %v2030 = vadd.s32 %v2020, %v2024
      %v2031 = vadd.s32 %v2023, %v2029
      %vm2032 = vc.u32 %v2030, %v2026
      %v2033 = vsel %vm2032, 1, 0
      %v2034 = vadd.s32 %v2030, %v2026
      %v2035 = vadd.s32 %v2031, %v2033
      %v2036 = vadd.s32 %v2035, %v2025
      %v2037 = vadd.s32 %v2036, %v2027
      %v2038 = vand.u32 %v2015, 65535
      %v2039 = vshrl.u32 %v2015, 16
      %v2040 = vand.u32 %v2010, 65535
      %v2041 = vshrl.u32 %v2010, 16
      %v2042 = vmul.u32 %v2038, %v2040
      %v2043 = vmul.u32 %v2038, %v2041
      %v2044 = vmul.u32 %v2039, %v2040
      %v2045 = vmul.u32 %v2039, %v2041
      %v2046 = vshll.u32 %v2043, 16
      %v2047 = vshrl.u32 %v2043, 16
      %v2048 = vshll.u32 %v2044, 16
      %v2049 = vshrl.u32 %v2044, 16
      %vm2050 = vc.u32 %v2042, %v2046
      %v2051 = vsel %vm2050, 1, 0
      %v2052 = vadd.s32 %v2042, %v2046
      %v2053 = vadd.s32 %v2045, %v2051
      %vm2054 = vc.u32 %v2052, %v2048
      %v2055 = vsel %vm2054, 1, 0
      %v2056 = vadd.s32 %v2052, %v2048
      %v2057 = vadd.s32 %v2053, %v2055
      %v2058 = vadd.s32 %v2057, %v2047
      %v2059 = vadd.s32 %v2058, %v2049
      %v2060 = vmul.u32 %v2015, %v2006
      %v2061 = vadd.s32 %v2037, %v2056
      %vm2062 = vc.u32 %v2037, %v2056
      %v2063 = vadd.s32 %v2059, 1
      %v2064 = vsel %vm2062, %v2063, %v2059
      %v2065 = vadd.s32 %v2060, %v2064
      %v2066 = vadd.s32 %v2065, 536870912
      %v2067 = vshrl.u32 %v2066, 30
      %v2068 = vshll.u32 %v2067, 30
      %v2069 = vsub.s32 %v2065, %v2068
      %vm2070 = vcmp.lt.s32.totalorder %v2069, 0
      %v2071 = vsub.s32 0, %v2069
      %v2072 = vsel %vm2070, %v2071, %v2069
      %v2073 = vclz %v2072
      %v2074 = vsub.s32 %v2073, 2
      %vm2075 = vcmp.gt.s32.totalorder 0, %v2074
      %v2076 = vsel %vm2075, 0, %v2074
      %v2077 = vsub.s32 32, %v2076
      %v2078 = vshll.u32 %v2069, %v2076
      %v2079 = vshrl.u32 %v2061, %v2077
      %v2080 = vor.u32 %v2078, %v2079
      %v2081 = vsub.s32 4294967266, %v2076
      %v2082 = vadd.s32 %v2081, 127
      %v2083 = vshll.u32 %v2082, 23
      %v2084 = vor.u32 4788187, %v2083
      %v2085 = vand.u32 2147483647, %v2084
      %v2087 = vcvt.s32.f32 %v2080
      %v2088 = vmul.f32 %v2087, %v2085
      %v2089 = vxor.u32 %v2088, 2147483648
      %v2090 = vsel %vm1969, %v2089, %v2088
      %v2091 = vsub.s32 4, %v2067
      %v2092 = vsel %vm1969, %v2091, %v2067
      %v2093 = vsel %vm1968, %v400, %v2090
      %v2094 = vsel %vm1968, 0, %v2092
      %v2095 = vmul.f32 %v2093, %v2093
      %v2096 = vmul.f32 %v2095, -0.001358992
      %v2097 = vadd.f32 %v2096, 0.041655596
      %v2098 = vmul.f32 %v2095, %v2097
      %v2099 = vadd.f32 %v2098, -0.4999988
      %v2100 = vmul.f32 %v2095, %v2099
      %v2101 = vadd.f32 1.0, %v2100
      %v2102 = vmul.f32 %v2093, %v2093
      %v2103 = vmul.f32 %v2102, -0.00019511016
      %v2104 = vadd.f32 %v2103, 0.008332121
      %v2105 = vmul.f32 %v2102, %v2104
      %v2106 = vadd.f32 %v2105, -0.16666654
      %v2107 = vmul.f32 %v2102, %v2106
      %v2108 = vadd.f32 %v2107, 1.0
      %v2109 = vmul.f32 %v2108, %v2093
      %vm2110 = vweird.f32 %v400
      %v2111 = vadd.s32 %v2094, 3
      %v2112 = vand.u32 %v2111, 3
      %vm2113 = vcmp.lt.s32.totalorder %v2112, 2
      %vm2114 = vcmp.eq.s32.totalorder %v2112, 0
      %v2115 = vxor.u32 %v2109, 2147483648
      %v2116 = vsel %vm2114, %v2101, %v2115
      %vm2117 = vcmp.eq.s32.totalorder %v2112, 2
      %v2118 = vxor.u32 %v2101, 2147483648
      %v2119 = vsel %vm2117, %v2118, %v2109
      %v2120 = vsel %vm2113, %v2116, %v2119
      %v2121 = vsel %vm2110, nan, %v2120
      %v2122 = vand.u32 2147483647, %v403
      %vm2123 = vcmp.le.f32.partialorder %v2122, 0.7853982
      %vm2124 = vcmp.lt.s32.totalorder %v403, 0
      %v2125 = vand.u32 %v403, 2139095040
      %v2126 = vshrl.u32 %v2125, 23
      %v2127 = vsub.s32 %v2126, 127
      %v2128 = vand.u32 2147483647, %v403
      %v2129 = vand.u32 %v2128, 8388607
      %v2130 = vor.u32 %v2129, 8388608
      %v2131 = vsub.s32 0, %v2130
      %v2132 = vadd.s32 %v2127, 1
      %vm2133 = vcmp.gt.s32.totalorder %v2132, 0
      %v2134 = vsel %vm2133, %v2132, 0
      %v2135 = vshrl.u32 %v2134, 5
      %v2136 = vand.u32 %v2134, 31
      %v2137 = vsub.s32 32, %v2136
      %v2138 = vshrl.u32 683565275, %v2137
      %v2139 = vshll.u32 683565275, %v2136
      %v2140 = vshrl.u32 2475754826, %v2137
      %v2141 = vor.u32 %v2139, %v2140
      %v2142 = vshll.u32 2475754826, %v2136
      %v2143 = vshrl.u32 2131351028, %v2137
      %v2144 = vor.u32 %v2142, %v2143
      %v2145 = vshll.u32 2131351028, %v2136
      %v2146 = vshrl.u32 2102212464, %v2137
      %v2147 = vor.u32 %v2145, %v2146
      %v2148 = vshll.u32 2102212464, %v2136
      %v2149 = vshrl.u32 920167782, %v2137
      %v2150 = vor.u32 %v2148, %v2149
      %v2151 = vshll.u32 920167782, %v2136
      %v2152 = vshrl.u32 1326507024, %v2137
      %v2153 = vor.u32 %v2151, %v2152
      %vm2154 = vcmp.lt.s32.totalorder %v2135, 1
      %vm2155 = vcmp.lt.s32.totalorder %v2135, 2
      %vm2156 = vcmp.lt.s32.totalorder %v2135, 3
      %vm2157 = vcmp.lt.s32.totalorder %v2135, 4
      %v2158 = vsel %vm2154, %v2138, %v2141
      %v2159 = vsel %vm2157, %v2147, 2102212464
      %v2160 = vsel %vm2156, %v2144, %v2159
      %v2161 = vsel %vm2155, %v2158, %v2160
      %v2162 = vsel %vm2154, %v2141, %v2144
      %v2163 = vsel %vm2157, %v2150, 920167782
      %v2164 = vsel %vm2156, %v2147, %v2163
      %v2165 = vsel %vm2155, %v2162, %v2164
      %v2166 = vsel %vm2154, %v2144, %v2147
      %v2167 = vsel %vm2157, %v2153, 1326507024
      %v2168 = vsel %vm2156, %v2150, %v2167
      %v2169 = vsel %vm2155, %v2166, %v2168
      %v2170 = vshll.u32 %v2130, 8
      %v2171 = vand.u32 %v2170, 65535
      %v2172 = vshrl.u32 %v2170, 16
      %v2173 = vand.u32 %v2169, 65535
      %v2174 = vshrl.u32 %v2169, 16
      %v2175 = vmul.u32 %v2171, %v2173
      %v2176 = vmul.u32 %v2171, %v2174
      %v2177 = vmul.u32 %v2172, %v2173
      %v2178 = vmul.u32 %v2172, %v2174
      %v2179 = vshll.u32 %v2176, 16
      %v2180 = vshrl.u32 %v2176, 16
      %v2181 = vshll.u32 %v2177, 16
      %v2182 = vshrl.u32 %v2177, 16
      %vm2183 = vc.u32 %v2175, %v2179
      %v2184 = vsel %vm2183, 1, 0
      %v2185 = vadd.s32 %v2175, %v2179
      %v2186 = vadd.s32 %v2178, %v2184
      %vm2187 = vc.u32 %v2185, %v2181
      %v2188 = vsel %vm2187, 1, 0
      %v2189 = vadd.s32 %v2185, %v2181
      %v2190 = vadd.s32 %v2186, %v2188
      %v2191 = vadd.s32 %v2190, %v2180
      %v2192 = vadd.s32 %v2191, %v2182
      %v2193 = vand.u32 %v2170, 65535
      %v2194 = vshrl.u32 %v2170, 16
      %v2195 = vand.u32 %v2165, 65535
      %v2196 = vshrl.u32 %v2165, 16
      %v2197 = vmul.u32 %v2193, %v2195
      %v2198 = vmul.u32 %v2193, %v2196
      %v2199 = vmul.u32 %v2194, %v2195
      %v2200 = vmul.u32 %v2194, %v2196
      %v2201 = vshll.u32 %v2198, 16
      %v2202 = vshrl.u32 %v2198, 16
      %v2203 = vshll.u32 %v2199, 16
      %v2204 = vshrl.u32 %v2199, 16
      %vm2205 = vc.u32 %v2197, %v2201
      %v2206 = vsel %vm2205, 1, 0
      %v2207 = vadd.s32 %v2197, %v2201
      %v2208 = vadd.s32 %v2200, %v2206
      %vm2209 = vc.u32 %v2207, %v2203
      %v2210 = vsel %vm2209, 1, 0
      %v2211 = vadd.s32 %v2207, %v2203
      %v2212 = vadd.s32 %v2208, %v2210
      %v2213 = vadd.s32 %v2212, %v2202
      %v2214 = vadd.s32 %v2213, %v2204
      %v2215 = vmul.u32 %v2170, %v2161
      %v2216 = vadd.s32 %v2192, %v2211
      %vm2217 = vc.u32 %v2192, %v2211
      %v2218 = vadd.s32 %v2214, 1
      %v2219 = vsel %vm2217, %v2218, %v2214
      %v2220 = vadd.s32 %v2215, %v2219
      %v2221 = vadd.s32 %v2220, 536870912
      %v2222 = vshrl.u32 %v2221, 30
      %v2223 = vshll.u32 %v2222, 30
      %v2224 = vsub.s32 %v2220, %v2223
      %vm2225 = vcmp.lt.s32.totalorder %v2224, 0
      %v2226 = vsub.s32 0, %v2224
      %v2227 = vsel %vm2225, %v2226, %v2224
      %v2228 = vclz %v2227
      %v2229 = vsub.s32 %v2228, 2
      %vm2230 = vcmp.gt.s32.totalorder 0, %v2229
      %v2231 = vsel %vm2230, 0, %v2229
      %v2232 = vsub.s32 32, %v2231
      %v2233 = vshll.u32 %v2224, %v2231
      %v2234 = vshrl.u32 %v2216, %v2232
      %v2235 = vor.u32 %v2233, %v2234
      %v2236 = vsub.s32 4294967266, %v2231
      %v2237 = vadd.s32 %v2236, 127
      %v2238 = vshll.u32 %v2237, 23
      %v2239 = vor.u32 4788187, %v2238
      %v2240 = vand.u32 2147483647, %v2239
      %v2242 = vcvt.s32.f32 %v2235
      %v2243 = vmul.f32 %v2242, %v2240
      %v2244 = vxor.u32 %v2243, 2147483648
      %v2245 = vsel %vm2124, %v2244, %v2243
      %v2246 = vsub.s32 4, %v2222
      %v2247 = vsel %vm2124, %v2246, %v2222
      %v2248 = vsel %vm2123, %v403, %v2245
      %v2249 = vsel %vm2123, 0, %v2247
      %v2250 = vmul.f32 %v2248, %v2248
      %v2251 = vmul.f32 %v2250, -0.001358992
      %v2252 = vadd.f32 %v2251, 0.041655596
      %v2253 = vmul.f32 %v2250, %v2252
      %v2254 = vadd.f32 %v2253, -0.4999988
      %v2255 = vmul.f32 %v2250, %v2254
      %v2256 = vadd.f32 1.0, %v2255
      %v2257 = vmul.f32 %v2248, %v2248
      %v2258 = vmul.f32 %v2257, -0.00019511016
      %v2259 = vadd.f32 %v2258, 0.008332121
      %v2260 = vmul.f32 %v2257, %v2259
      %v2261 = vadd.f32 %v2260, -0.16666654
      %v2262 = vmul.f32 %v2257, %v2261
      %v2263 = vadd.f32 %v2262, 1.0
      %v2264 = vmul.f32 %v2263, %v2248
      %vm2265 = vweird.f32 %v403
      %v2266 = vadd.s32 %v2249, 3
      %v2267 = vand.u32 %v2266, 3
      %vm2268 = vcmp.lt.s32.totalorder %v2267, 2
      %vm2269 = vcmp.eq.s32.totalorder %v2267, 0
      %v2270 = vxor.u32 %v2264, 2147483648
      %v2271 = vsel %vm2269, %v2256, %v2270
      %vm2272 = vcmp.eq.s32.totalorder %v2267, 2
      %v2273 = vxor.u32 %v2256, 2147483648
      %v2274 = vsel %vm2272, %v2273, %v2264
      %v2275 = vsel %vm2268, %v2271, %v2274
      %v2276 = vsel %vm2265, nan, %v2275
      %v2277 = vand.u32 2147483647, %v406
      %vm2278 = vcmp.le.f32.partialorder %v2277, 0.7853982
      %vm2279 = vcmp.lt.s32.totalorder %v406, 0
      %v2280 = vand.u32 %v406, 2139095040
      %v2281 = vshrl.u32 %v2280, 23
      %v2282 = vsub.s32 %v2281, 127
      %v2283 = vand.u32 2147483647, %v406
      %v2284 = vand.u32 %v2283, 8388607
      %v2285 = vor.u32 %v2284, 8388608
      %v2286 = vsub.s32 0, %v2285
      %v2287 = vadd.s32 %v2282, 1
      %vm2288 = vcmp.gt.s32.totalorder %v2287, 0
      %v2289 = vsel %vm2288, %v2287, 0
      %v2290 = vshrl.u32 %v2289, 5
      %v2291 = vand.u32 %v2289, 31
      %v2292 = vsub.s32 32, %v2291
      %v2293 = vshrl.u32 683565275, %v2292
      %v2294 = vshll.u32 683565275, %v2291
      %v2295 = vshrl.u32 2475754826, %v2292
      %v2296 = vor.u32 %v2294, %v2295
      %v2297 = vshll.u32 2475754826, %v2291
      %v2298 = vshrl.u32 2131351028, %v2292
      %v2299 = vor.u32 %v2297, %v2298
      %v2300 = vshll.u32 2131351028, %v2291
      %v2301 = vshrl.u32 2102212464, %v2292
      %v2302 = vor.u32 %v2300, %v2301
      %v2303 = vshll.u32 2102212464, %v2291
      %v2304 = vshrl.u32 920167782, %v2292
      %v2305 = vor.u32 %v2303, %v2304
      %v2306 = vshll.u32 920167782, %v2291
      %v2307 = vshrl.u32 1326507024, %v2292
      %v2308 = vor.u32 %v2306, %v2307
      %vm2309 = vcmp.lt.s32.totalorder %v2290, 1
      %vm2310 = vcmp.lt.s32.totalorder %v2290, 2
      %vm2311 = vcmp.lt.s32.totalorder %v2290, 3
      %vm2312 = vcmp.lt.s32.totalorder %v2290, 4
      %v2313 = vsel %vm2309, %v2293, %v2296
      %v2314 = vsel %vm2312, %v2302, 2102212464
      %v2315 = vsel %vm2311, %v2299, %v2314
      %v2316 = vsel %vm2310, %v2313, %v2315
      %v2317 = vsel %vm2309, %v2296, %v2299
      %v2318 = vsel %vm2312, %v2305, 920167782
      %v2319 = vsel %vm2311, %v2302, %v2318
      %v2320 = vsel %vm2310, %v2317, %v2319
      %v2321 = vsel %vm2309, %v2299, %v2302
      %v2322 = vsel %vm2312, %v2308, 1326507024
      %v2323 = vsel %vm2311, %v2305, %v2322
      %v2324 = vsel %vm2310, %v2321, %v2323
      %v2325 = vshll.u32 %v2285, 8
      %v2326 = vand.u32 %v2325, 65535
      %v2327 = vshrl.u32 %v2325, 16
      %v2328 = vand.u32 %v2324, 65535
      %v2329 = vshrl.u32 %v2324, 16
      %v2330 = vmul.u32 %v2326, %v2328
      %v2331 = vmul.u32 %v2326, %v2329
      %v2332 = vmul.u32 %v2327, %v2328
      %v2333 = vmul.u32 %v2327, %v2329
      %v2334 = vshll.u32 %v2331, 16
      %v2335 = vshrl.u32 %v2331, 16
      %v2336 = vshll.u32 %v2332, 16
      %v2337 = vshrl.u32 %v2332, 16
      %vm2338 = vc.u32 %v2330, %v2334
      %v2339 = vsel %vm2338, 1, 0
      %v2340 = vadd.s32 %v2330, %v2334
      %v2341 = vadd.s32 %v2333, %v2339
      %vm2342 = vc.u32 %v2340, %v2336
      %v2343 = vsel %vm2342, 1, 0
      %v2344 = vadd.s32 %v2340, %v2336
      %v2345 = vadd.s32 %v2341, %v2343
      %v2346 = vadd.s32 %v2345, %v2335
      %v2347 = vadd.s32 %v2346, %v2337
      %v2348 = vand.u32 %v2325, 65535
      %v2349 = vshrl.u32 %v2325, 16
      %v2350 = vand.u32 %v2320, 65535
      %v2351 = vshrl.u32 %v2320, 16
      %v2352 = vmul.u32 %v2348, %v2350
      %v2353 = vmul.u32 %v2348, %v2351
      %v2354 = vmul.u32 %v2349, %v2350
      %v2355 = vmul.u32 %v2349, %v2351
      %v2356 = vshll.u32 %v2353, 16
      %v2357 = vshrl.u32 %v2353, 16
      %v2358 = vshll.u32 %v2354, 16
      %v2359 = vshrl.u32 %v2354, 16
      %vm2360 = vc.u32 %v2352, %v2356
      %v2361 = vsel %vm2360, 1, 0
      %v2362 = vadd.s32 %v2352, %v2356
      %v2363 = vadd.s32 %v2355, %v2361
      %vm2364 = vc.u32 %v2362, %v2358
      %v2365 = vsel %vm2364, 1, 0
      %v2366 = vadd.s32 %v2362, %v2358
      %v2367 = vadd.s32 %v2363, %v2365
      %v2368 = vadd.s32 %v2367, %v2357
      %v2369 = vadd.s32 %v2368, %v2359
      %v2370 = vmul.u32 %v2325, %v2316
      %v2371 = vadd.s32 %v2347, %v2366
      %vm2372 = vc.u32 %v2347, %v2366
      %v2373 = vadd.s32 %v2369, 1
      %v2374 = vsel %vm2372, %v2373, %v2369
      %v2375 = vadd.s32 %v2370, %v2374
      %v2376 = vadd.s32 %v2375, 536870912
      %v2377 = vshrl.u32 %v2376, 30
      %v2378 = vshll.u32 %v2377, 30
      %v2379 = vsub.s32 %v2375, %v2378
      %vm2380 = vcmp.lt.s32.totalorder %v2379, 0
      %v2381 = vsub.s32 0, %v2379
      %v2382 = vsel %vm2380, %v2381, %v2379
      %v2383 = vclz %v2382
      %v2384 = vsub.s32 %v2383, 2
      %vm2385 = vcmp.gt.s32.totalorder 0, %v2384
      %v2386 = vsel %vm2385, 0, %v2384
      %v2387 = vsub.s32 32, %v2386
      %v2388 = vshll.u32 %v2379, %v2386
      %v2389 = vshrl.u32 %v2371, %v2387
      %v2390 = vor.u32 %v2388, %v2389
      %v2391 = vsub.s32 4294967266, %v2386
      %v2392 = vadd.s32 %v2391, 127
      %v2393 = vshll.u32 %v2392, 23
      %v2394 = vor.u32 4788187, %v2393
      %v2395 = vand.u32 2147483647, %v2394
      %v2397 = vcvt.s32.f32 %v2390
      %v2398 = vmul.f32 %v2397, %v2395
      %v2399 = vxor.u32 %v2398, 2147483648
      %v2400 = vsel %vm2279, %v2399, %v2398
      %v2401 = vsub.s32 4, %v2377
      %v2402 = vsel %vm2279, %v2401, %v2377
      %v2403 = vsel %vm2278, %v406, %v2400
      %v2404 = vsel %vm2278, 0, %v2402
      %v2405 = vmul.f32 %v2403, %v2403
      %v2406 = vmul.f32 %v2405, -0.001358992
      %v2407 = vadd.f32 %v2406, 0.041655596
      %v2408 = vmul.f32 %v2405, %v2407
      %v2409 = vadd.f32 %v2408, -0.4999988
      %v2410 = vmul.f32 %v2405, %v2409
      %v2411 = vadd.f32 1.0, %v2410
      %v2412 = vmul.f32 %v2403, %v2403
      %v2413 = vmul.f32 %v2412, -0.00019511016
      %v2414 = vadd.f32 %v2413, 0.008332121
      %v2415 = vmul.f32 %v2412, %v2414
      %v2416 = vadd.f32 %v2415, -0.16666654
      %v2417 = vmul.f32 %v2412, %v2416
      %v2418 = vadd.f32 %v2417, 1.0
      %v2419 = vmul.f32 %v2418, %v2403
      %vm2420 = vweird.f32 %v406
      %v2421 = vadd.s32 %v2404, 3
      %v2422 = vand.u32 %v2421, 3
      %vm2423 = vcmp.lt.s32.totalorder %v2422, 2
      %vm2424 = vcmp.eq.s32.totalorder %v2422, 0
      %v2425 = vxor.u32 %v2419, 2147483648
      %v2426 = vsel %vm2424, %v2411, %v2425
      %vm2427 = vcmp.eq.s32.totalorder %v2422, 2
      %v2428 = vxor.u32 %v2411, 2147483648
      %v2429 = vsel %vm2427, %v2428, %v2419
      %v2430 = vsel %vm2423, %v2426, %v2429
      %v2431 = vsel %vm2420, nan, %v2430
      %v2432 = vand.u32 2147483647, %v409
      %vm2433 = vcmp.le.f32.partialorder %v2432, 0.7853982
      %vm2434 = vcmp.lt.s32.totalorder %v409, 0
      %v2435 = vand.u32 %v409, 2139095040
      %v2436 = vshrl.u32 %v2435, 23
      %v2437 = vsub.s32 %v2436, 127
      %v2438 = vand.u32 2147483647, %v409
      %v2439 = vand.u32 %v2438, 8388607
      %v2440 = vor.u32 %v2439, 8388608
      %v2441 = vsub.s32 0, %v2440
      %v2442 = vadd.s32 %v2437, 1
      %vm2443 = vcmp.gt.s32.totalorder %v2442, 0
      %v2444 = vsel %vm2443, %v2442, 0
      %v2445 = vshrl.u32 %v2444, 5
      %v2446 = vand.u32 %v2444, 31
      %v2447 = vsub.s32 32, %v2446
      %v2448 = vshrl.u32 683565275, %v2447
      %v2449 = vshll.u32 683565275, %v2446
      %v2450 = vshrl.u32 2475754826, %v2447
      %v2451 = vor.u32 %v2449, %v2450
      %v2452 = vshll.u32 2475754826, %v2446
      %v2453 = vshrl.u32 2131351028, %v2447
      %v2454 = vor.u32 %v2452, %v2453
      %v2455 = vshll.u32 2131351028, %v2446
      %v2456 = vshrl.u32 2102212464, %v2447
      %v2457 = vor.u32 %v2455, %v2456
      %v2458 = vshll.u32 2102212464, %v2446
      %v2459 = vshrl.u32 920167782, %v2447
      %v2460 = vor.u32 %v2458, %v2459
      %v2461 = vshll.u32 920167782, %v2446
      %v2462 = vshrl.u32 1326507024, %v2447
      %v2463 = vor.u32 %v2461, %v2462
      %vm2464 = vcmp.lt.s32.totalorder %v2445, 1
      %vm2465 = vcmp.lt.s32.totalorder %v2445, 2
      %vm2466 = vcmp.lt.s32.totalorder %v2445, 3
      %vm2467 = vcmp.lt.s32.totalorder %v2445, 4
      %v2468 = vsel %vm2464, %v2448, %v2451
      %v2469 = vsel %vm2467, %v2457, 2102212464
      %v2470 = vsel %vm2466, %v2454, %v2469
      %v2471 = vsel %vm2465, %v2468, %v2470
      %v2472 = vsel %vm2464, %v2451, %v2454
      %v2473 = vsel %vm2467, %v2460, 920167782
      %v2474 = vsel %vm2466, %v2457, %v2473
      %v2475 = vsel %vm2465, %v2472, %v2474
      %v2476 = vsel %vm2464, %v2454, %v2457
      %v2477 = vsel %vm2467, %v2463, 1326507024
      %v2478 = vsel %vm2466, %v2460, %v2477
      %v2479 = vsel %vm2465, %v2476, %v2478
      %v2480 = vshll.u32 %v2440, 8
      %v2481 = vand.u32 %v2480, 65535
      %v2482 = vshrl.u32 %v2480, 16
      %v2483 = vand.u32 %v2479, 65535
      %v2484 = vshrl.u32 %v2479, 16
      %v2485 = vmul.u32 %v2481, %v2483
      %v2486 = vmul.u32 %v2481, %v2484
      %v2487 = vmul.u32 %v2482, %v2483
      %v2488 = vmul.u32 %v2482, %v2484
      %v2489 = vshll.u32 %v2486, 16
      %v2490 = vshrl.u32 %v2486, 16
      %v2491 = vshll.u32 %v2487, 16
      %v2492 = vshrl.u32 %v2487, 16
      %vm2493 = vc.u32 %v2485, %v2489
      %v2494 = vsel %vm2493, 1, 0
      %v2495 = vadd.s32 %v2485, %v2489
      %v2496 = vadd.s32 %v2488, %v2494
      %vm2497 = vc.u32 %v2495, %v2491
      %v2498 = vsel %vm2497, 1, 0
      %v2499 = vadd.s32 %v2495, %v2491
      %v2500 = vadd.s32 %v2496, %v2498
      %v2501 = vadd.s32 %v2500, %v2490
      %v2502 = vadd.s32 %v2501, %v2492
      %v2503 = vand.u32 %v2480, 65535
      %v2504 = vshrl.u32 %v2480, 16
      %v2505 = vand.u32 %v2475, 65535
      %v2506 = vshrl.u32 %v2475, 16
      %v2507 = vmul.u32 %v2503, %v2505
      %v2508 = vmul.u32 %v2503, %v2506
      %v2509 = vmul.u32 %v2504, %v2505
      %v2510 = vmul.u32 %v2504, %v2506
      %v2511 = vshll.u32 %v2508, 16
      %v2512 = vshrl.u32 %v2508, 16
      %v2513 = vshll.u32 %v2509, 16
      %v2514 = vshrl.u32 %v2509, 16
      %vm2515 = vc.u32 %v2507, %v2511
      %v2516 = vsel %vm2515, 1, 0
      %v2517 = vadd.s32 %v2507, %v2511
      %v2518 = vadd.s32 %v2510, %v2516
      %vm2519 = vc.u32 %v2517, %v2513
      %v2520 = vsel %vm2519, 1, 0
      %v2521 = vadd.s32 %v2517, %v2513
      %v2522 = vadd.s32 %v2518, %v2520
      %v2523 = vadd.s32 %v2522, %v2512
      %v2524 = vadd.s32 %v2523, %v2514
      %v2525 = vmul.u32 %v2480, %v2471
      %v2526 = vadd.s32 %v2502, %v2521
      %vm2527 = vc.u32 %v2502, %v2521
      %v2528 = vadd.s32 %v2524, 1
      %v2529 = vsel %vm2527, %v2528, %v2524
      %v2530 = vadd.s32 %v2525, %v2529
      %v2531 = vadd.s32 %v2530, 536870912
      %v2532 = vshrl.u32 %v2531, 30
      %v2533 = vshll.u32 %v2532, 30
      %v2534 = vsub.s32 %v2530, %v2533
      %vm2535 = vcmp.lt.s32.totalorder %v2534, 0
      %v2536 = vsub.s32 0, %v2534
      %v2537 = vsel %vm2535, %v2536, %v2534
      %v2538 = vclz %v2537
      %v2539 = vsub.s32 %v2538, 2
      %vm2540 = vcmp.gt.s32.totalorder 0, %v2539
      %v2541 = vsel %vm2540, 0, %v2539
      %v2542 = vsub.s32 32, %v2541
      %v2543 = vshll.u32 %v2534, %v2541
      %v2544 = vshrl.u32 %v2526, %v2542
      %v2545 = vor.u32 %v2543, %v2544
      %v2546 = vsub.s32 4294967266, %v2541
      %v2547 = vadd.s32 %v2546, 127
      %v2548 = vshll.u32 %v2547, 23
      %v2549 = vor.u32 4788187, %v2548
      %v2550 = vand.u32 2147483647, %v2549
      %v2552 = vcvt.s32.f32 %v2545
      %v2553 = vmul.f32 %v2552, %v2550
      %v2554 = vxor.u32 %v2553, 2147483648
      %v2555 = vsel %vm2434, %v2554, %v2553
      %v2556 = vsub.s32 4, %v2532
      %v2557 = vsel %vm2434, %v2556, %v2532
      %v2558 = vsel %vm2433, %v409, %v2555
      %v2559 = vsel %vm2433, 0, %v2557
      %v2560 = vmul.f32 %v2558, %v2558
      %v2561 = vmul.f32 %v2560, -0.001358992
      %v2562 = vadd.f32 %v2561, 0.041655596
      %v2563 = vmul.f32 %v2560, %v2562
      %v2564 = vadd.f32 %v2563, -0.4999988
      %v2565 = vmul.f32 %v2560, %v2564
      %v2566 = vadd.f32 1.0, %v2565
      %v2567 = vmul.f32 %v2558, %v2558
      %v2568 = vmul.f32 %v2567, -0.00019511016
      %v2569 = vadd.f32 %v2568, 0.008332121
      %v2570 = vmul.f32 %v2567, %v2569
      %v2571 = vadd.f32 %v2570, -0.16666654
      %v2572 = vmul.f32 %v2567, %v2571
      %v2573 = vadd.f32 %v2572, 1.0
      %v2574 = vmul.f32 %v2573, %v2558
      %vm2575 = vweird.f32 %v409
      %v2576 = vadd.s32 %v2559, 3
      %v2577 = vand.u32 %v2576, 3
      %vm2578 = vcmp.lt.s32.totalorder %v2577, 2
      %vm2579 = vcmp.eq.s32.totalorder %v2577, 0
      %v2580 = vxor.u32 %v2574, 2147483648
      %v2581 = vsel %vm2579, %v2566, %v2580
      %vm2582 = vcmp.eq.s32.totalorder %v2577, 2
      %v2583 = vxor.u32 %v2566, 2147483648
      %v2584 = vsel %vm2582, %v2583, %v2574
      %v2585 = vsel %vm2578, %v2581, %v2584
      %v2586 = vsel %vm2575, nan, %v2585
      %v2587 = vand.u32 2147483647, %v412
      %vm2588 = vcmp.le.f32.partialorder %v2587, 0.7853982
      %vm2589 = vcmp.lt.s32.totalorder %v412, 0
      %v2590 = vand.u32 %v412, 2139095040
      %v2591 = vshrl.u32 %v2590, 23
      %v2592 = vsub.s32 %v2591, 127
      %v2593 = vand.u32 2147483647, %v412
      %v2594 = vand.u32 %v2593, 8388607
      %v2595 = vor.u32 %v2594, 8388608
      %v2596 = vsub.s32 0, %v2595
      %v2597 = vadd.s32 %v2592, 1
      %vm2598 = vcmp.gt.s32.totalorder %v2597, 0
      %v2599 = vsel %vm2598, %v2597, 0
      %v2600 = vshrl.u32 %v2599, 5
      %v2601 = vand.u32 %v2599, 31
      %v2602 = vsub.s32 32, %v2601
      %v2603 = vshrl.u32 683565275, %v2602
      %v2604 = vshll.u32 683565275, %v2601
      %v2605 = vshrl.u32 2475754826, %v2602
      %v2606 = vor.u32 %v2604, %v2605
      %v2607 = vshll.u32 2475754826, %v2601
      %v2608 = vshrl.u32 2131351028, %v2602
      %v2609 = vor.u32 %v2607, %v2608
      %v2610 = vshll.u32 2131351028, %v2601
      %v2611 = vshrl.u32 2102212464, %v2602
      %v2612 = vor.u32 %v2610, %v2611
      %v2613 = vshll.u32 2102212464, %v2601
      %v2614 = vshrl.u32 920167782, %v2602
      %v2615 = vor.u32 %v2613, %v2614
      %v2616 = vshll.u32 920167782, %v2601
      %v2617 = vshrl.u32 1326507024, %v2602
      %v2618 = vor.u32 %v2616, %v2617
      %vm2619 = vcmp.lt.s32.totalorder %v2600, 1
      %vm2620 = vcmp.lt.s32.totalorder %v2600, 2
      %vm2621 = vcmp.lt.s32.totalorder %v2600, 3
      %vm2622 = vcmp.lt.s32.totalorder %v2600, 4
      %v2623 = vsel %vm2619, %v2603, %v2606
      %v2624 = vsel %vm2622, %v2612, 2102212464
      %v2625 = vsel %vm2621, %v2609, %v2624
      %v2626 = vsel %vm2620, %v2623, %v2625
      %v2627 = vsel %vm2619, %v2606, %v2609
      %v2628 = vsel %vm2622, %v2615, 920167782
      %v2629 = vsel %vm2621, %v2612, %v2628
      %v2630 = vsel %vm2620, %v2627, %v2629
      %v2631 = vsel %vm2619, %v2609, %v2612
      %v2632 = vsel %vm2622, %v2618, 1326507024
      %v2633 = vsel %vm2621, %v2615, %v2632
      %v2634 = vsel %vm2620, %v2631, %v2633
      %v2635 = vshll.u32 %v2595, 8
      %v2636 = vand.u32 %v2635, 65535
      %v2637 = vshrl.u32 %v2635, 16
      %v2638 = vand.u32 %v2634, 65535
      %v2639 = vshrl.u32 %v2634, 16
      %v2640 = vmul.u32 %v2636, %v2638
      %v2641 = vmul.u32 %v2636, %v2639
      %v2642 = vmul.u32 %v2637, %v2638
      %v2643 = vmul.u32 %v2637, %v2639
      %v2644 = vshll.u32 %v2641, 16
      %v2645 = vshrl.u32 %v2641, 16
      %v2646 = vshll.u32 %v2642, 16
      %v2647 = vshrl.u32 %v2642, 16
      %vm2648 = vc.u32 %v2640, %v2644
      %v2649 = vsel %vm2648, 1, 0
      %v2650 = vadd.s32 %v2640, %v2644
      %v2651 = vadd.s32 %v2643, %v2649
      %vm2652 = vc.u32 %v2650, %v2646
      %v2653 = vsel %vm2652, 1, 0
      %v2654 = vadd.s32 %v2650, %v2646
      %v2655 = vadd.s32 %v2651, %v2653
      %v2656 = vadd.s32 %v2655, %v2645
      %v2657 = vadd.s32 %v2656, %v2647
      %v2658 = vand.u32 %v2635, 65535
      %v2659 = vshrl.u32 %v2635, 16
      %v2660 = vand.u32 %v2630, 65535
      %v2661 = vshrl.u32 %v2630, 16
      %v2662 = vmul.u32 %v2658, %v2660
      %v2663 = vmul.u32 %v2658, %v2661
      %v2664 = vmul.u32 %v2659, %v2660
      %v2665 = vmul.u32 %v2659, %v2661
      %v2666 = vshll.u32 %v2663, 16
      %v2667 = vshrl.u32 %v2663, 16
      %v2668 = vshll.u32 %v2664, 16
      %v2669 = vshrl.u32 %v2664, 16
      %vm2670 = vc.u32 %v2662, %v2666
      %v2671 = vsel %vm2670, 1, 0
      %v2672 = vadd.s32 %v2662, %v2666
      %v2673 = vadd.s32 %v2665, %v2671
      %vm2674 = vc.u32 %v2672, %v2668
      %v2675 = vsel %vm2674, 1, 0
      %v2676 = vadd.s32 %v2672, %v2668
      %v2677 = vadd.s32 %v2673, %v2675
      %v2678 = vadd.s32 %v2677, %v2667
      %v2679 = vadd.s32 %v2678, %v2669
      %v2680 = vmul.u32 %v2635, %v2626
      %v2681 = vadd.s32 %v2657, %v2676
      %vm2682 = vc.u32 %v2657, %v2676
      %v2683 = vadd.s32 %v2679, 1
      %v2684 = vsel %vm2682, %v2683, %v2679
      %v2685 = vadd.s32 %v2680, %v2684
      %v2686 = vadd.s32 %v2685, 536870912
      %v2687 = vshrl.u32 %v2686, 30
      %v2688 = vshll.u32 %v2687, 30
      %v2689 = vsub.s32 %v2685, %v2688
      %vm2690 = vcmp.lt.s32.totalorder %v2689, 0
      %v2691 = vsub.s32 0, %v2689
      %v2692 = vsel %vm2690, %v2691, %v2689
      %v2693 = vclz %v2692
      %v2694 = vsub.s32 %v2693, 2
      %vm2695 = vcmp.gt.s32.totalorder 0, %v2694
      %v2696 = vsel %vm2695, 0, %v2694
      %v2697 = vsub.s32 32, %v2696
      %v2698 = vshll.u32 %v2689, %v2696
      %v2699 = vshrl.u32 %v2681, %v2697
      %v2700 = vor.u32 %v2698, %v2699
      %v2701 = vsub.s32 4294967266, %v2696
      %v2702 = vadd.s32 %v2701, 127
      %v2703 = vshll.u32 %v2702, 23
      %v2704 = vor.u32 4788187, %v2703
      %v2705 = vand.u32 2147483647, %v2704
      %v2707 = vcvt.s32.f32 %v2700
      %v2708 = vmul.f32 %v2707, %v2705
      %v2709 = vxor.u32 %v2708, 2147483648
      %v2710 = vsel %vm2589, %v2709, %v2708
      %v2711 = vsub.s32 4, %v2687
      %v2712 = vsel %vm2589, %v2711, %v2687
      %v2713 = vsel %vm2588, %v412, %v2710
      %v2714 = vsel %vm2588, 0, %v2712
      %v2715 = vmul.f32 %v2713, %v2713
      %v2716 = vmul.f32 %v2715, -0.001358992
      %v2717 = vadd.f32 %v2716, 0.041655596
      %v2718 = vmul.f32 %v2715, %v2717
      %v2719 = vadd.f32 %v2718, -0.4999988
      %v2720 = vmul.f32 %v2715, %v2719
      %v2721 = vadd.f32 1.0, %v2720
      %v2722 = vmul.f32 %v2713, %v2713
      %v2723 = vmul.f32 %v2722, -0.00019511016
      %v2724 = vadd.f32 %v2723, 0.008332121
      %v2725 = vmul.f32 %v2722, %v2724
      %v2726 = vadd.f32 %v2725, -0.16666654
      %v2727 = vmul.f32 %v2722, %v2726
      %v2728 = vadd.f32 %v2727, 1.0
      %v2729 = vmul.f32 %v2728, %v2713
      %vm2730 = vweird.f32 %v412
      %v2731 = vadd.s32 %v2714, 3
      %v2732 = vand.u32 %v2731, 3
      %vm2733 = vcmp.lt.s32.totalorder %v2732, 2
      %vm2734 = vcmp.eq.s32.totalorder %v2732, 0
      %v2735 = vxor.u32 %v2729, 2147483648
      %v2736 = vsel %vm2734, %v2721, %v2735
      %vm2737 = vcmp.eq.s32.totalorder %v2732, 2
      %v2738 = vxor.u32 %v2721, 2147483648
      %v2739 = vsel %vm2737, %v2738, %v2729
      %v2740 = vsel %vm2733, %v2736, %v2739
      %v2741 = vsel %vm2730, nan, %v2740
      %v2742 = vand.u32 2147483647, %v415
      %vm2743 = vcmp.le.f32.partialorder %v2742, 0.7853982
      %vm2744 = vcmp.lt.s32.totalorder %v415, 0
      %v2745 = vand.u32 %v415, 2139095040
      %v2746 = vshrl.u32 %v2745, 23
      %v2747 = vsub.s32 %v2746, 127
      %v2748 = vand.u32 2147483647, %v415
      %v2749 = vand.u32 %v2748, 8388607
      %v2750 = vor.u32 %v2749, 8388608
      %v2751 = vsub.s32 0, %v2750
      %v2752 = vadd.s32 %v2747, 1
      %vm2753 = vcmp.gt.s32.totalorder %v2752, 0
      %v2754 = vsel %vm2753, %v2752, 0
      %v2755 = vshrl.u32 %v2754, 5
      %v2756 = vand.u32 %v2754, 31
      %v2757 = vsub.s32 32, %v2756
      %v2758 = vshrl.u32 683565275, %v2757
      %v2759 = vshll.u32 683565275, %v2756
      %v2760 = vshrl.u32 2475754826, %v2757
      %v2761 = vor.u32 %v2759, %v2760
      %v2762 = vshll.u32 2475754826, %v2756
      %v2763 = vshrl.u32 2131351028, %v2757
      %v2764 = vor.u32 %v2762, %v2763
      %v2765 = vshll.u32 2131351028, %v2756
      %v2766 = vshrl.u32 2102212464, %v2757
      %v2767 = vor.u32 %v2765, %v2766
      %v2768 = vshll.u32 2102212464, %v2756
      %v2769 = vshrl.u32 920167782, %v2757
      %v2770 = vor.u32 %v2768, %v2769
      %v2771 = vshll.u32 920167782, %v2756
      %v2772 = vshrl.u32 1326507024, %v2757
      %v2773 = vor.u32 %v2771, %v2772
      %vm2774 = vcmp.lt.s32.totalorder %v2755, 1
      %vm2775 = vcmp.lt.s32.totalorder %v2755, 2
      %vm2776 = vcmp.lt.s32.totalorder %v2755, 3
      %vm2777 = vcmp.lt.s32.totalorder %v2755, 4
      %v2778 = vsel %vm2774, %v2758, %v2761
      %v2779 = vsel %vm2777, %v2767, 2102212464
      %v2780 = vsel %vm2776, %v2764, %v2779
      %v2781 = vsel %vm2775, %v2778, %v2780
      %v2782 = vsel %vm2774, %v2761, %v2764
      %v2783 = vsel %vm2777, %v2770, 920167782
      %v2784 = vsel %vm2776, %v2767, %v2783
      %v2785 = vsel %vm2775, %v2782, %v2784
      %v2786 = vsel %vm2774, %v2764, %v2767
      %v2787 = vsel %vm2777, %v2773, 1326507024
      %v2788 = vsel %vm2776, %v2770, %v2787
      %v2789 = vsel %vm2775, %v2786, %v2788
      %v2790 = vshll.u32 %v2750, 8
      %v2791 = vand.u32 %v2790, 65535
      %v2792 = vshrl.u32 %v2790, 16
      %v2793 = vand.u32 %v2789, 65535
      %v2794 = vshrl.u32 %v2789, 16
      %v2795 = vmul.u32 %v2791, %v2793
      %v2796 = vmul.u32 %v2791, %v2794
      %v2797 = vmul.u32 %v2792, %v2793
      %v2798 = vmul.u32 %v2792, %v2794
      %v2799 = vshll.u32 %v2796, 16
      %v2800 = vshrl.u32 %v2796, 16
      %v2801 = vshll.u32 %v2797, 16
      %v2802 = vshrl.u32 %v2797, 16
      %vm2803 = vc.u32 %v2795, %v2799
      %v2804 = vsel %vm2803, 1, 0
      %v2805 = vadd.s32 %v2795, %v2799
      %v2806 = vadd.s32 %v2798, %v2804
      %vm2807 = vc.u32 %v2805, %v2801
      %v2808 = vsel %vm2807, 1, 0
      %v2809 = vadd.s32 %v2805, %v2801
      %v2810 = vadd.s32 %v2806, %v2808
      %v2811 = vadd.s32 %v2810, %v2800
      %v2812 = vadd.s32 %v2811, %v2802
      %v2813 = vand.u32 %v2790, 65535
      %v2814 = vshrl.u32 %v2790, 16
      %v2815 = vand.u32 %v2785, 65535
      %v2816 = vshrl.u32 %v2785, 16
      %v2817 = vmul.u32 %v2813, %v2815
      %v2818 = vmul.u32 %v2813, %v2816
      %v2819 = vmul.u32 %v2814, %v2815
      %v2820 = vmul.u32 %v2814, %v2816
      %v2821 = vshll.u32 %v2818, 16
      %v2822 = vshrl.u32 %v2818, 16
      %v2823 = vshll.u32 %v2819, 16
      %v2824 = vshrl.u32 %v2819, 16
      %vm2825 = vc.u32 %v2817, %v2821
      %v2826 = vsel %vm2825, 1, 0
      %v2827 = vadd.s32 %v2817, %v2821
      %v2828 = vadd.s32 %v2820, %v2826
      %vm2829 = vc.u32 %v2827, %v2823
      %v2830 = vsel %vm2829, 1, 0
      %v2831 = vadd.s32 %v2827, %v2823
      %v2832 = vadd.s32 %v2828, %v2830
      %v2833 = vadd.s32 %v2832, %v2822
      %v2834 = vadd.s32 %v2833, %v2824
      %v2835 = vmul.u32 %v2790, %v2781
      %v2836 = vadd.s32 %v2812, %v2831
      %vm2837 = vc.u32 %v2812, %v2831
      %v2838 = vadd.s32 %v2834, 1
      %v2839 = vsel %vm2837, %v2838, %v2834
      %v2840 = vadd.s32 %v2835, %v2839
      %v2841 = vadd.s32 %v2840, 536870912
      %v2842 = vshrl.u32 %v2841, 30
      %v2843 = vshll.u32 %v2842, 30
      %v2844 = vsub.s32 %v2840, %v2843
      %vm2845 = vcmp.lt.s32.totalorder %v2844, 0
      %v2846 = vsub.s32 0, %v2844
      %v2847 = vsel %vm2845, %v2846, %v2844
      %v2848 = vclz %v2847
      %v2849 = vsub.s32 %v2848, 2
      %vm2850 = vcmp.gt.s32.totalorder 0, %v2849
      %v2851 = vsel %vm2850, 0, %v2849
      %v2852 = vsub.s32 32, %v2851
      %v2853 = vshll.u32 %v2844, %v2851
      %v2854 = vshrl.u32 %v2836, %v2852
      %v2855 = vor.u32 %v2853, %v2854
      %v2856 = vsub.s32 4294967266, %v2851
      %v2857 = vadd.s32 %v2856, 127
      %v2858 = vshll.u32 %v2857, 23
      %v2859 = vor.u32 4788187, %v2858
      %v2860 = vand.u32 2147483647, %v2859
      %v2862 = vcvt.s32.f32 %v2855
      %v2863 = vmul.f32 %v2862, %v2860
      %v2864 = vxor.u32 %v2863, 2147483648
      %v2865 = vsel %vm2744, %v2864, %v2863
      %v2866 = vsub.s32 4, %v2842
      %v2867 = vsel %vm2744, %v2866, %v2842
      %v2868 = vsel %vm2743, %v415, %v2865
      %v2869 = vsel %vm2743, 0, %v2867
      %v2870 = vmul.f32 %v2868, %v2868
      %v2871 = vmul.f32 %v2870, -0.001358992
      %v2872 = vadd.f32 %v2871, 0.041655596
      %v2873 = vmul.f32 %v2870, %v2872
      %v2874 = vadd.f32 %v2873, -0.4999988
      %v2875 = vmul.f32 %v2870, %v2874
      %v2876 = vadd.f32 1.0, %v2875
      %v2877 = vmul.f32 %v2868, %v2868
      %v2878 = vmul.f32 %v2877, -0.00019511016
      %v2879 = vadd.f32 %v2878, 0.008332121
      %v2880 = vmul.f32 %v2877, %v2879
      %v2881 = vadd.f32 %v2880, -0.16666654
      %v2882 = vmul.f32 %v2877, %v2881
      %v2883 = vadd.f32 %v2882, 1.0
      %v2884 = vmul.f32 %v2883, %v2868
      %vm2885 = vweird.f32 %v415
      %v2886 = vadd.s32 %v2869, 3
      %v2887 = vand.u32 %v2886, 3
      %vm2888 = vcmp.lt.s32.totalorder %v2887, 2
      %vm2889 = vcmp.eq.s32.totalorder %v2887, 0
      %v2890 = vxor.u32 %v2884, 2147483648
      %v2891 = vsel %vm2889, %v2876, %v2890
      %vm2892 = vcmp.eq.s32.totalorder %v2887, 2
      %v2893 = vxor.u32 %v2876, 2147483648
      %v2894 = vsel %vm2892, %v2893, %v2884
      %v2895 = vsel %vm2888, %v2891, %v2894
      %v2896 = vsel %vm2885, nan, %v2895
      %v2897 = vld [vmem:[%s3] sm:$0xff]
      %v2898 = vld [vmem:[%s3 + $0x8] sm:$0xff]
      %v2899 = vld [vmem:[%s3 + $0x10] sm:$0xff]
      %v2900 = vld [vmem:[%s3 + $0x18] sm:$0xff]
      %v2901 = vld [vmem:[%s4] sm:$0x1]
      %v2903 = vperm.slane %v2901, 0
      %vm2905 = vcmask 261120
      %v2907 = vsel %vm2905, %v571, 0
      %v2910 = vsel %vm2905, %v726, 0
      %v2913 = vsel %vm2905, %v881, 0
      %v2916 = vsel %vm2905, %v1036, 0
      %v2919 = vsel %vm2905, %v1191, 0
      %v2922 = vsel %vm2905, %v1346, 0
      %v2925 = vsel %vm2905, %v1501, 0
      %v2928 = vsel %vm2905, %v1656, 0
      %v2931 = vsel %vm2905, %v1811, 0
      %v2934 = vsel %vm2905, %v1966, 0
      %v2937 = vsel %vm2905, %v2121, 0
      %v2940 = vsel %vm2905, %v2276, 0
      %v2943 = vsel %vm2905, %v2431, 0
      %v2946 = vsel %vm2905, %v2586, 0
      %v2949 = vsel %vm2905, %v2741, 0
      %v2952 = vsel %vm2905, %v2896, 0
      %2954 = vmatpush.msra.mxu0 0.0
      %2955 = vmatpush.msra.mxu0 0.0
      %2956 = vmatpush.msra.mxu0 0.0
      %2957 = vmatpush.msra.mxu0 0.0
      %2958 = vmatpush.msra.mxu0 0.0
      %2959 = vmatpush.msra.mxu0 0.0
      %2960 = vmatpush.msra.mxu0 0.0
      %2961 = vmatpush.msra.mxu0 0.0
      %2962 = vmatpush.msra.mxu0 0.0
      %2963 = vmatpush.msra.mxu0 0.0
      %2964 = vmatpush.msra.mxu0 0.0
      %2965 = vmatpush.msra.mxu0 0.0
      %2966 = vmatpush.msra.mxu0 %v2900
      %2967 = vmatpush.msra.mxu0 %v2899
      %2968 = vmatpush.msra.mxu0 %v2898
      %2969 = vmatpush.msra.mxu0 %v2897
      %2970 = vmatmul.f32.gmra.mxu0 %v2907
      %v2971 = vpop.f32.mrf.mxu0
      %v2972 = vadd.f32 %v2903, %v2971
      %2973 = vmatmul.f32.gmra.mxu0 %v2910
      %v2974 = vpop.f32.mrf.mxu0
      %v2975 = vadd.f32 %v2903, %v2974
      %2976 = vmatmul.f32.gmra.mxu0 %v2913
      %v2977 = vpop.f32.mrf.mxu0
      %v2978 = vadd.f32 %v2903, %v2977
      %2979 = vmatmul.f32.gmra.mxu0 %v2916
      %v2980 = vpop.f32.mrf.mxu0
      %v2981 = vadd.f32 %v2903, %v2980
      %2982 = vmatmul.f32.gmra.mxu0 %v2919
      %v2983 = vpop.f32.mrf.mxu0
      %v2984 = vadd.f32 %v2903, %v2983
      %2985 = vmatmul.f32.gmra.mxu0 %v2922
      %v2986 = vpop.f32.mrf.mxu0
      %v2987 = vadd.f32 %v2903, %v2986
      %2988 = vmatmul.f32.gmra.mxu0 %v2925
      %v2989 = vpop.f32.mrf.mxu0
      %v2990 = vadd.f32 %v2903, %v2989
      %2991 = vmatmul.f32.gmra.mxu0 %v2928
      %v2992 = vpop.f32.mrf.mxu0
      %v2993 = vadd.f32 %v2903, %v2992
      %2994 = vmatmul.f32.gmra.mxu0 %v2931
      %v2995 = vpop.f32.mrf.mxu0
      %v2996 = vadd.f32 %v2903, %v2995
      %2997 = vmatmul.f32.gmra.mxu0 %v2934
      %v2998 = vpop.f32.mrf.mxu0
      %v2999 = vadd.f32 %v2903, %v2998
      %3000 = vmatmul.f32.gmra.mxu0 %v2937
      %v3001 = vpop.f32.mrf.mxu0
      %v3002 = vadd.f32 %v2903, %v3001
      %3003 = vmatmul.f32.gmra.mxu0 %v2940
      %v3004 = vpop.f32.mrf.mxu0
      %v3005 = vadd.f32 %v2903, %v3004
      %3006 = vmatmul.f32.gmra.mxu0 %v2943
      %v3007 = vpop.f32.mrf.mxu0
      %v3008 = vadd.f32 %v2903, %v3007
      %3009 = vmatmul.f32.gmra.mxu0 %v2946
      %v3010 = vpop.f32.mrf.mxu0
      %v3011 = vadd.f32 %v2903, %v3010
      %3012 = vmatmul.f32.gmra.mxu0 %v2949
      %v3013 = vpop.f32.mrf.mxu0
      %v3014 = vadd.f32 %v2903, %v3013
      %3015 = vmatmul.f32.gmra.mxu0 %v2952
      %v3016 = vpop.f32.mrf.mxu0
      %v3017 = vadd.f32 %v2903, %v3016
      %3018 = vdwg.mxu0
      %3035 = vrot.lane.b32.xlu0 %v2972, 32
      %v3036 = vpop.permute.xlu0 %3035
      %3037 = vrot.lane.b32.xlu0 %v2975, 32
      %v3038 = vpop.permute.xlu0 %3037
      %3039 = vrot.lane.b32.xlu0 %v2978, 32
      %v3040 = vpop.permute.xlu0 %3039
      %3041 = vrot.lane.b32.xlu0 %v2981, 32
      %v3042 = vpop.permute.xlu0 %3041
      %3043 = vrot.lane.b32.xlu0 %v2984, 32
      %v3044 = vpop.permute.xlu0 %3043
      %3045 = vrot.lane.b32.xlu0 %v2987, 32
      %v3046 = vpop.permute.xlu0 %3045
      %3047 = vrot.lane.b32.xlu0 %v2990, 32
      %v3048 = vpop.permute.xlu0 %3047
      %3049 = vrot.lane.b32.xlu0 %v2993, 32
      %v3050 = vpop.permute.xlu0 %3049
      %3051 = vrot.lane.b32.xlu0 %v2996, 32
      %v3052 = vpop.permute.xlu0 %3051
      %3053 = vrot.lane.b32.xlu0 %v2999, 32
      %v3054 = vpop.permute.xlu0 %3053
      %3055 = vrot.lane.b32.xlu0 %v3002, 32
      %v3056 = vpop.permute.xlu0 %3055
      %3057 = vrot.lane.b32.xlu0 %v3005, 32
      %v3058 = vpop.permute.xlu0 %3057
      %3059 = vrot.lane.b32.xlu0 %v3008, 32
      %v3060 = vpop.permute.xlu0 %3059
      %3061 = vrot.lane.b32.xlu0 %v3011, 32
      %v3062 = vpop.permute.xlu0 %3061
      %3063 = vrot.lane.b32.xlu0 %v3014, 32
      %v3064 = vpop.permute.xlu0 %3063
      %3065 = vrot.lane.b32.xlu0 %v3017, 32
      %v3066 = vpop.permute.xlu0 %3065
      %v3083 = vmul.f32 %v571, %v3036
      %v3084 = vmul.f32 %v726, %v3038
      %v3085 = vmul.f32 %v881, %v3040
      %v3086 = vmul.f32 %v1036, %v3042
      %v3087 = vmul.f32 %v1191, %v3044
      %v3088 = vmul.f32 %v1346, %v3046
      %v3089 = vmul.f32 %v1501, %v3048
      %v3090 = vmul.f32 %v1656, %v3050
      %v3091 = vmul.f32 %v1811, %v3052
      %v3092 = vmul.f32 %v1966, %v3054
      %v3093 = vmul.f32 %v2121, %v3056
      %v3094 = vmul.f32 %v2276, %v3058
      %v3095 = vmul.f32 %v2431, %v3060
      %v3096 = vmul.f32 %v2586, %v3062
      %v3097 = vmul.f32 %v2741, %v3064
      %v3098 = vmul.f32 %v2896, %v3066
      %s3099 = scalar_lea.vmem %s3, 32
      %v3100 = vld [vmem:[%s3099] sm:$0xff]
      %v3101 = vld [vmem:[%s3099 + $0x8] sm:$0xff]
      %v3102 = vld [vmem:[%s3099 + $0x10] sm:$0xff]
      %v3103 = vld [vmem:[%s3099 + $0x18] sm:$0xff]
      %s3104 = scalar_lea.vmem %s4, 1
      %v3105 = vld [vmem:[%s3104] sm:$0x1]
      %v3107 = vperm.slane %v3105, 0
      %3125 = vrot.lane.b32.xlu0 %v3083, 96
      %v3126 = vpop.permute.xlu0 %3125
      %3127 = vrot.lane.b32.xlu0 %v3084, 96
      %v3128 = vpop.permute.xlu0 %3127
      %3129 = vrot.lane.b32.xlu0 %v3085, 96
      %v3130 = vpop.permute.xlu0 %3129
      %3131 = vrot.lane.b32.xlu0 %v3086, 96
      %v3132 = vpop.permute.xlu0 %3131
      %3133 = vrot.lane.b32.xlu0 %v3087, 96
      %v3134 = vpop.permute.xlu0 %3133
      %3135 = vrot.lane.b32.xlu0 %v3088, 96
      %v3136 = vpop.permute.xlu0 %3135
      %3137 = vrot.lane.b32.xlu0 %v3089, 96
      %v3138 = vpop.permute.xlu0 %3137
      %3139 = vrot.lane.b32.xlu0 %v3090, 96
      %v3140 = vpop.permute.xlu0 %3139
      %3141 = vrot.lane.b32.xlu0 %v3091, 96
      %v3142 = vpop.permute.xlu0 %3141
      %3143 = vrot.lane.b32.xlu0 %v3092, 96
      %v3144 = vpop.permute.xlu0 %3143
      %3145 = vrot.lane.b32.xlu0 %v3093, 96
      %v3146 = vpop.permute.xlu0 %3145
      %3147 = vrot.lane.b32.xlu0 %v3094, 96
      %v3148 = vpop.permute.xlu0 %3147
      %3149 = vrot.lane.b32.xlu0 %v3095, 96
      %v3150 = vpop.permute.xlu0 %3149
      %3151 = vrot.lane.b32.xlu0 %v3096, 96
      %v3152 = vpop.permute.xlu0 %3151
      %3153 = vrot.lane.b32.xlu0 %v3097, 96
      %v3154 = vpop.permute.xlu0 %3153
      %3155 = vrot.lane.b32.xlu0 %v3098, 96
      %v3156 = vpop.permute.xlu0 %3155
      %v3157 = vsel %vm2905, %v3126, 0
      %v3159 = vsel %vm2905, %v3128, 0
      %v3161 = vsel %vm2905, %v3130, 0
      %v3163 = vsel %vm2905, %v3132, 0
      %v3165 = vsel %vm2905, %v3134, 0
      %v3167 = vsel %vm2905, %v3136, 0
      %v3169 = vsel %vm2905, %v3138, 0
      %v3171 = vsel %vm2905, %v3140, 0
      %v3173 = vsel %vm2905, %v3142, 0
      %v3175 = vsel %vm2905, %v3144, 0
      %v3177 = vsel %vm2905, %v3146, 0
      %v3179 = vsel %vm2905, %v3148, 0
      %v3181 = vsel %vm2905, %v3150, 0
      %v3183 = vsel %vm2905, %v3152, 0
      %v3185 = vsel %vm2905, %v3154, 0
      %v3187 = vsel %vm2905, %v3156, 0
      %3189 = vmatpush.msra.mxu0 0.0
      %3190 = vmatpush.msra.mxu0 0.0
      %3191 = vmatpush.msra.mxu0 0.0
      %3192 = vmatpush.msra.mxu0 0.0
      %3193 = vmatpush.msra.mxu0 0.0
      %3194 = vmatpush.msra.mxu0 0.0
      %3195 = vmatpush.msra.mxu0 0.0
      %3196 = vmatpush.msra.mxu0 0.0
      %3197 = vmatpush.msra.mxu0 0.0
      %3198 = vmatpush.msra.mxu0 0.0
      %3199 = vmatpush.msra.mxu0 0.0
      %3200 = vmatpush.msra.mxu0 0.0
      %3201 = vmatpush.msra.mxu0 %v3103
      %3202 = vmatpush.msra.mxu0 %v3102
      %3203 = vmatpush.msra.mxu0 %v3101
      %3204 = vmatpush.msra.mxu0 %v3100
      %3205 = vmatmul.f32.gmra.mxu0 %v3157
      %v3206 = vpop.f32.mrf.mxu0
      %v3207 = vadd.f32 %v3107, %v3206
      %3208 = vmatmul.f32.gmra.mxu0 %v3159
      %v3209 = vpop.f32.mrf.mxu0
      %v3210 = vadd.f32 %v3107, %v3209
      %3211 = vmatmul.f32.gmra.mxu0 %v3161
      %v3212 = vpop.f32.mrf.mxu0
      %v3213 = vadd.f32 %v3107, %v3212
      %3214 = vmatmul.f32.gmra.mxu0 %v3163
      %v3215 = vpop.f32.mrf.mxu0
      %v3216 = vadd.f32 %v3107, %v3215
      %3217 = vmatmul.f32.gmra.mxu0 %v3165
      %v3218 = vpop.f32.mrf.mxu0
      %v3219 = vadd.f32 %v3107, %v3218
      %3220 = vmatmul.f32.gmra.mxu0 %v3167
      %v3221 = vpop.f32.mrf.mxu0
      %v3222 = vadd.f32 %v3107, %v3221
      %3223 = vmatmul.f32.gmra.mxu0 %v3169
      %v3224 = vpop.f32.mrf.mxu0
      %v3225 = vadd.f32 %v3107, %v3224
      %3226 = vmatmul.f32.gmra.mxu0 %v3171
      %v3227 = vpop.f32.mrf.mxu0
      %v3228 = vadd.f32 %v3107, %v3227
      %3229 = vmatmul.f32.gmra.mxu0 %v3173
      %v3230 = vpop.f32.mrf.mxu0
      %v3231 = vadd.f32 %v3107, %v3230
      %3232 = vmatmul.f32.gmra.mxu0 %v3175
      %v3233 = vpop.f32.mrf.mxu0
      %v3234 = vadd.f32 %v3107, %v3233
      %3235 = vmatmul.f32.gmra.mxu0 %v3177
      %v3236 = vpop.f32.mrf.mxu0
      %v3237 = vadd.f32 %v3107, %v3236
      %3238 = vmatmul.f32.gmra.mxu0 %v3179
      %v3239 = vpop.f32.mrf.mxu0
      %v3240 = vadd.f32 %v3107, %v3239
      %3241 = vmatmul.f32.gmra.mxu0 %v3181
      %v3242 = vpop.f32.mrf.mxu0
      %v3243 = vadd.f32 %v3107, %v3242
      %3244 = vmatmul.f32.gmra.mxu0 %v3183
      %v3245 = vpop.f32.mrf.mxu0
      %v3246 = vadd.f32 %v3107, %v3245
      %3247 = vmatmul.f32.gmra.mxu0 %v3185
      %v3248 = vpop.f32.mrf.mxu0
      %v3249 = vadd.f32 %v3107, %v3248
      %3250 = vmatmul.f32.gmra.mxu0 %v3187
      %v3251 = vpop.f32.mrf.mxu0
      %v3252 = vadd.f32 %v3107, %v3251
      %3253 = vdwg.mxu0
      %3270 = vrot.lane.b32.xlu0 %v3207, 64
      %v3271 = vpop.permute.xlu0 %3270
      %3272 = vrot.lane.b32.xlu0 %v3210, 64
      %v3273 = vpop.permute.xlu0 %3272
      %3274 = vrot.lane.b32.xlu0 %v3213, 64
      %v3275 = vpop.permute.xlu0 %3274
      %3276 = vrot.lane.b32.xlu0 %v3216, 64
      %v3277 = vpop.permute.xlu0 %3276
      %3278 = vrot.lane.b32.xlu0 %v3219, 64
      %v3279 = vpop.permute.xlu0 %3278
      %3280 = vrot.lane.b32.xlu0 %v3222, 64
      %v3281 = vpop.permute.xlu0 %3280
      %3282 = vrot.lane.b32.xlu0 %v3225, 64
      %v3283 = vpop.permute.xlu0 %3282
      %3284 = vrot.lane.b32.xlu0 %v3228, 64
      %v3285 = vpop.permute.xlu0 %3284
      %3286 = vrot.lane.b32.xlu0 %v3231, 64
      %v3287 = vpop.permute.xlu0 %3286
      %3288 = vrot.lane.b32.xlu0 %v3234, 64
      %v3289 = vpop.permute.xlu0 %3288
      %3290 = vrot.lane.b32.xlu0 %v3237, 64
      %v3291 = vpop.permute.xlu0 %3290
      %3292 = vrot.lane.b32.xlu0 %v3240, 64
      %v3293 = vpop.permute.xlu0 %3292
      %3294 = vrot.lane.b32.xlu0 %v3243, 64
      %v3295 = vpop.permute.xlu0 %3294
      %3296 = vrot.lane.b32.xlu0 %v3246, 64
      %v3297 = vpop.permute.xlu0 %3296
      %3298 = vrot.lane.b32.xlu0 %v3249, 64
      %v3299 = vpop.permute.xlu0 %3298
      %3300 = vrot.lane.b32.xlu0 %v3252, 64
      %v3301 = vpop.permute.xlu0 %3300
      %v3318 = vmul.f32 %v571, %v3271
      %v3319 = vmul.f32 %v726, %v3273
      %v3320 = vmul.f32 %v881, %v3275
      %v3321 = vmul.f32 %v1036, %v3277
      %v3322 = vmul.f32 %v1191, %v3279
      %v3323 = vmul.f32 %v1346, %v3281
      %v3324 = vmul.f32 %v1501, %v3283
      %v3325 = vmul.f32 %v1656, %v3285
      %v3326 = vmul.f32 %v1811, %v3287
      %v3327 = vmul.f32 %v1966, %v3289
      %v3328 = vmul.f32 %v2121, %v3291
      %v3329 = vmul.f32 %v2276, %v3293
      %v3330 = vmul.f32 %v2431, %v3295
      %v3331 = vmul.f32 %v2586, %v3297
      %v3332 = vmul.f32 %v2741, %v3299
      %v3333 = vmul.f32 %v2896, %v3301
      %s3334 = scalar_lea.vmem %s3, 64
      %v3335 = vld [vmem:[%s3334] sm:$0xff]
      %v3336 = vld [vmem:[%s3334 + $0x8] sm:$0xff]
      %v3337 = vld [vmem:[%s3334 + $0x10] sm:$0xff]
      %v3338 = vld [vmem:[%s3334 + $0x18] sm:$0xff]
      %s3339 = scalar_lea.vmem %s4, 2
      %v3340 = vld [vmem:[%s3339] sm:$0x1]
      %v3342 = vperm.slane %v3340, 0
      %3360 = vrot.lane.b32.xlu0 %v3318, 64
      %v3361 = vpop.permute.xlu0 %3360
      %3362 = vrot.lane.b32.xlu0 %v3319, 64
      %v3363 = vpop.permute.xlu0 %3362
      %3364 = vrot.lane.b32.xlu0 %v3320, 64
      %v3365 = vpop.permute.xlu0 %3364
      %3366 = vrot.lane.b32.xlu0 %v3321, 64
      %v3367 = vpop.permute.xlu0 %3366
      %3368 = vrot.lane.b32.xlu0 %v3322, 64
      %v3369 = vpop.permute.xlu0 %3368
      %3370 = vrot.lane.b32.xlu0 %v3323, 64
      %v3371 = vpop.permute.xlu0 %3370
      %3372 = vrot.lane.b32.xlu0 %v3324, 64
      %v3373 = vpop.permute.xlu0 %3372
      %3374 = vrot.lane.b32.xlu0 %v3325, 64
      %v3375 = vpop.permute.xlu0 %3374
      %3376 = vrot.lane.b32.xlu0 %v3326, 64
      %v3377 = vpop.permute.xlu0 %3376
      %3378 = vrot.lane.b32.xlu0 %v3327, 64
      %v3379 = vpop.permute.xlu0 %3378
      %3380 = vrot.lane.b32.xlu0 %v3328, 64
      %v3381 = vpop.permute.xlu0 %3380
      %3382 = vrot.lane.b32.xlu0 %v3329, 64
      %v3383 = vpop.permute.xlu0 %3382
      %3384 = vrot.lane.b32.xlu0 %v3330, 64
      %v3385 = vpop.permute.xlu0 %3384
      %3386 = vrot.lane.b32.xlu0 %v3331, 64
      %v3387 = vpop.permute.xlu0 %3386
      %3388 = vrot.lane.b32.xlu0 %v3332, 64
      %v3389 = vpop.permute.xlu0 %3388
      %3390 = vrot.lane.b32.xlu0 %v3333, 64
      %v3391 = vpop.permute.xlu0 %3390
      %v3392 = vsel %vm2905, %v3361, 0
      %v3394 = vsel %vm2905, %v3363, 0
      %v3396 = vsel %vm2905, %v3365, 0
      %v3398 = vsel %vm2905, %v3367, 0
      %v3400 = vsel %vm2905, %v3369, 0
      %v3402 = vsel %vm2905, %v3371, 0
      %v3404 = vsel %vm2905, %v3373, 0
      %v3406 = vsel %vm2905, %v3375, 0
      %v3408 = vsel %vm2905, %v3377, 0
      %v3410 = vsel %vm2905, %v3379, 0
      %v3412 = vsel %vm2905, %v3381, 0
      %v3414 = vsel %vm2905, %v3383, 0
      %v3416 = vsel %vm2905, %v3385, 0
      %v3418 = vsel %vm2905, %v3387, 0
      %v3420 = vsel %vm2905, %v3389, 0
      %v3422 = vsel %vm2905, %v3391, 0
      %3424 = vmatpush.msra.mxu0 0.0
      %3425 = vmatpush.msra.mxu0 0.0
      %3426 = vmatpush.msra.mxu0 0.0
      %3427 = vmatpush.msra.mxu0 0.0
      %3428 = vmatpush.msra.mxu0 0.0
      %3429 = vmatpush.msra.mxu0 0.0
      %3430 = vmatpush.msra.mxu0 0.0
      %3431 = vmatpush.msra.mxu0 0.0
      %3432 = vmatpush.msra.mxu0 0.0
      %3433 = vmatpush.msra.mxu0 0.0
      %3434 = vmatpush.msra.mxu0 0.0
      %3435 = vmatpush.msra.mxu0 0.0
      %3436 = vmatpush.msra.mxu0 %v3338
      %3437 = vmatpush.msra.mxu0 %v3337
      %3438 = vmatpush.msra.mxu0 %v3336
      %3439 = vmatpush.msra.mxu0 %v3335
      %3440 = vmatmul.f32.gmra.mxu0 %v3392
      %v3441 = vpop.f32.mrf.mxu0
      %v3442 = vadd.f32 %v3342, %v3441
      %3443 = vmatmul.f32.gmra.mxu0 %v3394
      %v3444 = vpop.f32.mrf.mxu0
      %v3445 = vadd.f32 %v3342, %v3444
      %3446 = vmatmul.f32.gmra.mxu0 %v3396
      %v3447 = vpop.f32.mrf.mxu0
      %v3448 = vadd.f32 %v3342, %v3447
      %3449 = vmatmul.f32.gmra.mxu0 %v3398
      %v3450 = vpop.f32.mrf.mxu0
      %v3451 = vadd.f32 %v3342, %v3450
      %3452 = vmatmul.f32.gmra.mxu0 %v3400
      %v3453 = vpop.f32.mrf.mxu0
      %v3454 = vadd.f32 %v3342, %v3453
      %3455 = vmatmul.f32.gmra.mxu0 %v3402
      %v3456 = vpop.f32.mrf.mxu0
      %v3457 = vadd.f32 %v3342, %v3456
      %3458 = vmatmul.f32.gmra.mxu0 %v3404
      %v3459 = vpop.f32.mrf.mxu0
      %v3460 = vadd.f32 %v3342, %v3459
      %3461 = vmatmul.f32.gmra.mxu0 %v3406
      %v3462 = vpop.f32.mrf.mxu0
      %v3463 = vadd.f32 %v3342, %v3462
      %3464 = vmatmul.f32.gmra.mxu0 %v3408
      %v3465 = vpop.f32.mrf.mxu0
      %v3466 = vadd.f32 %v3342, %v3465
      %3467 = vmatmul.f32.gmra.mxu0 %v3410
      %v3468 = vpop.f32.mrf.mxu0
      %v3469 = vadd.f32 %v3342, %v3468
      %3470 = vmatmul.f32.gmra.mxu0 %v3412
      %v3471 = vpop.f32.mrf.mxu0
      %v3472 = vadd.f32 %v3342, %v3471
      %3473 = vmatmul.f32.gmra.mxu0 %v3414
      %v3474 = vpop.f32.mrf.mxu0
      %v3475 = vadd.f32 %v3342, %v3474
      %3476 = vmatmul.f32.gmra.mxu0 %v3416
      %v3477 = vpop.f32.mrf.mxu0
      %v3478 = vadd.f32 %v3342, %v3477
      %3479 = vmatmul.f32.gmra.mxu0 %v3418
      %v3480 = vpop.f32.mrf.mxu0
      %v3481 = vadd.f32 %v3342, %v3480
      %3482 = vmatmul.f32.gmra.mxu0 %v3420
      %v3483 = vpop.f32.mrf.mxu0
      %v3484 = vadd.f32 %v3342, %v3483
      %3485 = vmatmul.f32.gmra.mxu0 %v3422
      %v3486 = vpop.f32.mrf.mxu0
      %v3487 = vadd.f32 %v3342, %v3486
      %3488 = vdwg.mxu0
      %3505 = vrot.lane.b32.xlu0 %v3442, 96
      %v3506 = vpop.permute.xlu0 %3505
      %3507 = vrot.lane.b32.xlu0 %v3445, 96
      %v3508 = vpop.permute.xlu0 %3507
      %3509 = vrot.lane.b32.xlu0 %v3448, 96
      %v3510 = vpop.permute.xlu0 %3509
      %3511 = vrot.lane.b32.xlu0 %v3451, 96
      %v3512 = vpop.permute.xlu0 %3511
      %3513 = vrot.lane.b32.xlu0 %v3454, 96
      %v3514 = vpop.permute.xlu0 %3513
      %3515 = vrot.lane.b32.xlu0 %v3457, 96
      %v3516 = vpop.permute.xlu0 %3515
      %3517 = vrot.lane.b32.xlu0 %v3460, 96
      %v3518 = vpop.permute.xlu0 %3517
      %3519 = vrot.lane.b32.xlu0 %v3463, 96
      %v3520 = vpop.permute.xlu0 %3519
      %3521 = vrot.lane.b32.xlu0 %v3466, 96
      %v3522 = vpop.permute.xlu0 %3521
      %3523 = vrot.lane.b32.xlu0 %v3469, 96
      %v3524 = vpop.permute.xlu0 %3523
      %3525 = vrot.lane.b32.xlu0 %v3472, 96
      %v3526 = vpop.permute.xlu0 %3525
      %3527 = vrot.lane.b32.xlu0 %v3475, 96
      %v3528 = vpop.permute.xlu0 %3527
      %3529 = vrot.lane.b32.xlu0 %v3478, 96
      %v3530 = vpop.permute.xlu0 %3529
      %3531 = vrot.lane.b32.xlu0 %v3481, 96
      %v3532 = vpop.permute.xlu0 %3531
      %3533 = vrot.lane.b32.xlu0 %v3484, 96
      %v3534 = vpop.permute.xlu0 %3533
      %3535 = vrot.lane.b32.xlu0 %v3487, 96
      %v3536 = vpop.permute.xlu0 %3535
      %v3553 = vmul.f32 %v571, %v3506
      %v3554 = vmul.f32 %v726, %v3508
      %v3555 = vmul.f32 %v881, %v3510
      %v3556 = vmul.f32 %v1036, %v3512
      %v3557 = vmul.f32 %v1191, %v3514
      %v3558 = vmul.f32 %v1346, %v3516
      %v3559 = vmul.f32 %v1501, %v3518
      %v3560 = vmul.f32 %v1656, %v3520
      %v3561 = vmul.f32 %v1811, %v3522
      %v3562 = vmul.f32 %v1966, %v3524
      %v3563 = vmul.f32 %v2121, %v3526
      %v3564 = vmul.f32 %v2276, %v3528
      %v3565 = vmul.f32 %v2431, %v3530
      %v3566 = vmul.f32 %v2586, %v3532
      %v3567 = vmul.f32 %v2741, %v3534
      %v3568 = vmul.f32 %v2896, %v3536
      %v3569 = vld [vmem:[%s5] sm:$0xff]
      %v3570 = vld [vmem:[%s5 + $0x8] sm:$0xff]
      %v3571 = vld [vmem:[%s5 + $0x10] sm:$0xff]
      %v3572 = vld [vmem:[%s5 + $0x18] sm:$0xff]
      %v3573 = vld [vmem:[%s6] sm:$0x1]
      %v3575 = vperm.slane %v3573, 0
      %3593 = vrot.lane.b32.xlu0 %v3553, 32
      %v3594 = vpop.permute.xlu0 %3593
      %3595 = vrot.lane.b32.xlu0 %v3554, 32
      %v3596 = vpop.permute.xlu0 %3595
      %3597 = vrot.lane.b32.xlu0 %v3555, 32
      %v3598 = vpop.permute.xlu0 %3597
      %3599 = vrot.lane.b32.xlu0 %v3556, 32
      %v3600 = vpop.permute.xlu0 %3599
      %3601 = vrot.lane.b32.xlu0 %v3557, 32
      %v3602 = vpop.permute.xlu0 %3601
      %3603 = vrot.lane.b32.xlu0 %v3558, 32
      %v3604 = vpop.permute.xlu0 %3603
      %3605 = vrot.lane.b32.xlu0 %v3559, 32
      %v3606 = vpop.permute.xlu0 %3605
      %3607 = vrot.lane.b32.xlu0 %v3560, 32
      %v3608 = vpop.permute.xlu0 %3607
      %3609 = vrot.lane.b32.xlu0 %v3561, 32
      %v3610 = vpop.permute.xlu0 %3609
      %3611 = vrot.lane.b32.xlu0 %v3562, 32
      %v3612 = vpop.permute.xlu0 %3611
      %3613 = vrot.lane.b32.xlu0 %v3563, 32
      %v3614 = vpop.permute.xlu0 %3613
      %3615 = vrot.lane.b32.xlu0 %v3564, 32
      %v3616 = vpop.permute.xlu0 %3615
      %3617 = vrot.lane.b32.xlu0 %v3565, 32
      %v3618 = vpop.permute.xlu0 %3617
      %3619 = vrot.lane.b32.xlu0 %v3566, 32
      %v3620 = vpop.permute.xlu0 %3619
      %3621 = vrot.lane.b32.xlu0 %v3567, 32
      %v3622 = vpop.permute.xlu0 %3621
      %3623 = vrot.lane.b32.xlu0 %v3568, 32
      %v3624 = vpop.permute.xlu0 %3623
      %v3625 = vsel %vm2905, %v3594, 0
      %v3627 = vsel %vm2905, %v3596, 0
      %v3629 = vsel %vm2905, %v3598, 0
      %v3631 = vsel %vm2905, %v3600, 0
      %v3633 = vsel %vm2905, %v3602, 0
      %v3635 = vsel %vm2905, %v3604, 0
      %v3637 = vsel %vm2905, %v3606, 0
      %v3639 = vsel %vm2905, %v3608, 0
      %v3641 = vsel %vm2905, %v3610, 0
      %v3643 = vsel %vm2905, %v3612, 0
      %v3645 = vsel %vm2905, %v3614, 0
      %v3647 = vsel %vm2905, %v3616, 0
      %v3649 = vsel %vm2905, %v3618, 0
      %v3651 = vsel %vm2905, %v3620, 0
      %v3653 = vsel %vm2905, %v3622, 0
      %v3655 = vsel %vm2905, %v3624, 0
      %3657 = vmatpush.msra.mxu0 0.0
      %3658 = vmatpush.msra.mxu0 0.0
      %3659 = vmatpush.msra.mxu0 0.0
      %3660 = vmatpush.msra.mxu0 0.0
      %3661 = vmatpush.msra.mxu0 0.0
      %3662 = vmatpush.msra.mxu0 0.0
      %3663 = vmatpush.msra.mxu0 0.0
      %3664 = vmatpush.msra.mxu0 0.0
      %3665 = vmatpush.msra.mxu0 0.0
      %3666 = vmatpush.msra.mxu0 0.0
      %3667 = vmatpush.msra.mxu0 0.0
      %3668 = vmatpush.msra.mxu0 0.0
      %3669 = vmatpush.msra.mxu0 %v3572
      %3670 = vmatpush.msra.mxu0 %v3571
      %3671 = vmatpush.msra.mxu0 %v3570
      %3672 = vmatpush.msra.mxu0 %v3569
      %3673 = vmatmul.f32.gmra.mxu0 %v3625
      %v3674 = vpop.f32.mrf.mxu0
      %v3675 = vadd.f32 %v3575, %v3674
      %3676 = vmatmul.f32.gmra.mxu0 %v3627
      %v3677 = vpop.f32.mrf.mxu0
      %v3678 = vadd.f32 %v3575, %v3677
      %3679 = vmatmul.f32.gmra.mxu0 %v3629
      %v3680 = vpop.f32.mrf.mxu0
      %v3681 = vadd.f32 %v3575, %v3680
      %3682 = vmatmul.f32.gmra.mxu0 %v3631
      %v3683 = vpop.f32.mrf.mxu0
      %v3684 = vadd.f32 %v3575, %v3683
      %3685 = vmatmul.f32.gmra.mxu0 %v3633
      %v3686 = vpop.f32.mrf.mxu0
      %v3687 = vadd.f32 %v3575, %v3686
      %3688 = vmatmul.f32.gmra.mxu0 %v3635
      %v3689 = vpop.f32.mrf.mxu0
      %v3690 = vadd.f32 %v3575, %v3689
      %3691 = vmatmul.f32.gmra.mxu0 %v3637
      %v3692 = vpop.f32.mrf.mxu0
      %v3693 = vadd.f32 %v3575, %v3692
      %3694 = vmatmul.f32.gmra.mxu0 %v3639
      %v3695 = vpop.f32.mrf.mxu0
      %v3696 = vadd.f32 %v3575, %v3695
      %3697 = vmatmul.f32.gmra.mxu0 %v3641
      %v3698 = vpop.f32.mrf.mxu0
      %v3699 = vadd.f32 %v3575, %v3698
      %3700 = vmatmul.f32.gmra.mxu0 %v3643
      %v3701 = vpop.f32.mrf.mxu0
      %v3702 = vadd.f32 %v3575, %v3701
      %3703 = vmatmul.f32.gmra.mxu0 %v3645
      %v3704 = vpop.f32.mrf.mxu0
      %v3705 = vadd.f32 %v3575, %v3704
      %3706 = vmatmul.f32.gmra.mxu0 %v3647
      %v3707 = vpop.f32.mrf.mxu0
      %v3708 = vadd.f32 %v3575, %v3707
      %3709 = vmatmul.f32.gmra.mxu0 %v3649
      %v3710 = vpop.f32.mrf.mxu0
      %v3711 = vadd.f32 %v3575, %v3710
      %3712 = vmatmul.f32.gmra.mxu0 %v3651
      %v3713 = vpop.f32.mrf.mxu0
      %v3714 = vadd.f32 %v3575, %v3713
      %3715 = vmatmul.f32.gmra.mxu0 %v3653
      %v3716 = vpop.f32.mrf.mxu0
      %v3717 = vadd.f32 %v3575, %v3716
      %3718 = vmatmul.f32.gmra.mxu0 %v3655
      %v3719 = vpop.f32.mrf.mxu0
      %v3720 = vadd.f32 %v3575, %v3719
      %3721 = vdwg.mxu0
      %vm3722 = vcmask 31744
      %3723 = vst.msk [vmem:[%s280] sm:$0xff] %vm3722, %v3675
      %3724 = vst.msk [vmem:[%s280 + $0x8] sm:$0xff] %vm3722, %v3678
      %3725 = vst.msk [vmem:[%s280 + $0x10] sm:$0xff] %vm3722, %v3681
      %3726 = vst.msk [vmem:[%s280 + $0x18] sm:$0xff] %vm3722, %v3684
      %3727 = vst.msk [vmem:[%s280 + $0x20] sm:$0xff] %vm3722, %v3687
      %3728 = vst.msk [vmem:[%s280 + $0x28] sm:$0xff] %vm3722, %v3690
      %3729 = vst.msk [vmem:[%s280 + $0x30] sm:$0xff] %vm3722, %v3693
      %3730 = vst.msk [vmem:[%s280 + $0x38] sm:$0xff] %vm3722, %v3696
      %3731 = vst.msk [vmem:[%s280 + $0x40] sm:$0xff] %vm3722, %v3699
      %3732 = vst.msk [vmem:[%s280 + $0x48] sm:$0xff] %vm3722, %v3702
      %3733 = vst.msk [vmem:[%s280 + $0x50] sm:$0xff] %vm3722, %v3705
      %3734 = vst.msk [vmem:[%s280 + $0x58] sm:$0xff] %vm3722, %v3708
      %3735 = vst.msk [vmem:[%s280 + $0x60] sm:$0xff] %vm3722, %v3711
      %3736 = vst.msk [vmem:[%s280 + $0x68] sm:$0xff] %vm3722, %v3714
      %3737 = vst.msk [vmem:[%s280 + $0x70] sm:$0xff] %vm3722, %v3717
      %3738 = vst.msk [vmem:[%s280 + $0x78] sm:$0xff] %vm3722, %v3720
      %s3739 = smul.u32 16, %s18
      %p3740 = scmp.lt.s32.totalorder %s3739, 127
      %s3741 = scalar_select %p3740, %s3739, 127
      %s3742 = smul.addr %s3741, 8
      %s3743 = scalar_lea.vmem %s7, %s3742
      // Predicated region
      $region49: #{tpu_custom_call.1} parent=47 // pred_check
        %p3744 = pneg %p188
      $region50: #{tpu_custom_call.1} parent=47 // pred_check_branch
        %3746 = sbr.rel (%p3744) target = $region52
      $region51: #{tpu_custom_call.1} parent=47 // pred_region
        %s3747 = smul.u32 16, %s18
      $region52: #{tpu_custom_call.1} parent=47 // pred_fallthru
        _
    $region48: #{tpu_custom_call.1} parent=5 // pred_fallthru
      _
    %p3748 = scmp.le.s32.totalorder 2, %s13
    // Predicated region
    $region53: #{tpu_custom_call.1} parent=5 // pred_check
      %p3749 = pneg %p3748
    $region54: #{tpu_custom_call.1} parent=5 // pred_check_branch
      %3751 = sbr.rel (%p3749) target = $region56
    $region55: #{tpu_custom_call.1} parent=5 // pred_region
      %s3752 = ssub.s32 %s13, 2
      // Predicated region
      $region57: #{tpu_custom_call.1} parent=55 // pred_check
        %p3753 = pneg %p194
      $region58: #{tpu_custom_call.1} parent=55 // pred_check_branch
        %3755 = sbr.rel (%p3753) target = $region60
      $region59: #{tpu_custom_call.1} parent=55 // pred_region
        %s3756 = smul.u32 16, %s19
        %p3757 = scmp.lt.s32.totalorder %s3756, 127
        %s3758 = scalar_select %p3757, %s3756, 127
        %s3759 = smul.addr %s3758, 8
        %s3760 = scalar_lea.vmem %s7, %s3759
      $region60: #{tpu_custom_call.1} parent=55 // pred_fallthru
        _
    $region56: #{tpu_custom_call.1} parent=5 // pred_fallthru
      _
  $region6: #{tpu_custom_call.1} parent=0 // loop_footer
    %s17 = sadd.s32 1, %s13
  $region7: #{tpu_custom_call.1} parent=0 // loop_footer_branch
    %12 = sbr.rel target = $region3
  $region8: #{tpu_custom_call.1} parent=0 // loop_exit
    _

</llo_original>
